<compile_context>
chip_gen: v6e
topology: v6e:2x2x1
jax: 0.10.0
libtpu: 0.0.40
codegen_flags: <defaults>
</compile_context>

<pallas_src>
import functools

import jax
import jax.numpy as jnp
from jax.experimental import pallas as pl
from jax.experimental.pallas import tpu as pltpu


def _decoder_kernel(
    x_ref, h_ref, c_ref, emb_ref,
    w_enc_ref, b_enc_ref, w_dec_ref, b_dec_ref, w_full_ref, b_full_ref,
    w_lstm_ref, b_lstm_ref,
    w_lin_ref, b_lin_ref,
    h_out_ref, c_out_ref, preds_out_ref, alpha_out_ref,
):
    # NOTE: h_out/c_out/alpha_out have a constant index_map over the (only)
    # vocab grid axis, so their blocks stay resident across all vocab steps.
    # Writing them only on step 0 is therefore correct, but this relies on the
    # vocab axis being "arbitrary" (sequential) -- do not mark it parallel.
    @pl.when(pl.program_id(0) == 0)
    def _attention_and_lstm():
        x = x_ref[...]        # (B, P, E)
        h = h_ref[...]        # (B, D)
        c = c_ref[...]        # (B, D)
        emb = emb_ref[...]    # (B, Emb)
        b, pnum, enc_dim = x.shape
        d = h.shape[1]

        # --- additive attention ------------------------------------------
        # Flatten (B, P) -> M for one MXU-friendly GEMM. Layout-safe because
        # P is a multiple of the sublane count (8).
        x_flat = x.reshape(b * pnum, enc_dim)
        enc_att = jnp.dot(x_flat, w_enc_ref[...],
                          preferred_element_type=jnp.float32)         # (B*P, A)
        enc_att = enc_att.reshape(b, pnum, -1) + b_enc_ref[...]        # (B, P, A)
        dec_att = jnp.dot(h, w_dec_ref[...],
                          preferred_element_type=jnp.float32) + b_dec_ref[...]
        e = jax.nn.relu(enc_att + dec_att[:, None, :])                 # (B, P, A)
        att = jnp.sum(e * w_full_ref[...], axis=-1) + b_full_ref[0]    # (B, P)

        m = jnp.max(att, axis=-1, keepdims=True)
        ex = jnp.exp(att - m)
        alpha = ex / jnp.sum(ex, axis=-1, keepdims=True)               # (B, P)
        # VPU multiply + sublane reduce (avoids tiny M=1 batched MXU matmuls).
        ctx = jnp.sum(x * alpha[:, :, None], axis=1)                   # (B, E)

        # --- LSTMCell on concat([ctx, emb]) -------------------------------
        # Single fused GEMM: concat([ctx, emb, h]) @ concat([w_ih.T, w_hh.T]).
        lstm_in = jnp.concatenate([ctx, emb, h], axis=1)               # (B, E+Emb+D)
        gates = (jnp.dot(lstm_in, w_lstm_ref[...],
                         preferred_element_type=jnp.float32)
                 + b_lstm_ref[...])                                    # (B, 4D)
        # D is a multiple of 128 at the chosen shapes -> lane-tile-aligned slices.
        i_g = jax.nn.sigmoid(gates[:, 0 * d:1 * d])
        f_g = jax.nn.sigmoid(gates[:, 1 * d:2 * d])
        g_g = jnp.tanh(gates[:, 2 * d:3 * d])
        o_g = jax.nn.sigmoid(gates[:, 3 * d:4 * d])
        c_new = f_g * c + i_g * g_g
        h_new = o_g * jnp.tanh(c_new)

        h_out_ref[...] = h_new
        c_out_ref[...] = c_new
        alpha_out_ref[...] = alpha

    # Every vocab grid step: project the resident h against this w_lin tile.
    # w_lin is bf16 (halves the dominant HBM stream); accumulate in f32.
    h_cast = h_out_ref[...].astype(w_lin_ref.dtype)
    preds_out_ref[...] = (
        jnp.dot(h_cast, w_lin_ref[...], preferred_element_type=jnp.float32)
        + b_lin_ref[...]
    )


def prepare_params(p):
    """One-time re-orientation of PyTorch-layout weights (hoist out of decode loop)."""
    w_ih_t = p["w_ih"].T                                   # (E+Emb, 4D)
    w_hh_t = p["w_hh"].T                                   # (D, 4D)
    return {
        "embedding": p["embedding"],
        "w_enc": p["w_enc"],                               # (E, A)
        "b_enc": p["b_enc"].reshape(1, -1),
        "w_dec": p["w_dec"],                               # (D, A)
        "b_dec": p["b_dec"].reshape(1, -1),
        "w_full": p["w_full"].reshape(1, -1),              # (1, A)
        "b_full": jnp.asarray(p["b_full"], jnp.float32).reshape(1),
        # Fused LSTM weight: rows ordered [ctx(E), emb(Emb), h(D)].
        "w_lstm": jnp.concatenate([w_ih_t, w_hh_t], axis=0),   # (E+Emb+D, 4D)
        "b_lstm": (p["b_ih"] + p["b_hh"]).reshape(1, -1),       # (1, 4D)
        # Output projection streamed in bf16 (f32 accumulation in-kernel).
        "w_lin": p["w_lin"].T.astype(jnp.bfloat16),         # (D, V)
        "b_lin": p["b_lin"].reshape(1, -1),                 # (1, V) f32
    }


def image_captioning_decoder(x, h, c, predicted_indices, prepared, *, tile_v=None):
    """Pallas implementation of ImageCaptioningDecoder.forward (one decode step)."""
    # TODO(synk): fuse the embedding row gather into the kernel via
    # PrefetchScalarGridSpec(num_scalar_prefetch=1) + an Element-indexed
    # BlockSpec on the table; kept as plain-JAX glue here.
    emb_table = prepared["embedding"]
    emb = emb_table[predicted_indices].astype(jnp.float32)
    emb = emb.reshape(-1, emb_table.shape[1])              # (B, Emb)

    B, P, E = x.shape
    D = h.shape[1]
    EMB = emb.shape[1]
    A = prepared["w_enc"].shape[1]
    V = prepared["w_lin"].shape[1]

    # Single-TC chips (v5e/v6e): collapse the grid -- one pass over the whole
    # vocab. tile_v stays available as a knob for very large V / v7x's 64 MiB
    # VMEM (cap so double-buffered D*tile_v*2B w_lin tiles fit comfortably).
    if tile_v is None:
        tile_v = V
    tile_v = min(tile_v, V)
    assert V % tile_v == 0, "pick tile_v dividing V"
    nv = V // tile_v

    smem = pltpu.MemorySpace.SMEM

    in_specs = [
        pl.BlockSpec((B, P, E), lambda v: (0, 0, 0)),          # x
        pl.BlockSpec((B, D), lambda v: (0, 0)),                # h
        pl.BlockSpec((B, D), lambda v: (0, 0)),                # c
        pl.BlockSpec((B, EMB), lambda v: (0, 0)),              # emb
        pl.BlockSpec((E, A), lambda v: (0, 0)),                # w_enc
        pl.BlockSpec((1, A), lambda v: (0, 0)),                # b_enc
        pl.BlockSpec((D, A), lambda v: (0, 0)),                # w_dec
        pl.BlockSpec((1, A), lambda v: (0, 0)),                # b_dec
        pl.BlockSpec((1, A), lambda v: (0, 0)),                # w_full
        pl.BlockSpec(memory_space=smem),                       # b_full (scalar)
        pl.BlockSpec((E + EMB + D, 4 * D), lambda v: (0, 0)),  # w_lstm (fused)
        pl.BlockSpec((1, 4 * D), lambda v: (0, 0)),            # b_lstm
        pl.BlockSpec((D, tile_v), lambda v: (0, v)),           # w_lin (bf16, streamed)
        pl.BlockSpec((1, tile_v), lambda v: (0, v)),           # b_lin
    ]
    out_specs = [
        pl.BlockSpec((B, D), lambda v: (0, 0)),                # h_out (resident)
        pl.BlockSpec((B, D), lambda v: (0, 0)),                # c_out (resident)
        pl.BlockSpec((B, tile_v), lambda v: (0, v)),           # preds (streamed)
        pl.BlockSpec((B, P), lambda v: (0, 0)),                # alpha (resident)
    ]
    out_shape = (
        jax.ShapeDtypeStruct((B, D), jnp.float32),
        jax.ShapeDtypeStruct((B, D), jnp.float32),
        jax.ShapeDtypeStruct((B, V), jnp.float32),
        jax.ShapeDtypeStruct((B, P), jnp.float32),
    )

    grid_spec = pltpu.PrefetchScalarGridSpec(
        num_scalar_prefetch=0,
        grid=(nv,),
        in_specs=in_specs,
        out_specs=out_specs,
    )

    flops = 2 * B * (P * E * A + D * A + P * A + P * E
                     + (E + EMB + D) * 4 * D + D * V)
    transcendentals = B * (P + 5 * D)
    bytes_accessed = (4 * (B * (P * E + 3 * D + EMB)               # activations
                           + E * A + D * A + A                     # attention weights
                           + (E + EMB + D) * 4 * D + 4 * D         # LSTM weights
                           + V                                     # b_lin
                           + B * (2 * D + V + P))                  # outputs
                      + 2 * D * V)                                 # w_lin (bf16)

    fn = pl.pallas_call(
        _decoder_kernel,
        out_shape=out_shape,
        grid_spec=grid_spec,
        compiler_params=pltpu.CompilerParams(
            # Sequential vocab axis: h/c/alpha blocks stay resident across it.
            dimension_semantics=("arbitrary",),
            # Well under v7x's 64 MiB physical VMEM.
            vmem_limit_bytes=32 * 1024 * 1024,
        ),
        cost_estimate=pl.CostEstimate(
            flops=flops, transcendentals=transcendentals,
            bytes_accessed=bytes_accessed),
    )
    return fn(
        x, h, c, emb,
        prepared["w_enc"], prepared["b_enc"], prepared["w_dec"], prepared["b_dec"],
        prepared["w_full"], prepared["b_full"],
        prepared["w_lstm"], prepared["b_lstm"],
        prepared["w_lin"], prepared["b_lin"],
    )


def reference(x, h, c, predicted_indices, p):
    """Pure-JAX f32 reference mirroring the PyTorch module."""
    emb = p["embedding"][predicted_indices].astype(jnp.float32)
    emb = emb.reshape(-1, p["embedding"].shape[1])
    enc_att = jnp.einsum("bpe,ea->bpa", x, p["w_enc"]) + p["b_enc"]
    dec_att = h @ p["w_dec"] + p["b_dec"]
    e = jax.nn.relu(enc_att + dec_att[:, None, :])
    att = jnp.sum(e * p["w_full"][None, None, :], axis=-1) + p["b_full"]
    alpha = jax.nn.softmax(att, axis=-1)
    ctx = jnp.einsum("bpe,bp->be", x, alpha)
    inp = jnp.concatenate([ctx, emb], axis=1)
    gates = inp @ p["w_ih"].T + h @ p["w_hh"].T + p["b_ih"] + p["b_hh"]
    D = h.shape[1]
    i_g = jax.nn.sigmoid(gates[:, :D])
    f_g = jax.nn.sigmoid(gates[:, D:2 * D])
    g_g = jnp.tanh(gates[:, 2 * D:3 * D])
    o_g = jax.nn.sigmoid(gates[:, 3 * D:])
    c_new = f_g * c + i_g * g_g
    h_new = o_g * jnp.tanh(c_new)
    preds = h_new @ p["w_lin"].T + p["b_lin"]
    return h_new, c_new, preds, alpha


def make_params(key, vocab_size, embedding_dim, decoder_dim, encoder_dim, attn_dim):
    ks = jax.random.split(key, 12)
    s = 0.1
    lstm_in = encoder_dim + embedding_dim
    return {
        "embedding": jax.random.normal(ks[0], (vocab_size, embedding_dim), jnp.float32) * s,
        "w_enc": jax.random.normal(ks[1], (encoder_dim, attn_dim), jnp.float32) * s,
        "b_enc": jax.random.normal(ks[2], (attn_dim,), jnp.float32) * s,
        "w_dec": jax.random.normal(ks[3], (decoder_dim, attn_dim), jnp.float32) * s,
        "b_dec": jax.random.normal(ks[4], (attn_dim,), jnp.float32) * s,
        "w_full": jax.random.normal(ks[5], (attn_dim,), jnp.float32) * s,
        "b_full": jnp.float32(0.01),
        "w_ih": jax.random.normal(ks[6], (4 * decoder_dim, lstm_in), jnp.float32) * s,
        "b_ih": jax.random.normal(ks[7], (4 * decoder_dim,), jnp.float32) * s,
        "w_hh": jax.random.normal(ks[8], (4 * decoder_dim, decoder_dim), jnp.float32) * s,
        "b_hh": jax.random.normal(ks[9], (4 * decoder_dim,), jnp.float32) * s,
        "w_lin": jax.random.normal(ks[10], (vocab_size, decoder_dim), jnp.float32) * s,
        "b_lin": jax.random.normal(ks[11], (vocab_size,), jnp.float32) * s,
    }


if __name__ == "__main__":
    # Small, lane-aligned shapes consistent with the module.
    B, HW, E = 16, 16, 128          # batch, num_pixels (4x4 feature map), encoder dim
    EMB, D, A = 128, 128, 128       # embedding_dim, decoder_dim, attention_dim
    V = 512                         # vocab size

    key = jax.random.PRNGKey(0)
    k_p, k_x, k_h, k_c, k_idx = jax.random.split(key, 5)
    params = make_params(k_p, V, EMB, D, E, A)

    x = jax.random.normal(k_x, (B, HW, E), jnp.float32)
    h = jax.random.normal(k_h, (B, D), jnp.float32) * 0.1
    c = jax.random.normal(k_c, (B, D), jnp.float32) * 0.1
    predicted_indices = jax.random.randint(k_idx, (B,), 0, V, dtype=jnp.int32)

    # Weight re-orientation / bf16 casting done ONCE (outside the decode loop).
    prepared = prepare_params(params)
    decode_step = jax.jit(functools.partial(image_captioning_decoder))

    h_k, c_k, preds_k, alpha_k = jax.block_until_ready(
        decode_step(x, h, c, predicted_indices, prepared))
    h_r, c_r, preds_r, alpha_r = reference(x, h, c, predicted_indices, params)

    import numpy as np
    # h/c/alpha follow an all-f32 path -> tight tolerances.
    np.testing.assert_allclose(np.asarray(h_k), np.asarray(h_r), rtol=1e-4, atol=1e-5)
    np.testing.assert_allclose(np.asarray(c_k), np.asarray(c_r), rtol=1e-4, atol=1e-5)
    np.testing.assert_allclose(np.asarray(alpha_k), np.asarray(alpha_r), rtol=1e-4, atol=1e-5)
    # preds uses bf16-streamed w_lin with f32 accumulation -> bf16-weight tolerance.
    np.testing.assert_allclose(np.asarray(preds_k), np.asarray(preds_r), rtol=2e-2, atol=1e-2)

    print("KERNEL_OK")
</pallas_src>

<mosaic_0001>
module attributes {stable_mosaic.version = 11 : i64} {
  func.func @_decoder_kernel(%arg0: i32, %arg1: memref<16x16x128xf32, #tpu.memory_space<vmem>>, %arg2: memref<16x128xf32, #tpu.memory_space<vmem>>, %arg3: memref<16x128xf32, #tpu.memory_space<vmem>>, %arg4: memref<16x128xf32, #tpu.memory_space<vmem>>, %arg5: memref<128x128xf32, #tpu.memory_space<vmem>>, %arg6: memref<1x128xf32, #tpu.memory_space<vmem>>, %arg7: memref<128x128xf32, #tpu.memory_space<vmem>>, %arg8: memref<1x128xf32, #tpu.memory_space<vmem>>, %arg9: memref<1x128xf32, #tpu.memory_space<vmem>>, %arg10: memref<1xf32, #tpu.memory_space<smem>>, %arg11: memref<384x512xf32, #tpu.memory_space<vmem>>, %arg12: memref<1x512xf32, #tpu.memory_space<vmem>>, %arg13: memref<128x512xbf16, #tpu.memory_space<vmem>>, %arg14: memref<1x512xf32, #tpu.memory_space<vmem>>, %arg15: memref<16x128xf32, #tpu.memory_space<vmem>>, %arg16: memref<16x128xf32, #tpu.memory_space<vmem>>, %arg17: memref<16x512xf32, #tpu.memory_space<vmem>>, %arg18: memref<16x16xf32, #tpu.memory_space<vmem>>) attributes {dimension_semantics = [#tpu.dimension_semantics<arbitrary>], iteration_bounds = array<i64: 1>, scalar_prefetch = 0 : i64, scratch_operands = 0 : i64, tpu.core_type = #tpu.core_type<tc>, window_params = [{pipeline_mode = #tpu.pipeline_mode<synchronous>, transform_indices = @transform_0, window_bounds = array<i64: 16, 16, 128>}, {pipeline_mode = #tpu.pipeline_mode<synchronous>, transform_indices = @transform_1, window_bounds = array<i64: 16, 128>}, {pipeline_mode = #tpu.pipeline_mode<synchronous>, transform_indices = @transform_2, window_bounds = array<i64: 16, 128>}, {pipeline_mode = #tpu.pipeline_mode<synchronous>, transform_indices = @transform_3, window_bounds = array<i64: 16, 128>}, {pipeline_mode = #tpu.pipeline_mode<synchronous>, transform_indices = @transform_4, window_bounds = array<i64: 128, 128>}, {pipeline_mode = #tpu.pipeline_mode<synchronous>, transform_indices = @transform_5, window_bounds = array<i64: 1, 128>}, {pipeline_mode = #tpu.pipeline_mode<synchronous>, transform_indices = @transform_6, window_bounds = array<i64: 128, 128>}, {pipeline_mode = #tpu.pipeline_mode<synchronous>, transform_indices = @transform_7, window_bounds = array<i64: 1, 128>}, {pipeline_mode = #tpu.pipeline_mode<synchronous>, transform_indices = @transform_8, window_bounds = array<i64: 1, 128>}, {transform_indices = @transform_9, window_bounds = array<i64: 1>}, {pipeline_mode = #tpu.pipeline_mode<synchronous>, transform_indices = @transform_10, window_bounds = array<i64: 384, 512>}, {pipeline_mode = #tpu.pipeline_mode<synchronous>, transform_indices = @transform_11, window_bounds = array<i64: 1, 512>}, {transform_indices = @transform_12, window_bounds = array<i64: 128, 512>}, {transform_indices = @transform_13, window_bounds = array<i64: 1, 512>}, {pipeline_mode = #tpu.pipeline_mode<synchronous>, transform_indices = @transform_14, window_bounds = array<i64: 16, 128>}, {pipeline_mode = #tpu.pipeline_mode<synchronous>, transform_indices = @transform_15, window_bounds = array<i64: 16, 128>}, {transform_indices = @transform_16, window_bounds = array<i64: 16, 512>}, {pipeline_mode = #tpu.pipeline_mode<synchronous>, transform_indices = @transform_17, window_bounds = array<i64: 16, 16>}]} {
    %c0_i32 = arith.constant 0 : i32
    %0 = arith.cmpi eq, %arg0, %c0_i32 : i32
    %1 = arith.extui %0 : i1 to i32
    %c0_i32_0 = arith.constant 0 : i32
    %2 = arith.cmpi ne, %1, %c0_i32_0 : i32
    scf.if %2 {
      %c0_8 = arith.constant 0 : index
      %c0_9 = arith.constant 0 : index
      %c0_10 = arith.constant 0 : index
      %11 = vector.load %arg1[%c0_8, %c0_9, %c0_10] : memref<16x16x128xf32, #tpu.memory_space<vmem>>, vector<16x16x128xf32>
      %c0_11 = arith.constant 0 : index
      %c0_12 = arith.constant 0 : index
      %12 = vector.load %arg2[%c0_11, %c0_12] : memref<16x128xf32, #tpu.memory_space<vmem>>, vector<16x128xf32>
      %c0_13 = arith.constant 0 : index
      %c0_14 = arith.constant 0 : index
      %13 = vector.load %arg3[%c0_13, %c0_14] : memref<16x128xf32, #tpu.memory_space<vmem>>, vector<16x128xf32>
      %c0_15 = arith.constant 0 : index
      %c0_16 = arith.constant 0 : index
      %14 = vector.load %arg4[%c0_15, %c0_16] : memref<16x128xf32, #tpu.memory_space<vmem>>, vector<16x128xf32>
      %15 = vector.shape_cast %11 : vector<16x16x128xf32> to vector<256x128xf32>
      %c0_17 = arith.constant 0 : index
      %c0_18 = arith.constant 0 : index
      %16 = vector.load %arg5[%c0_17, %c0_18] : memref<128x128xf32, #tpu.memory_space<vmem>>, vector<128x128xf32>
      %cst_19 = arith.constant dense<0.000000e+00> : vector<256x128xf32>
      %17 = tpu.matmul %15, %16, %cst_19 {dimension_numbers = #tpu.dot_dimension_numbers<[1], [0], [0], [1], [0, 0, 1, 1], [], []>} : vector<256x128xf32>, vector<128x128xf32>, vector<256x128xf32> -> vector<256x128xf32>
      %18 = vector.shape_cast %17 : vector<256x128xf32> to vector<16x16x128xf32>
      %c0_20 = arith.constant 0 : index
      %c0_21 = arith.constant 0 : index
      %19 = vector.load %arg6[%c0_20, %c0_21] : memref<1x128xf32, #tpu.memory_space<vmem>>, vector<1x128xf32>
      %20 = vector.shape_cast %19 : vector<1x128xf32> to vector<1x1x128xf32>
      %21 = vector.broadcast %20 : vector<1x1x128xf32> to vector<16x16x128xf32>
      %22 = arith.addf %18, %21 : vector<16x16x128xf32>
      %c0_22 = arith.constant 0 : index
      %c0_23 = arith.constant 0 : index
      %23 = vector.load %arg7[%c0_22, %c0_23] : memref<128x128xf32, #tpu.memory_space<vmem>>, vector<128x128xf32>
      %cst_24 = arith.constant dense<0.000000e+00> : vector<16x128xf32>
      %24 = tpu.matmul %12, %23, %cst_24 {dimension_numbers = #tpu.dot_dimension_numbers<[1], [0], [0], [1], [0, 0, 1, 1], [], []>} : vector<16x128xf32>, vector<128x128xf32>, vector<16x128xf32> -> vector<16x128xf32>
      %c0_25 = arith.constant 0 : index
      %c0_26 = arith.constant 0 : index
      %25 = vector.load %arg8[%c0_25, %c0_26] : memref<1x128xf32, #tpu.memory_space<vmem>>, vector<1x128xf32>
      %26 = vector.broadcast %25 : vector<1x128xf32> to vector<16x128xf32>
      %27 = arith.addf %24, %26 : vector<16x128xf32>
      %28 = vector.shape_cast %27 : vector<16x128xf32> to vector<16x1x128xf32>
      %29 = vector.broadcast %28 : vector<16x1x128xf32> to vector<16x16x128xf32>
      %30 = arith.addf %22, %29 : vector<16x16x128xf32>
      %cst_27 = arith.constant 0.000000e+00 : f32
      %31 = vector.broadcast %cst_27 : f32 to vector<16x16x128xf32>
      %32 = arith.maximumf %30, %31 : vector<16x16x128xf32>
      %c0_28 = arith.constant 0 : index
      %c0_29 = arith.constant 0 : index
      %33 = vector.load %arg9[%c0_28, %c0_29] : memref<1x128xf32, #tpu.memory_space<vmem>>, vector<1x128xf32>
      %34 = vector.shape_cast %33 : vector<1x128xf32> to vector<1x1x128xf32>
      %35 = vector.broadcast %34 : vector<1x1x128xf32> to vector<16x16x128xf32>
      %36 = arith.mulf %32, %35 : vector<16x16x128xf32>
      %cst_30 = arith.constant dense<0.000000e+00> : vector<16x16xf32>
      %37 = vector.multi_reduction <add>, %36, %cst_30 [2] : vector<16x16x128xf32> to vector<16x16xf32>
      %c0_31 = arith.constant 0 : index
      %38 = memref.load %arg10[%c0_31] : memref<1xf32, #tpu.memory_space<smem>>
      %39 = vector.broadcast %38 : f32 to vector<16x16xf32>
      %40 = arith.addf %37, %39 : vector<16x16xf32>
      %cst_32 = arith.constant dense<0xFF800000> : vector<16xf32>
      %41 = vector.multi_reduction <maximumf>, %40, %cst_32 [1] : vector<16x16xf32> to vector<16xf32>
      %42 = vector.shape_cast %41 : vector<16xf32> to vector<16x1xf32>
      %43 = vector.broadcast %42 : vector<16x1xf32> to vector<16x16xf32>
      %44 = arith.subf %40, %43 : vector<16x16xf32>
      %45 = math.exp %44 : vector<16x16xf32>
      %cst_33 = arith.constant dense<0.000000e+00> : vector<16xf32>
      %46 = vector.multi_reduction <add>, %45, %cst_33 [1] : vector<16x16xf32> to vector<16xf32>
      %47 = vector.shape_cast %46 : vector<16xf32> to vector<16x1xf32>
      %48 = vector.broadcast %47 : vector<16x1xf32> to vector<16x16xf32>
      %49 = arith.divf %45, %48 : vector<16x16xf32>
      %50 = vector.shape_cast %49 : vector<16x16xf32> to vector<16x16x1xf32>
      %51 = vector.broadcast %50 : vector<16x16x1xf32> to vector<16x16x128xf32>
      %52 = arith.mulf %11, %51 : vector<16x16x128xf32>
      %cst_34 = arith.constant dense<0.000000e+00> : vector<16x128xf32>
      %53 = vector.multi_reduction <add>, %52, %cst_34 [1] : vector<16x16x128xf32> to vector<16x128xf32>
      %54 = tpu.concatenate %53, %14, %12 in 1 : vector<16x128xf32>, vector<16x128xf32>, vector<16x128xf32> -> vector<16x384xf32>
      %c0_35 = arith.constant 0 : index
      %c0_36 = arith.constant 0 : index
      %55 = vector.load %arg11[%c0_35, %c0_36] : memref<384x512xf32, #tpu.memory_space<vmem>>, vector<384x512xf32>
      %cst_37 = arith.constant dense<0.000000e+00> : vector<16x512xf32>
      %56 = tpu.matmul %54, %55, %cst_37 {dimension_numbers = #tpu.dot_dimension_numbers<[1], [0], [0], [1], [0, 0, 1, 1], [], []>} : vector<16x384xf32>, vector<384x512xf32>, vector<16x512xf32> -> vector<16x512xf32>
      %c0_38 = arith.constant 0 : index
      %c0_39 = arith.constant 0 : index
      %57 = vector.load %arg12[%c0_38, %c0_39] : memref<1x512xf32, #tpu.memory_space<vmem>>, vector<1x512xf32>
      %58 = vector.broadcast %57 : vector<1x512xf32> to vector<16x512xf32>
      %59 = arith.addf %56, %58 : vector<16x512xf32>
      %60 = vector.extract_strided_slice %59 {offsets = [0, 0], sizes = [16, 128], strides = [1, 1]} : vector<16x512xf32> to vector<16x128xf32>
      %61 = arith.negf %60 : vector<16x128xf32>
      %62 = math.exp %61 : vector<16x128xf32>
      %cst_40 = arith.constant 1.000000e+00 : f32
      %63 = vector.broadcast %cst_40 : f32 to vector<16x128xf32>
      %64 = arith.addf %63, %62 : vector<16x128xf32>
      %65 = arith.divf %63, %64 : vector<16x128xf32>
      %66 = vector.extract_strided_slice %59 {offsets = [0, 128], sizes = [16, 128], strides = [1, 1]} : vector<16x512xf32> to vector<16x128xf32>
      %67 = arith.negf %66 : vector<16x128xf32>
      %68 = math.exp %67 : vector<16x128xf32>
      %cst_41 = arith.constant 1.000000e+00 : f32
      %69 = vector.broadcast %cst_41 : f32 to vector<16x128xf32>
      %70 = arith.addf %69, %68 : vector<16x128xf32>
      %71 = arith.divf %69, %70 : vector<16x128xf32>
      %72 = vector.extract_strided_slice %59 {offsets = [0, 256], sizes = [16, 128], strides = [1, 1]} : vector<16x512xf32> to vector<16x128xf32>
      %73 = math.tanh %72 : vector<16x128xf32>
      %74 = vector.extract_strided_slice %59 {offsets = [0, 384], sizes = [16, 128], strides = [1, 1]} : vector<16x512xf32> to vector<16x128xf32>
      %75 = arith.negf %74 : vector<16x128xf32>
      %76 = math.exp %75 : vector<16x128xf32>
      %cst_42 = arith.constant 1.000000e+00 : f32
      %77 = vector.broadcast %cst_42 : f32 to vector<16x128xf32>
      %78 = arith.addf %77, %76 : vector<16x128xf32>
      %79 = arith.divf %77, %78 : vector<16x128xf32>
      %80 = arith.mulf %71, %13 : vector<16x128xf32>
      %81 = arith.mulf %65, %73 : vector<16x128xf32>
      %82 = arith.addf %80, %81 : vector<16x128xf32>
      %83 = math.tanh %82 : vector<16x128xf32>
      %84 = arith.mulf %79, %83 : vector<16x128xf32>
      %c0_43 = arith.constant 0 : index
      %c0_44 = arith.constant 0 : index
      %85 = vector.load %arg15[%c0_43, %c0_44] : memref<16x128xf32, #tpu.memory_space<vmem>>, vector<16x128xf32>
      tpu.vector_store %arg15[%c0_43, %c0_44], %84 {strides = array<i32>} : memref<16x128xf32, #tpu.memory_space<vmem>>, vector<16x128xf32>,
      %c0_45 = arith.constant 0 : index
      %c0_46 = arith.constant 0 : index
      %86 = vector.load %arg16[%c0_45, %c0_46] : memref<16x128xf32, #tpu.memory_space<vmem>>, vector<16x128xf32>
      tpu.vector_store %arg16[%c0_45, %c0_46], %82 {strides = array<i32>} : memref<16x128xf32, #tpu.memory_space<vmem>>, vector<16x128xf32>,
      %c0_47 = arith.constant 0 : index
      %c0_48 = arith.constant 0 : index
      %87 = vector.load %arg18[%c0_47, %c0_48] : memref<16x16xf32, #tpu.memory_space<vmem>>, vector<16x16xf32>
      tpu.vector_store %arg18[%c0_47, %c0_48], %49 {strides = array<i32>} : memref<16x16xf32, #tpu.memory_space<vmem>>, vector<16x16xf32>,
    } else {
    }
    %c0 = arith.constant 0 : index
    %c0_1 = arith.constant 0 : index
    %3 = vector.load %arg15[%c0, %c0_1] : memref<16x128xf32, #tpu.memory_space<vmem>>, vector<16x128xf32>
    %4 = arith.truncf %3 : vector<16x128xf32> to vector<16x128xbf16>
    %c0_2 = arith.constant 0 : index
    %c0_3 = arith.constant 0 : index
    %5 = vector.load %arg13[%c0_2, %c0_3] : memref<128x512xbf16, #tpu.memory_space<vmem>>, vector<128x512xbf16>
    %cst = arith.constant dense<0.000000e+00> : vector<16x512xf32>
    %6 = tpu.matmul %4, %5, %cst {dimension_numbers = #tpu.dot_dimension_numbers<[1], [0], [0], [1], [0, 0, 1, 1], [], []>} : vector<16x128xbf16>, vector<128x512xbf16>, vector<16x512xf32> -> vector<16x512xf32>
    %c0_4 = arith.constant 0 : index
    %c0_5 = arith.constant 0 : index
    %7 = vector.load %arg14[%c0_4, %c0_5] : memref<1x512xf32, #tpu.memory_space<vmem>>, vector<1x512xf32>
    %8 = vector.broadcast %7 : vector<1x512xf32> to vector<16x512xf32>
    %9 = arith.addf %6, %8 : vector<16x512xf32>
    %c0_6 = arith.constant 0 : index
    %c0_7 = arith.constant 0 : index
    %10 = vector.load %arg17[%c0_6, %c0_7] : memref<16x512xf32, #tpu.memory_space<vmem>>, vector<16x512xf32>
    tpu.vector_store %arg17[%c0_6, %c0_7], %9 {strides = array<i32>} : memref<16x512xf32, #tpu.memory_space<vmem>>, vector<16x512xf32>,
    return
  }
  func.func @transform_0(%arg0: i32) -> (i32, i32, i32) {
    %c0_i32 = arith.constant 0 : i32
    %c0_i32_0 = arith.constant 0 : i32
    %c0_i32_1 = arith.constant 0 : i32
    %c0_i32_2 = arith.constant 0 : i32
    return %c0_i32, %c0_i32_0, %c0_i32_1 : i32, i32, i32
  }
  func.func @transform_1(%arg0: i32) -> (i32, i32) {
    %c0_i32 = arith.constant 0 : i32
    %c0_i32_0 = arith.constant 0 : i32
    %c0_i32_1 = arith.constant 0 : i32
    return %c0_i32, %c0_i32_0 : i32, i32
  }
  func.func @transform_2(%arg0: i32) -> (i32, i32) {
    %c0_i32 = arith.constant 0 : i32
    %c0_i32_0 = arith.constant 0 : i32
    %c0_i32_1 = arith.constant 0 : i32
    return %c0_i32, %c0_i32_0 : i32, i32
  }
  func.func @transform_3(%arg0: i32) -> (i32, i32) {
    %c0_i32 = arith.constant 0 : i32
    %c0_i32_0 = arith.constant 0 : i32
    %c0_i32_1 = arith.constant 0 : i32
    return %c0_i32, %c0_i32_0 : i32, i32
  }
  func.func @transform_4(%arg0: i32) -> (i32, i32) {
    %c0_i32 = arith.constant 0 : i32
    %c0_i32_0 = arith.constant 0 : i32
    %c0_i32_1 = arith.constant 0 : i32
    return %c0_i32, %c0_i32_0 : i32, i32
  }
  func.func @transform_5(%arg0: i32) -> (i32, i32) {
    %c0_i32 = arith.constant 0 : i32
    %c0_i32_0 = arith.constant 0 : i32
    %c0_i32_1 = arith.constant 0 : i32
    return %c0_i32, %c0_i32_0 : i32, i32
  }
  func.func @transform_6(%arg0: i32) -> (i32, i32) {
    %c0_i32 = arith.constant 0 : i32
    %c0_i32_0 = arith.constant 0 : i32
    %c0_i32_1 = arith.constant 0 : i32
    return %c0_i32, %c0_i32_0 : i32, i32
  }
  func.func @transform_7(%arg0: i32) -> (i32, i32) {
    %c0_i32 = arith.constant 0 : i32
    %c0_i32_0 = arith.constant 0 : i32
    %c0_i32_1 = arith.constant 0 : i32
    return %c0_i32, %c0_i32_0 : i32, i32
  }
  func.func @transform_8(%arg0: i32) -> (i32, i32) {
    %c0_i32 = arith.constant 0 : i32
    %c0_i32_0 = arith.constant 0 : i32
    %c0_i32_1 = arith.constant 0 : i32
    return %c0_i32, %c0_i32_0 : i32, i32
  }
  func.func @transform_9(%arg0: i32) -> i32 {
    %c0_i32 = arith.constant 0 : i32
    %c0_i32_0 = arith.constant 0 : i32
    return %c0_i32 : i32
  }
  func.func @transform_10(%arg0: i32) -> (i32, i32) {
    %c0_i32 = arith.constant 0 : i32
    %c0_i32_0 = arith.constant 0 : i32
    %c0_i32_1 = arith.constant 0 : i32
    return %c0_i32, %c0_i32_0 : i32, i32
  }
  func.func @transform_11(%arg0: i32) -> (i32, i32) {
    %c0_i32 = arith.constant 0 : i32
    %c0_i32_0 = arith.constant 0 : i32
    %c0_i32_1 = arith.constant 0 : i32
    return %c0_i32, %c0_i32_0 : i32, i32
  }
  func.func @transform_12(%arg0: i32) -> (i32, i32) {
    %c0_i32 = arith.constant 0 : i32
    %c0_i32_0 = arith.constant 0 : i32
    return %c0_i32, %arg0 : i32, i32
  }
  func.func @transform_13(%arg0: i32) -> (i32, i32) {
    %c0_i32 = arith.constant 0 : i32
    %c0_i32_0 = arith.constant 0 : i32
    return %c0_i32, %arg0 : i32, i32
  }
  func.func @transform_14(%arg0: i32) -> (i32, i32) {
    %c0_i32 = arith.constant 0 : i32
    %c0_i32_0 = arith.constant 0 : i32
    %c0_i32_1 = arith.constant 0 : i32
    return %c0_i32, %c0_i32_0 : i32, i32
  }
  func.func @transform_15(%arg0: i32) -> (i32, i32) {
    %c0_i32 = arith.constant 0 : i32
    %c0_i32_0 = arith.constant 0 : i32
    %c0_i32_1 = arith.constant 0 : i32
    return %c0_i32, %c0_i32_0 : i32, i32
  }
  func.func @transform_16(%arg0: i32) -> (i32, i32) {
    %c0_i32 = arith.constant 0 : i32
    %c0_i32_0 = arith.constant 0 : i32
    return %c0_i32, %arg0 : i32, i32
  }
  func.func @transform_17(%arg0: i32) -> (i32, i32) {
    %c0_i32 = arith.constant 0 : i32
    %c0_i32_0 = arith.constant 0 : i32
    %c0_i32_1 = arith.constant 0 : i32
    return %c0_i32, %c0_i32_0 : i32, i32
  }
}

</mosaic_0001>

<llo_original>
// kernel: image_captioning_decoder.1
$region0: #{image_captioning_decoder.1}
  #allocation0 [shape = 'u32[]', space=smem, size = 0x4, offset = 0x4, fixed_abs, tag = 'smem constant byte address 0x4 - core index']
  #allocation1 [shape = 'u32[144,128]{1,0:T(1,128)}', space=vmem, size = 0x12000, scoped, tag = 'internal scratch']
  #allocation2 [shape = 'f32[1]{0:T(128)S(6)}', space=smem, size = 0x200, scoped, tag = 'scoped memory for image_captioning_decoder.1']
  %s0 = inlined_call_operand.hbm [shape: f32[16,16,128], index: 0, kind: input, shape index: {}]
  %s1 = inlined_call_operand.vmem [shape: f32[16,128], index: 1, kind: input, shape index: {}]
  %s2 = inlined_call_operand.vmem [shape: f32[16,128], index: 2, kind: input, shape index: {}]
  %s3 = inlined_call_operand.vmem [shape: f32[16,128], index: 3, kind: input, shape index: {}]
  %s4 = inlined_call_operand.vmem [shape: f32[128,128], index: 4, kind: input, shape index: {}]
  %s5 = inlined_call_operand.vmem [shape: f32[1,128], index: 5, kind: input, shape index: {}]
  %s6 = inlined_call_operand.hbm [shape: f32[128,128], index: 6, kind: input, shape index: {}]
  %s7 = inlined_call_operand.vmem [shape: f32[1,128], index: 7, kind: input, shape index: {}]
  %s8 = inlined_call_operand.vmem [shape: f32[1,128], index: 8, kind: input, shape index: {}]
  %s9 = inlined_call_operand.<no memory space> [shape: f32[1], index: 9, kind: input, shape index: {}]
  %s10 = inlined_call_operand.hbm [shape: f32[384,512], index: 10, kind: input, shape index: {}]
  %s11 = inlined_call_operand.vmem [shape: f32[1,512], index: 11, kind: input, shape index: {}]
  %s12 = inlined_call_operand.hbm [shape: bf16[128,512], index: 12, kind: input, shape index: {}]
  %s13 = inlined_call_operand.vmem [shape: f32[1,512], index: 13, kind: input, shape index: {}]
  %s14 = inlined_call_operand.hbm [shape: f32[16,128], index: 14, kind: output, shape index: {0}]
  %s15 = inlined_call_operand.hbm [shape: f32[16,128], index: 15, kind: output, shape index: {1}]
  %s16 = inlined_call_operand.hbm [shape: f32[16,512], index: 16, kind: output, shape index: {2}]
  %s17 = inlined_call_operand.hbm [shape: f32[16,16], index: 17, kind: output, shape index: {3}]
  %18 = xla_tuple %s14, %s15, %s16, %s17
  %s19 = sld [smem:[#allocation0]]
  $region110: #{image_captioning_decoder.1} parent=0
    _
  %s21 = ssub.s32 1, %s19
  %s22 = scalar_select 0, %s21, %s19
  %23 = sst [smem:[#allocation2]] %s9
  $region1: #{image_captioning_decoder.1} parent=0
    #allocation3 [shape = 'u8[131072]{0}', space=vmem, size = 0x20000, scoped, tag = 'input window, operand 0, single buffered']
    #allocation4 [shape = 's32[1]{0}', space=sflag, size = 0x4, scoped, tag = 'scoped memory for image_captioning_decoder.1']
    #allocation5 [shape = 's32[1]{0}', space=sflag, size = 0x4, scoped, tag = 'scoped memory for image_captioning_decoder.1']
    #allocation6 [shape = 'u8[65536]{0}', space=vmem, size = 0x10000, scoped, tag = 'input window, operand 6, single buffered']
    #allocation7 [shape = 's32[1]{0}', space=sflag, size = 0x4, scoped, tag = 'scoped memory for image_captioning_decoder.1']
    #allocation8 [shape = 'u8[786432]{0}', space=vmem, size = 0xc0000, scoped, tag = 'input window, operand 10, single buffered']
    #allocation9 [shape = 'u8[131072]{0}', space=vmem, size = 0x20000, scoped, tag = 'input window, operand 12, single buffered']
    #allocation10 [shape = 's32[1]{0}', space=sflag, size = 0x4, scoped, tag = 'scoped memory for image_captioning_decoder.1']
    #allocation11 [shape = 'u8[8192]{0}', space=vmem, size = 0x2000, scoped, tag = 'output window, operand 0, single buffered']
    #allocation12 [shape = 'u8[8192]{0}', space=vmem, size = 0x2000, scoped, tag = 'output window, operand 1, single buffered']
    #allocation13 [shape = 's32[1]{0}', space=sflag, size = 0x4, scoped, tag = 'scoped memory for image_captioning_decoder.1']
    #allocation14 [shape = 'u8[32768]{0}', space=vmem, size = 0x8000, scoped, tag = 'output window, operand 2, single buffered']
    #allocation15 [shape = 'u8[8192]{0}', space=vmem, size = 0x2000, scoped, tag = 'output window, operand 3, single buffered']
    #allocation16 [shape = 's32[1]{0}', space=sflag, size = 0x4, scoped, tag = 'scoped memory for image_captioning_decoder.1']
    %24 = vsyncpa [#allocation4], 0
    %25 = vsyncpa [#allocation7], 0
    %26 = vsyncpa [#allocation10], 0
    %27 = vsyncpa [#allocation5], 0
    %28 = vsyncpa [#allocation13], 0
    %29 = vsyncpa [#allocation16], 0
    // Predicated region
    $region2: #{image_captioning_decoder.1} parent=1 // pred_check
      _
    $region3: #{image_captioning_decoder.1} parent=1 // pred_check_branch
      %31 = sbr.rel (0) target = $region5
    $region4: #{image_captioning_decoder.1} parent=1 // pred_region
      %s33 = ssub.s32 4096, 4096
      %34 = vsyncadd [#allocation4], %s33
      %s35 = sshll.u32 [#allocation3], 4
      %s36 = int_to_ptr.vmem [resolvable:$true] %s35
      %41 = dma.hbm_to_vmem [thread:$0]  %s0, 4096, %s36, [#allocation4], 128, 128, 8
    $region5: #{image_captioning_decoder.1} parent=1 // pred_fallthru
      _
    // Predicated region
    $region6: #{image_captioning_decoder.1} parent=1 // pred_check
      _
    $region7: #{image_captioning_decoder.1} parent=1 // pred_check_branch
      %43 = sbr.rel (0) target = $region9
    $region8: #{image_captioning_decoder.1} parent=1 // pred_region
      _
    $region9: #{image_captioning_decoder.1} parent=1 // pred_fallthru
      _
    // Predicated region
    $region10: #{image_captioning_decoder.1} parent=1 // pred_check
      _
    $region11: #{image_captioning_decoder.1} parent=1 // pred_check_branch
      %45 = sbr.rel (0) target = $region13
    $region12: #{image_captioning_decoder.1} parent=1 // pred_region
      _
    $region13: #{image_captioning_decoder.1} parent=1 // pred_fallthru
      _
    // Predicated region
    $region14: #{image_captioning_decoder.1} parent=1 // pred_check
      _
    $region15: #{image_captioning_decoder.1} parent=1 // pred_check_branch
      %47 = sbr.rel (0) target = $region17
    $region16: #{image_captioning_decoder.1} parent=1 // pred_region
      _
    $region17: #{image_captioning_decoder.1} parent=1 // pred_fallthru
      _
    // Predicated region
    $region18: #{image_captioning_decoder.1} parent=1 // pred_check
      _
    $region19: #{image_captioning_decoder.1} parent=1 // pred_check_branch
      %49 = sbr.rel (0) target = $region21
    $region20: #{image_captioning_decoder.1} parent=1 // pred_region
      _
    $region21: #{image_captioning_decoder.1} parent=1 // pred_fallthru
      _
    // Predicated region
    $region22: #{image_captioning_decoder.1} parent=1 // pred_check
      _
    $region23: #{image_captioning_decoder.1} parent=1 // pred_check_branch
      %51 = sbr.rel (0) target = $region25
    $region24: #{image_captioning_decoder.1} parent=1 // pred_region
      _
    $region25: #{image_captioning_decoder.1} parent=1 // pred_fallthru
      _
    // Predicated region
    $region26: #{image_captioning_decoder.1} parent=1 // pred_check
      _
    $region27: #{image_captioning_decoder.1} parent=1 // pred_check_branch
      %53 = sbr.rel (0) target = $region29
    $region28: #{image_captioning_decoder.1} parent=1 // pred_region
      %s55 = ssub.s32 2048, 2048
      %56 = vsyncadd [#allocation7], %s55
      %s57 = sshll.u32 [#allocation6], 4
      %s58 = int_to_ptr.vmem [resolvable:$true] %s57
      %63 = dma.hbm_to_vmem [thread:$0]  %s6, 2048, %s58, [#allocation7], 128, 128, 8
    $region29: #{image_captioning_decoder.1} parent=1 // pred_fallthru
      _
    // Predicated region
    $region30: #{image_captioning_decoder.1} parent=1 // pred_check
      _
    $region31: #{image_captioning_decoder.1} parent=1 // pred_check_branch
      %65 = sbr.rel (0) target = $region33
    $region32: #{image_captioning_decoder.1} parent=1 // pred_region
      _
    $region33: #{image_captioning_decoder.1} parent=1 // pred_fallthru
      _
    // Predicated region
    $region34: #{image_captioning_decoder.1} parent=1 // pred_check
      _
    $region35: #{image_captioning_decoder.1} parent=1 // pred_check_branch
      %67 = sbr.rel (0) target = $region37
    $region36: #{image_captioning_decoder.1} parent=1 // pred_region
      _
    $region37: #{image_captioning_decoder.1} parent=1 // pred_fallthru
      _
    // Predicated region
    $region38: #{image_captioning_decoder.1} parent=1 // pred_check
      _
    $region39: #{image_captioning_decoder.1} parent=1 // pred_check_branch
      %69 = sbr.rel (0) target = $region41
    $region40: #{image_captioning_decoder.1} parent=1 // pred_region
      _
    $region41: #{image_captioning_decoder.1} parent=1 // pred_fallthru
      _
    // Predicated region
    $region42: #{image_captioning_decoder.1} parent=1 // pred_check
      _
    $region43: #{image_captioning_decoder.1} parent=1 // pred_check_branch
      %71 = sbr.rel (0) target = $region45
    $region44: #{image_captioning_decoder.1} parent=1 // pred_region
      %s73 = ssub.s32 24576, 24576
      %74 = vsyncadd [#allocation7], %s73
      %s75 = sshll.u32 [#allocation8], 4
      %s76 = int_to_ptr.vmem [resolvable:$true] %s75
      %81 = dma.hbm_to_vmem [thread:$0]  %s10, 24576, %s76, [#allocation7], 512, 512, 32
    $region45: #{image_captioning_decoder.1} parent=1 // pred_fallthru
      _
    // Predicated region
    $region46: #{image_captioning_decoder.1} parent=1 // pred_check
      _
    $region47: #{image_captioning_decoder.1} parent=1 // pred_check_branch
      %83 = sbr.rel (0) target = $region49
    $region48: #{image_captioning_decoder.1} parent=1 // pred_region
      _
    $region49: #{image_captioning_decoder.1} parent=1 // pred_fallthru
      _
    // Predicated region
    $region50: #{image_captioning_decoder.1} parent=1 // pred_check
      _
    $region51: #{image_captioning_decoder.1} parent=1 // pred_check_branch
      %85 = sbr.rel (0) target = $region53
    $region52: #{image_captioning_decoder.1} parent=1 // pred_region
      %s87 = ssub.s32 4096, 4096
      %88 = vsyncadd [#allocation10], %s87
      %s89 = sshll.u32 [#allocation9], 4
      %s90 = int_to_ptr.vmem [resolvable:$true] %s89
      %95 = dma.hbm_to_vmem [thread:$0]  %s12, 4096, %s90, [#allocation10], 256, 256, 16
    $region53: #{image_captioning_decoder.1} parent=1 // pred_fallthru
      _
    // Predicated region
    $region54: #{image_captioning_decoder.1} parent=1 // pred_check
      _
    $region55: #{image_captioning_decoder.1} parent=1 // pred_check_branch
      %97 = sbr.rel (0) target = $region57
    $region56: #{image_captioning_decoder.1} parent=1 // pred_region
      _
    $region57: #{image_captioning_decoder.1} parent=1 // pred_fallthru
      _
    // Predicated region
    $region58: #{image_captioning_decoder.1} parent=1 // pred_check
      _
    $region59: #{image_captioning_decoder.1} parent=1 // pred_check_branch
      %99 = sbr.rel (0) target = $region61
    $region60: #{image_captioning_decoder.1} parent=1 // pred_region
      %100 = dma.done [#allocation4], 4096
    $region61: #{image_captioning_decoder.1} parent=1 // pred_fallthru
      _
    // Predicated region
    $region62: #{image_captioning_decoder.1} parent=1 // pred_check
      _
    $region63: #{image_captioning_decoder.1} parent=1 // pred_check_branch
      %102 = sbr.rel (0) target = $region65
    $region64: #{image_captioning_decoder.1} parent=1 // pred_region
      %103 = dma.done [#allocation7], 2048
    $region65: #{image_captioning_decoder.1} parent=1 // pred_fallthru
      _
    // Predicated region
    $region66: #{image_captioning_decoder.1} parent=1 // pred_check
      _
    $region67: #{image_captioning_decoder.1} parent=1 // pred_check_branch
      %105 = sbr.rel (0) target = $region69
    $region68: #{image_captioning_decoder.1} parent=1 // pred_region
      %106 = dma.done [#allocation7], 24576
    $region69: #{image_captioning_decoder.1} parent=1 // pred_fallthru
      _
    // Predicated region
    $region70: #{image_captioning_decoder.1} parent=1 // pred_check
      _
    $region71: #{image_captioning_decoder.1} parent=1 // pred_check_branch
      %108 = sbr.rel (0) target = $region73
    $region72: #{image_captioning_decoder.1} parent=1 // pred_region
      %109 = dma.done [#allocation10], 4096
    $region73: #{image_captioning_decoder.1} parent=1 // pred_fallthru
      _
    %p111 = scmp.eq.s32.totalorder 0, 0
    // Predicated region
    $region74: #{image_captioning_decoder.1} parent=1 // pred_check
      %p112 = pneg %p111
    $region75: #{image_captioning_decoder.1} parent=1 // pred_check_branch
      %114 = sbr.rel (%p112) target = $region77
    $region76: #{image_captioning_decoder.1} parent=1 // pred_region
      %v115 = vld [vmem:[#allocation3] sm:$0xff]
      %v116 = vld [vmem:[#allocation3 + $0x8] sm:$0xff]
      %v117 = vld [vmem:[#allocation3 + $0x10] sm:$0xff]
      %v118 = vld [vmem:[#allocation3 + $0x18] sm:$0xff]
      %v119 = vld [vmem:[#allocation3 + $0x20] sm:$0xff]
      %v120 = vld [vmem:[#allocation3 + $0x28] sm:$0xff]
      %v121 = vld [vmem:[#allocation3 + $0x30] sm:$0xff]
      %v122 = vld [vmem:[#allocation3 + $0x38] sm:$0xff]
      %v123 = vld [vmem:[#allocation3 + $0x40] sm:$0xff]
      %v124 = vld [vmem:[#allocation3 + $0x48] sm:$0xff]
      %v125 = vld [vmem:[#allocation3 + $0x50] sm:$0xff]
      %v126 = vld [vmem:[#allocation3 + $0x58] sm:$0xff]
      %v127 = vld [vmem:[#allocation3 + $0x60] sm:$0xff]
      %v128 = vld [vmem:[#allocation3 + $0x68] sm:$0xff]
      %v129 = vld [vmem:[#allocation3 + $0x70] sm:$0xff]
      %v130 = vld [vmem:[#allocation3 + $0x78] sm:$0xff]
      %v131 = vld [vmem:[#allocation3 + $0x80] sm:$0xff]
      %v132 = vld [vmem:[#allocation3 + $0x88] sm:$0xff]
      %v133 = vld [vmem:[#allocation3 + $0x90] sm:$0xff]
      %v134 = vld [vmem:[#allocation3 + $0x98] sm:$0xff]
      %v135 = vld [vmem:[#allocation3 + $0xa0] sm:$0xff]
      %v136 = vld [vmem:[#allocation3 + $0xa8] sm:$0xff]
      %v137 = vld [vmem:[#allocation3 + $0xb0] sm:$0xff]
      %v138 = vld [vmem:[#allocation3 + $0xb8] sm:$0xff]
      %v139 = vld [vmem:[#allocation3 + $0xc0] sm:$0xff]
      %v140 = vld [vmem:[#allocation3 + $0xc8] sm:$0xff]
      %v141 = vld [vmem:[#allocation3 + $0xd0] sm:$0xff]
      %v142 = vld [vmem:[#allocation3 + $0xd8] sm:$0xff]
      %v143 = vld [vmem:[#allocation3 + $0xe0] sm:$0xff]
      %v144 = vld [vmem:[#allocation3 + $0xe8] sm:$0xff]
      %v145 = vld [vmem:[#allocation3 + $0xf0] sm:$0xff]
      %v146 = vld [vmem:[#allocation3 + $0xf8] sm:$0xff]
      %v147 = vld [vmem:[%s1] sm:$0xff]
      %v148 = vld [vmem:[%s1 + $0x8] sm:$0xff]
      %v149 = vld [vmem:[%s2] sm:$0xff]
      %v150 = vld [vmem:[%s2 + $0x8] sm:$0xff]
      %v151 = vld [vmem:[%s3] sm:$0xff]
      %v152 = vld [vmem:[%s3 + $0x8] sm:$0xff]
      %v153 = vld [vmem:[%s4] sm:$0xff]
      %v154 = vld [vmem:[%s4 + $0x8] sm:$0xff]
      %v155 = vld [vmem:[%s4 + $0x10] sm:$0xff]
      %v156 = vld [vmem:[%s4 + $0x18] sm:$0xff]
      %v157 = vld [vmem:[%s4 + $0x20] sm:$0xff]
      %v158 = vld [vmem:[%s4 + $0x28] sm:$0xff]
      %v159 = vld [vmem:[%s4 + $0x30] sm:$0xff]
      %v160 = vld [vmem:[%s4 + $0x38] sm:$0xff]
      %v161 = vld [vmem:[%s4 + $0x40] sm:$0xff]
      %v162 = vld [vmem:[%s4 + $0x48] sm:$0xff]
      %v163 = vld [vmem:[%s4 + $0x50] sm:$0xff]
      %v164 = vld [vmem:[%s4 + $0x58] sm:$0xff]
      %v165 = vld [vmem:[%s4 + $0x60] sm:$0xff]
      %v166 = vld [vmem:[%s4 + $0x68] sm:$0xff]
      %v167 = vld [vmem:[%s4 + $0x70] sm:$0xff]
      %v168 = vld [vmem:[%s4 + $0x78] sm:$0xff]
      %169 = vmatprep.subr.mxu0 0.0
      %170 = vmatpush1.msra.mxu0 %v168
      %171 = vmatprep.subr.mxu0 0.0
      %172 = vmatpush1.msra.mxu0 %v167
      %173 = vmatprep.subr.mxu0 0.0
      %174 = vmatpush1.msra.mxu0 %v166
      %175 = vmatprep.subr.mxu0 0.0
      %176 = vmatpush1.msra.mxu0 %v165
      %177 = vmatprep.subr.mxu0 0.0
      %178 = vmatpush1.msra.mxu0 %v164
      %179 = vmatprep.subr.mxu0 0.0
      %180 = vmatpush1.msra.mxu0 %v163
      %181 = vmatprep.subr.mxu0 0.0
      %182 = vmatpush1.msra.mxu0 %v162
      %183 = vmatprep.subr.mxu0 0.0
      %184 = vmatpush1.msra.mxu0 %v161
      %185 = vmatprep.subr.mxu0 0.0
      %186 = vmatpush1.msra.mxu0 %v160
      %187 = vmatprep.subr.mxu0 0.0
      %188 = vmatpush1.msra.mxu0 %v159
      %189 = vmatprep.subr.mxu0 0.0
      %190 = vmatpush1.msra.mxu0 %v158
      %191 = vmatprep.subr.mxu0 0.0
      %192 = vmatpush1.msra.mxu0 %v157
      %193 = vmatprep.subr.mxu0 0.0
      %194 = vmatpush1.msra.mxu0 %v156
      %195 = vmatprep.subr.mxu0 0.0
      %196 = vmatpush1.msra.mxu0 %v155
      %197 = vmatprep.subr.mxu0 0.0
      %198 = vmatpush1.msra.mxu0 %v154
      %199 = vmatprep.subr.mxu0 0.0
      %200 = vmatpush1.msra.mxu0 %v153
      %201 = vmatprep.subr.mxu0 0.0
      %202 = vmatpush2.msra.mxu0 0.0
      %203 = vmatprep.subr.mxu0 0.0
      %204 = vmatpush2.msra.mxu0 0.0
      %205 = vmatprep.subr.mxu0 0.0
      %206 = vmatpush2.msra.mxu0 0.0
      %207 = vmatprep.subr.mxu0 0.0
      %208 = vmatpush2.msra.mxu0 0.0
      %209 = vmatprep.subr.mxu0 0.0
      %210 = vmatpush2.msra.mxu0 0.0
      %211 = vmatprep.subr.mxu0 0.0
      %212 = vmatpush2.msra.mxu0 0.0
      %213 = vmatprep.subr.mxu0 0.0
      %214 = vmatpush2.msra.mxu0 0.0
      %215 = vmatprep.subr.mxu0 0.0
      %216 = vmatpush2.msra.mxu0 0.0
      %217 = vmatprep.subr.mxu0 0.0
      %218 = vmatpush2.msra.mxu0 0.0
      %219 = vmatprep.subr.mxu0 0.0
      %220 = vmatpush2.msra.mxu0 0.0
      %221 = vmatprep.subr.mxu0 0.0
      %222 = vmatpush2.msra.mxu0 0.0
      %223 = vmatprep.subr.mxu0 0.0
      %224 = vmatpush2.msra.mxu0 0.0
      %225 = vmatprep.subr.mxu0 0.0
      %226 = vmatpush2.msra.mxu0 0.0
      %227 = vmatprep.subr.mxu0 0.0
      %228 = vmatpush2.msra.mxu0 0.0
      %229 = vmatprep.subr.mxu0 0.0
      %230 = vmatpush2.msra.mxu0 0.0
      %231 = vmatprep.subr.mxu0 0.0
      %232 = vmatpush2.msra.mxu0 0.0
      %233 = vmatprep.mubr.f32.mxu0 0.0
      %234 = vmatmul.mubr.f32.gmra.mxu0 %v115
      %v235 = vpop.f32.mrf.mxu0
      %v236 = vadd.f32 0.0, %v235
      %v237 = vpop.f32.mrf.mxu0
      %238 = vmatprep.mubr.f32.mxu0 0.0
      %239 = vmatmul.mubr.f32.gmra.mxu0 %v116
      %v240 = vpop.f32.mrf.mxu0
      %v241 = vadd.f32 0.0, %v240
      %v242 = vpop.f32.mrf.mxu0
      %243 = vmatprep.mubr.f32.mxu0 0.0
      %244 = vmatmul.mubr.f32.gmra.mxu0 %v117
      %v245 = vpop.f32.mrf.mxu0
      %v246 = vadd.f32 0.0, %v245
      %v247 = vpop.f32.mrf.mxu0
      %248 = vmatprep.mubr.f32.mxu0 0.0
      %249 = vmatmul.mubr.f32.gmra.mxu0 %v118
      %v250 = vpop.f32.mrf.mxu0
      %v251 = vadd.f32 0.0, %v250
      %v252 = vpop.f32.mrf.mxu0
      %253 = vmatprep.mubr.f32.mxu0 0.0
      %254 = vmatmul.mubr.f32.gmra.mxu0 %v119
      %v255 = vpop.f32.mrf.mxu0
      %v256 = vadd.f32 0.0, %v255
      %v257 = vpop.f32.mrf.mxu0
      %258 = vmatprep.mubr.f32.mxu0 0.0
      %259 = vmatmul.mubr.f32.gmra.mxu0 %v120
      %v260 = vpop.f32.mrf.mxu0
      %v261 = vadd.f32 0.0, %v260
      %v262 = vpop.f32.mrf.mxu0
      %263 = vmatprep.mubr.f32.mxu0 0.0
      %264 = vmatmul.mubr.f32.gmra.mxu0 %v121
      %v265 = vpop.f32.mrf.mxu0
      %v266 = vadd.f32 0.0, %v265
      %v267 = vpop.f32.mrf.mxu0
      %268 = vmatprep.mubr.f32.mxu0 0.0
      %269 = vmatmul.mubr.f32.gmra.mxu0 %v122
      %v270 = vpop.f32.mrf.mxu0
      %v271 = vadd.f32 0.0, %v270
      %v272 = vpop.f32.mrf.mxu0
      %273 = vmatprep.mubr.f32.mxu0 0.0
      %274 = vmatmul.mubr.f32.gmra.mxu0 %v123
      %v275 = vpop.f32.mrf.mxu0
      %v276 = vadd.f32 0.0, %v275
      %v277 = vpop.f32.mrf.mxu0
      %278 = vmatprep.mubr.f32.mxu0 0.0
      %279 = vmatmul.mubr.f32.gmra.mxu0 %v124
      %v280 = vpop.f32.mrf.mxu0
      %v281 = vadd.f32 0.0, %v280
      %v282 = vpop.f32.mrf.mxu0
      %283 = vmatprep.mubr.f32.mxu0 0.0
      %284 = vmatmul.mubr.f32.gmra.mxu0 %v125
      %v285 = vpop.f32.mrf.mxu0
      %v286 = vadd.f32 0.0, %v285
      %v287 = vpop.f32.mrf.mxu0
      %288 = vmatprep.mubr.f32.mxu0 0.0
      %289 = vmatmul.mubr.f32.gmra.mxu0 %v126
      %v290 = vpop.f32.mrf.mxu0
      %v291 = vadd.f32 0.0, %v290
      %v292 = vpop.f32.mrf.mxu0
      %293 = vmatprep.mubr.f32.mxu0 0.0
      %294 = vmatmul.mubr.f32.gmra.mxu0 %v127
      %v295 = vpop.f32.mrf.mxu0
      %v296 = vadd.f32 0.0, %v295
      %v297 = vpop.f32.mrf.mxu0
      %298 = vmatprep.mubr.f32.mxu0 0.0
      %299 = vmatmul.mubr.f32.gmra.mxu0 %v128
      %v300 = vpop.f32.mrf.mxu0
      %v301 = vadd.f32 0.0, %v300
      %v302 = vpop.f32.mrf.mxu0
      %303 = vmatprep.mubr.f32.mxu0 0.0
      %304 = vmatmul.mubr.f32.gmra.mxu0 %v129
      %v305 = vpop.f32.mrf.mxu0
      %v306 = vadd.f32 0.0, %v305
      %v307 = vpop.f32.mrf.mxu0
      %308 = vmatprep.mubr.f32.mxu0 0.0
      %309 = vmatmul.mubr.f32.gmra.mxu0 %v130
      %v310 = vpop.f32.mrf.mxu0
      %v311 = vadd.f32 0.0, %v310
      %v312 = vpop.f32.mrf.mxu0
      %313 = vmatprep.mubr.f32.mxu0 0.0
      %314 = vmatmul.mubr.f32.gmra.mxu0 %v131
      %v315 = vpop.f32.mrf.mxu0
      %v316 = vadd.f32 0.0, %v315
      %v317 = vpop.f32.mrf.mxu0
      %318 = vmatprep.mubr.f32.mxu0 0.0
      %319 = vmatmul.mubr.f32.gmra.mxu0 %v132
      %v320 = vpop.f32.mrf.mxu0
      %v321 = vadd.f32 0.0, %v320
      %v322 = vpop.f32.mrf.mxu0
      %323 = vmatprep.mubr.f32.mxu0 0.0
      %324 = vmatmul.mubr.f32.gmra.mxu0 %v133
      %v325 = vpop.f32.mrf.mxu0
      %v326 = vadd.f32 0.0, %v325
      %v327 = vpop.f32.mrf.mxu0
      %328 = vmatprep.mubr.f32.mxu0 0.0
      %329 = vmatmul.mubr.f32.gmra.mxu0 %v134
      %v330 = vpop.f32.mrf.mxu0
      %v331 = vadd.f32 0.0, %v330
      %v332 = vpop.f32.mrf.mxu0
      %333 = vmatprep.mubr.f32.mxu0 0.0
      %334 = vmatmul.mubr.f32.gmra.mxu0 %v135
      %v335 = vpop.f32.mrf.mxu0
      %v336 = vadd.f32 0.0, %v335
      %v337 = vpop.f32.mrf.mxu0
      %338 = vmatprep.mubr.f32.mxu0 0.0
      %339 = vmatmul.mubr.f32.gmra.mxu0 %v136
      %v340 = vpop.f32.mrf.mxu0
      %v341 = vadd.f32 0.0, %v340
      %v342 = vpop.f32.mrf.mxu0
      %343 = vmatprep.mubr.f32.mxu0 0.0
      %344 = vmatmul.mubr.f32.gmra.mxu0 %v137
      %v345 = vpop.f32.mrf.mxu0
      %v346 = vadd.f32 0.0, %v345
      %v347 = vpop.f32.mrf.mxu0
      %348 = vmatprep.mubr.f32.mxu0 0.0
      %349 = vmatmul.mubr.f32.gmra.mxu0 %v138
      %v350 = vpop.f32.mrf.mxu0
      %v351 = vadd.f32 0.0, %v350
      %v352 = vpop.f32.mrf.mxu0
      %353 = vmatprep.mubr.f32.mxu0 0.0
      %354 = vmatmul.mubr.f32.gmra.mxu0 %v139
      %v355 = vpop.f32.mrf.mxu0
      %v356 = vadd.f32 0.0, %v355
      %v357 = vpop.f32.mrf.mxu0
      %358 = vmatprep.mubr.f32.mxu0 0.0
      %359 = vmatmul.mubr.f32.gmra.mxu0 %v140
      %v360 = vpop.f32.mrf.mxu0
      %v361 = vadd.f32 0.0, %v360
      %v362 = vpop.f32.mrf.mxu0
      %363 = vmatprep.mubr.f32.mxu0 0.0
      %364 = vmatmul.mubr.f32.gmra.mxu0 %v141
      %v365 = vpop.f32.mrf.mxu0
      %v366 = vadd.f32 0.0, %v365
      %v367 = vpop.f32.mrf.mxu0
      %368 = vmatprep.mubr.f32.mxu0 0.0
      %369 = vmatmul.mubr.f32.gmra.mxu0 %v142
      %v370 = vpop.f32.mrf.mxu0
      %v371 = vadd.f32 0.0, %v370
      %v372 = vpop.f32.mrf.mxu0
      %373 = vmatprep.mubr.f32.mxu0 0.0
      %374 = vmatmul.mubr.f32.gmra.mxu0 %v143
      %v375 = vpop.f32.mrf.mxu0
      %v376 = vadd.f32 0.0, %v375
      %v377 = vpop.f32.mrf.mxu0
      %378 = vmatprep.mubr.f32.mxu0 0.0
      %379 = vmatmul.mubr.f32.gmra.mxu0 %v144
      %v380 = vpop.f32.mrf.mxu0
      %v381 = vadd.f32 0.0, %v380
      %v382 = vpop.f32.mrf.mxu0
      %383 = vmatprep.mubr.f32.mxu0 0.0
      %384 = vmatmul.mubr.f32.gmra.mxu0 %v145
      %v385 = vpop.f32.mrf.mxu0
      %v386 = vadd.f32 0.0, %v385
      %v387 = vpop.f32.mrf.mxu0
      %388 = vmatprep.mubr.f32.mxu0 0.0
      %389 = vmatmul.mubr.f32.gmra.mxu0 %v146
      %v390 = vpop.f32.mrf.mxu0
      %v391 = vadd.f32 0.0, %v390
      %v392 = vpop.f32.mrf.mxu0
      %393 = vdwg.mxu0
      %v394 = vld [vmem:[%s5] sm:$0x1]
      %v396 = vlaneseq
      %v397 = vshrl.u32 %v396, 7
      %v398 = vsub.s32 0, %v397
      %v399 = vrot.slane %v394, %v398
      %v401 = vadd.f32 %v236, %v399
      %v402 = vadd.f32 %v241, %v399
      %v403 = vadd.f32 %v246, %v399
      %v404 = vadd.f32 %v251, %v399
      %v405 = vadd.f32 %v256, %v399
      %v406 = vadd.f32 %v261, %v399
      %v407 = vadd.f32 %v266, %v399
      %v408 = vadd.f32 %v271, %v399
      %v409 = vadd.f32 %v276, %v399
      %v410 = vadd.f32 %v281, %v399
      %v411 = vadd.f32 %v286, %v399
      %v412 = vadd.f32 %v291, %v399
      %v413 = vadd.f32 %v296, %v399
      %v414 = vadd.f32 %v301, %v399
      %v415 = vadd.f32 %v306, %v399
      %v416 = vadd.f32 %v311, %v399
      %v417 = vadd.f32 %v316, %v399
      %v418 = vadd.f32 %v321, %v399
      %v419 = vadd.f32 %v326, %v399
      %v420 = vadd.f32 %v331, %v399
      %v421 = vadd.f32 %v336, %v399
      %v422 = vadd.f32 %v341, %v399
      %v423 = vadd.f32 %v346, %v399
      %v424 = vadd.f32 %v351, %v399
      %v425 = vadd.f32 %v356, %v399
      %v426 = vadd.f32 %v361, %v399
      %v427 = vadd.f32 %v366, %v399
      %v428 = vadd.f32 %v371, %v399
      %v429 = vadd.f32 %v376, %v399
      %v430 = vadd.f32 %v381, %v399
      %v431 = vadd.f32 %v386, %v399
      %v432 = vadd.f32 %v391, %v399
      %v433 = vld [vmem:[#allocation6] sm:$0xff]
      %v434 = vld [vmem:[#allocation6 + $0x8] sm:$0xff]
      %v435 = vld [vmem:[#allocation6 + $0x10] sm:$0xff]
      %v436 = vld [vmem:[#allocation6 + $0x18] sm:$0xff]
      %v437 = vld [vmem:[#allocation6 + $0x20] sm:$0xff]
      %v438 = vld [vmem:[#allocation6 + $0x28] sm:$0xff]
      %v439 = vld [vmem:[#allocation6 + $0x30] sm:$0xff]
      %v440 = vld [vmem:[#allocation6 + $0x38] sm:$0xff]
      %v441 = vld [vmem:[#allocation6 + $0x40] sm:$0xff]
      %v442 = vld [vmem:[#allocation6 + $0x48] sm:$0xff]
      %v443 = vld [vmem:[#allocation6 + $0x50] sm:$0xff]
      %v444 = vld [vmem:[#allocation6 + $0x58] sm:$0xff]
      %v445 = vld [vmem:[#allocation6 + $0x60] sm:$0xff]
      %v446 = vld [vmem:[#allocation6 + $0x68] sm:$0xff]
      %v447 = vld [vmem:[#allocation6 + $0x70] sm:$0xff]
      %v448 = vld [vmem:[#allocation6 + $0x78] sm:$0xff]
      %v449 = vld [vmem:[%s7] sm:$0x1]
      %v451 = vlaneseq
      %v452 = vshrl.u32 %v451, 7
      %v453 = vsub.s32 0, %v452
      %v454 = vrot.slane %v449, %v453
      %456 = vmatprep.subr.mxu0 0.0
      %457 = vmatpush1.msra.mxu0 %v448
      %458 = vmatprep.subr.mxu0 0.0
      %459 = vmatpush1.msra.mxu0 %v447
      %460 = vmatprep.subr.mxu0 0.0
      %461 = vmatpush1.msra.mxu0 %v446
      %462 = vmatprep.subr.mxu0 0.0
      %463 = vmatpush1.msra.mxu0 %v445
      %464 = vmatprep.subr.mxu0 0.0
      %465 = vmatpush1.msra.mxu0 %v444
      %466 = vmatprep.subr.mxu0 0.0
      %467 = vmatpush1.msra.mxu0 %v443
      %468 = vmatprep.subr.mxu0 0.0
      %469 = vmatpush1.msra.mxu0 %v442
      %470 = vmatprep.subr.mxu0 0.0
      %471 = vmatpush1.msra.mxu0 %v441
      %472 = vmatprep.subr.mxu0 0.0
      %473 = vmatpush1.msra.mxu0 %v440
      %474 = vmatprep.subr.mxu0 0.0
      %475 = vmatpush1.msra.mxu0 %v439
      %476 = vmatprep.subr.mxu0 0.0
      %477 = vmatpush1.msra.mxu0 %v438
      %478 = vmatprep.subr.mxu0 0.0
      %479 = vmatpush1.msra.mxu0 %v437
      %480 = vmatprep.subr.mxu0 0.0
      %481 = vmatpush1.msra.mxu0 %v436
      %482 = vmatprep.subr.mxu0 0.0
      %483 = vmatpush1.msra.mxu0 %v435
      %484 = vmatprep.subr.mxu0 0.0
      %485 = vmatpush1.msra.mxu0 %v434
      %486 = vmatprep.subr.mxu0 0.0
      %487 = vmatpush1.msra.mxu0 %v433
      %488 = vmatprep.subr.mxu0 0.0
      %489 = vmatpush2.msra.mxu0 0.0
      %490 = vmatprep.subr.mxu0 0.0
      %491 = vmatpush2.msra.mxu0 0.0
      %492 = vmatprep.subr.mxu0 0.0
      %493 = vmatpush2.msra.mxu0 0.0
      %494 = vmatprep.subr.mxu0 0.0
      %495 = vmatpush2.msra.mxu0 0.0
      %496 = vmatprep.subr.mxu0 0.0
      %497 = vmatpush2.msra.mxu0 0.0
      %498 = vmatprep.subr.mxu0 0.0
      %499 = vmatpush2.msra.mxu0 0.0
      %500 = vmatprep.subr.mxu0 0.0
      %501 = vmatpush2.msra.mxu0 0.0
      %502 = vmatprep.subr.mxu0 0.0
      %503 = vmatpush2.msra.mxu0 0.0
      %504 = vmatprep.subr.mxu0 0.0
      %505 = vmatpush2.msra.mxu0 0.0
      %506 = vmatprep.subr.mxu0 0.0
      %507 = vmatpush2.msra.mxu0 0.0
      %508 = vmatprep.subr.mxu0 0.0
      %509 = vmatpush2.msra.mxu0 0.0
      %510 = vmatprep.subr.mxu0 0.0
      %511 = vmatpush2.msra.mxu0 0.0
      %512 = vmatprep.subr.mxu0 0.0
      %513 = vmatpush2.msra.mxu0 0.0
      %514 = vmatprep.subr.mxu0 0.0
      %515 = vmatpush2.msra.mxu0 0.0
      %516 = vmatprep.subr.mxu0 0.0
      %517 = vmatpush2.msra.mxu0 0.0
      %518 = vmatprep.subr.mxu0 0.0
      %519 = vmatpush2.msra.mxu0 0.0
      %520 = vmatprep.mubr.f32.mxu0 0.0
      %521 = vmatmul.mubr.f32.gmra.mxu0 %v147
      %v522 = vpop.f32.mrf.mxu0
      %v523 = vadd.f32 %v454, %v522
      %v524 = vpop.f32.mrf.mxu0
      %525 = vmatprep.mubr.f32.mxu0 0.0
      %526 = vmatmul.mubr.f32.gmra.mxu0 %v148
      %v527 = vpop.f32.mrf.mxu0
      %v528 = vadd.f32 %v454, %v527
      %v529 = vpop.f32.mrf.mxu0
      %530 = vdwg.mxu0
      %v533 = vcombine.high %v523, %v523
      %v535 = vunpack.c.l.s4 1966171168
      %v536 = vunpack.c.0.s8 %v535
      %v537 = vlaneseq
      %v538 = vshrl.u32 %v537, 7
      %v539 = vsub.s32 %v536, %v538
      %v540 = vrot.slane %v523, %v539
      %v542 = vunpack.c.l.s4 1966171168
      %v543 = vunpack.c.0.s8 %v542
      %v544 = vlaneseq
      %v545 = vshrl.u32 %v544, 7
      %v546 = vsub.s32 %v543, %v545
      %v547 = vrot.slane %v533, %v546
      %v548 = vcombine.high %v540, %v540
      %v549 = vcombine.high %v547, %v547
      %v551 = vunpack.c.l.s4 1966171168
      %v552 = vunpack.c.0.s8 %v551
      %v553 = vlaneseq
      %v554 = vshrl.u32 %v553, 7
      %v555 = vsub.s32 %v552, %v554
      %v556 = vrot.slane %v540, %v555
      %v558 = vunpack.c.l.s4 1966171168
      %v559 = vunpack.c.0.s8 %v558
      %v560 = vlaneseq
      %v561 = vshrl.u32 %v560, 7
      %v562 = vsub.s32 %v559, %v561
      %v563 = vrot.slane %v547, %v562
      %v565 = vunpack.c.l.s4 1966171168
      %v566 = vunpack.c.0.s8 %v565
      %v567 = vlaneseq
      %v568 = vshrl.u32 %v567, 7
      %v569 = vsub.s32 %v566, %v568
      %v570 = vrot.slane %v548, %v569
      %v572 = vunpack.c.l.s4 1966171168
      %v573 = vunpack.c.0.s8 %v572
      %v574 = vlaneseq
      %v575 = vshrl.u32 %v574, 7
      %v576 = vsub.s32 %v573, %v575
      %v577 = vrot.slane %v549, %v576
      %v578 = vcombine.high %v556, %v556
      %v579 = vcombine.high %v563, %v563
      %v580 = vcombine.high %v570, %v570
      %v581 = vcombine.high %v577, %v577
      %v582 = vcombine.high %v528, %v528
      %v584 = vunpack.c.l.s4 1966171168
      %v585 = vunpack.c.0.s8 %v584
      %v586 = vlaneseq
      %v587 = vshrl.u32 %v586, 7
      %v588 = vsub.s32 %v585, %v587
      %v589 = vrot.slane %v528, %v588
      %v591 = vunpack.c.l.s4 1966171168
      %v592 = vunpack.c.0.s8 %v591
      %v593 = vlaneseq
      %v594 = vshrl.u32 %v593, 7
      %v595 = vsub.s32 %v592, %v594
      %v596 = vrot.slane %v582, %v595
      %v597 = vcombine.high %v589, %v589
      %v598 = vcombine.high %v596, %v596
      %v600 = vunpack.c.l.s4 1966171168
      %v601 = vunpack.c.0.s8 %v600
      %v602 = vlaneseq
      %v603 = vshrl.u32 %v602, 7
      %v604 = vsub.s32 %v601, %v603
      %v605 = vrot.slane %v589, %v604
      %v607 = vunpack.c.l.s4 1966171168
      %v608 = vunpack.c.0.s8 %v607
      %v609 = vlaneseq
      %v610 = vshrl.u32 %v609, 7
      %v611 = vsub.s32 %v608, %v610
      %v612 = vrot.slane %v596, %v611
      %v614 = vunpack.c.l.s4 1966171168
      %v615 = vunpack.c.0.s8 %v614
      %v616 = vlaneseq
      %v617 = vshrl.u32 %v616, 7
      %v618 = vsub.s32 %v615, %v617
      %v619 = vrot.slane %v597, %v618
      %v621 = vunpack.c.l.s4 1966171168
      %v622 = vunpack.c.0.s8 %v621
      %v623 = vlaneseq
      %v624 = vshrl.u32 %v623, 7
      %v625 = vsub.s32 %v622, %v624
      %v626 = vrot.slane %v598, %v625
      %v627 = vcombine.high %v605, %v605
      %v628 = vcombine.high %v612, %v612
      %v629 = vcombine.high %v619, %v619
      %v630 = vcombine.high %v626, %v626
      %v631 = vlaneseq
      %v632 = vshrl.u32 %v631, 7
      %v633 = vsub.s32 0, %v632
      %v634 = vrot.slane %v556, %v633
      %v635 = vlaneseq
      %v636 = vshrl.u32 %v635, 7
      %v637 = vsub.s32 0, %v636
      %v638 = vrot.slane %v570, %v637
      %v639 = vlaneseq
      %v640 = vshrl.u32 %v639, 7
      %v641 = vsub.s32 0, %v640
      %v642 = vrot.slane %v578, %v641
      %v643 = vlaneseq
      %v644 = vshrl.u32 %v643, 7
      %v645 = vsub.s32 0, %v644
      %v646 = vrot.slane %v580, %v645
      %v647 = vlaneseq
      %v648 = vshrl.u32 %v647, 7
      %v649 = vsub.s32 0, %v648
      %v650 = vrot.slane %v563, %v649
      %v651 = vlaneseq
      %v652 = vshrl.u32 %v651, 7
      %v653 = vsub.s32 0, %v652
      %v654 = vrot.slane %v577, %v653
      %v655 = vlaneseq
      %v656 = vshrl.u32 %v655, 7
      %v657 = vsub.s32 0, %v656
      %v658 = vrot.slane %v579, %v657
      %v659 = vlaneseq
      %v660 = vshrl.u32 %v659, 7
      %v661 = vsub.s32 0, %v660
      %v662 = vrot.slane %v581, %v661
      %v663 = vlaneseq
      %v664 = vshrl.u32 %v663, 7
      %v665 = vsub.s32 0, %v664
      %v666 = vrot.slane %v605, %v665
      %v667 = vlaneseq
      %v668 = vshrl.u32 %v667, 7
      %v669 = vsub.s32 0, %v668
      %v670 = vrot.slane %v619, %v669
      %v671 = vlaneseq
      %v672 = vshrl.u32 %v671, 7
      %v673 = vsub.s32 0, %v672
      %v674 = vrot.slane %v627, %v673
      %v675 = vlaneseq
      %v676 = vshrl.u32 %v675, 7
      %v677 = vsub.s32 0, %v676
      %v678 = vrot.slane %v629, %v677
      %v679 = vlaneseq
      %v680 = vshrl.u32 %v679, 7
      %v681 = vsub.s32 0, %v680
      %v682 = vrot.slane %v612, %v681
      %v683 = vlaneseq
      %v684 = vshrl.u32 %v683, 7
      %v685 = vsub.s32 0, %v684
      %v686 = vrot.slane %v626, %v685
      %v687 = vlaneseq
      %v688 = vshrl.u32 %v687, 7
      %v689 = vsub.s32 0, %v688
      %v690 = vrot.slane %v628, %v689
      %v691 = vlaneseq
      %v692 = vshrl.u32 %v691, 7
      %v693 = vsub.s32 0, %v692
      %v694 = vrot.slane %v630, %v693
      %v711 = vadd.f32 %v401, %v634
      %v712 = vadd.f32 %v402, %v634
      %v713 = vadd.f32 %v403, %v638
      %v714 = vadd.f32 %v404, %v638
      %v715 = vadd.f32 %v405, %v642
      %v716 = vadd.f32 %v406, %v642
      %v717 = vadd.f32 %v407, %v646
      %v718 = vadd.f32 %v408, %v646
      %v719 = vadd.f32 %v409, %v650
      %v720 = vadd.f32 %v410, %v650
      %v721 = vadd.f32 %v411, %v654
      %v722 = vadd.f32 %v412, %v654
      %v723 = vadd.f32 %v413, %v658
      %v724 = vadd.f32 %v414, %v658
      %v725 = vadd.f32 %v415, %v662
      %v726 = vadd.f32 %v416, %v662
      %v727 = vadd.f32 %v417, %v666
      %v728 = vadd.f32 %v418, %v666
      %v729 = vadd.f32 %v419, %v670
      %v730 = vadd.f32 %v420, %v670
      %v731 = vadd.f32 %v421, %v674
      %v732 = vadd.f32 %v422, %v674
      %v733 = vadd.f32 %v423, %v678
      %v734 = vadd.f32 %v424, %v678
      %v735 = vadd.f32 %v425, %v682
      %v736 = vadd.f32 %v426, %v682
      %v737 = vadd.f32 %v427, %v686
      %v738 = vadd.f32 %v428, %v686
      %v739 = vadd.f32 %v429, %v690
      %v740 = vadd.f32 %v430, %v690
      %v741 = vadd.f32 %v431, %v694
      %v742 = vadd.f32 %v432, %v694
      %v743 = vmax.f32 %v711, 0.0
      %v744 = vmax.f32 %v712, 0.0
      %v745 = vmax.f32 %v713, 0.0
      %v746 = vmax.f32 %v714, 0.0
      %v747 = vmax.f32 %v715, 0.0
      %v748 = vmax.f32 %v716, 0.0
      %v749 = vmax.f32 %v717, 0.0
      %v750 = vmax.f32 %v718, 0.0
      %v751 = vmax.f32 %v719, 0.0
      %v752 = vmax.f32 %v720, 0.0
      %v753 = vmax.f32 %v721, 0.0
      %v754 = vmax.f32 %v722, 0.0
      %v755 = vmax.f32 %v723, 0.0
      %v756 = vmax.f32 %v724, 0.0
      %v757 = vmax.f32 %v725, 0.0
      %v758 = vmax.f32 %v726, 0.0
      %v759 = vmax.f32 %v727, 0.0
      %v760 = vmax.f32 %v728, 0.0
      %v761 = vmax.f32 %v729, 0.0
      %v762 = vmax.f32 %v730, 0.0
      %v763 = vmax.f32 %v731, 0.0
      %v764 = vmax.f32 %v732, 0.0
      %v765 = vmax.f32 %v733, 0.0
      %v766 = vmax.f32 %v734, 0.0
      %v767 = vmax.f32 %v735, 0.0
      %v768 = vmax.f32 %v736, 0.0
      %v769 = vmax.f32 %v737, 0.0
      %v770 = vmax.f32 %v738, 0.0
      %v771 = vmax.f32 %v739, 0.0
      %v772 = vmax.f32 %v740, 0.0
      %v773 = vmax.f32 %v741, 0.0
      %v774 = vmax.f32 %v742, 0.0
      %v775 = vld [vmem:[%s8] sm:$0x1]
      %v777 = vlaneseq
      %v778 = vshrl.u32 %v777, 7
      %v779 = vsub.s32 0, %v778
      %v780 = vrot.slane %v775, %v779
      %v782 = vmul.f32 %v743, %v780
      %v783 = vmul.f32 %v744, %v780
      %v784 = vmul.f32 %v745, %v780
      %v785 = vmul.f32 %v746, %v780
      %v786 = vmul.f32 %v747, %v780
      %v787 = vmul.f32 %v748, %v780
      %v788 = vmul.f32 %v749, %v780
      %v789 = vmul.f32 %v750, %v780
      %v790 = vmul.f32 %v751, %v780
      %v791 = vmul.f32 %v752, %v780
      %v792 = vmul.f32 %v753, %v780
      %v793 = vmul.f32 %v754, %v780
      %v794 = vmul.f32 %v755, %v780
      %v795 = vmul.f32 %v756, %v780
      %v796 = vmul.f32 %v757, %v780
      %v797 = vmul.f32 %v758, %v780
      %v798 = vmul.f32 %v759, %v780
      %v799 = vmul.f32 %v760, %v780
      %v800 = vmul.f32 %v761, %v780
      %v801 = vmul.f32 %v762, %v780
      %v802 = vmul.f32 %v763, %v780
      %v803 = vmul.f32 %v764, %v780
      %v804 = vmul.f32 %v765, %v780
      %v805 = vmul.f32 %v766, %v780
      %v806 = vmul.f32 %v767, %v780
      %v807 = vmul.f32 %v768, %v780
      %v808 = vmul.f32 %v769, %v780
      %v809 = vmul.f32 %v770, %v780
      %v810 = vmul.f32 %v771, %v780
      %v811 = vmul.f32 %v772, %v780
      %v812 = vmul.f32 %v773, %v780
      %v813 = vmul.f32 %v774, %v780
      %814 = vadd.xlane.f32.xlu0 %v782
      %v815 = vpop.xlane.xlu0 %814
      %816 = vadd.xlane.f32.xlu0 %v783
      %v817 = vpop.xlane.xlu0 %816
      %818 = vadd.xlane.f32.xlu0 %v784
      %v819 = vpop.xlane.xlu0 %818
      %820 = vadd.xlane.f32.xlu0 %v785
      %v821 = vpop.xlane.xlu0 %820
      %822 = vadd.xlane.f32.xlu0 %v786
      %v823 = vpop.xlane.xlu0 %822
      %824 = vadd.xlane.f32.xlu0 %v787
      %v825 = vpop.xlane.xlu0 %824
      %826 = vadd.xlane.f32.xlu0 %v788
      %v827 = vpop.xlane.xlu0 %826
      %828 = vadd.xlane.f32.xlu0 %v789
      %v829 = vpop.xlane.xlu0 %828
      %830 = vadd.xlane.f32.xlu0 %v790
      %v831 = vpop.xlane.xlu0 %830
      %832 = vadd.xlane.f32.xlu0 %v791
      %v833 = vpop.xlane.xlu0 %832
      %834 = vadd.xlane.f32.xlu0 %v792
      %v835 = vpop.xlane.xlu0 %834
      %836 = vadd.xlane.f32.xlu0 %v793
      %v837 = vpop.xlane.xlu0 %836
      %838 = vadd.xlane.f32.xlu0 %v794
      %v839 = vpop.xlane.xlu0 %838
      %840 = vadd.xlane.f32.xlu0 %v795
      %v841 = vpop.xlane.xlu0 %840
      %842 = vadd.xlane.f32.xlu0 %v796
      %v843 = vpop.xlane.xlu0 %842
      %844 = vadd.xlane.f32.xlu0 %v797
      %v845 = vpop.xlane.xlu0 %844
      %846 = vadd.xlane.f32.xlu0 %v798
      %v847 = vpop.xlane.xlu0 %846
      %848 = vadd.xlane.f32.xlu0 %v799
      %v849 = vpop.xlane.xlu0 %848
      %850 = vadd.xlane.f32.xlu0 %v800
      %v851 = vpop.xlane.xlu0 %850
      %852 = vadd.xlane.f32.xlu0 %v801
      %v853 = vpop.xlane.xlu0 %852
      %854 = vadd.xlane.f32.xlu0 %v802
      %v855 = vpop.xlane.xlu0 %854
      %856 = vadd.xlane.f32.xlu0 %v803
      %v857 = vpop.xlane.xlu0 %856
      %858 = vadd.xlane.f32.xlu0 %v804
      %v859 = vpop.xlane.xlu0 %858
      %860 = vadd.xlane.f32.xlu0 %v805
      %v861 = vpop.xlane.xlu0 %860
      %862 = vadd.xlane.f32.xlu0 %v806
      %v863 = vpop.xlane.xlu0 %862
      %864 = vadd.xlane.f32.xlu0 %v807
      %v865 = vpop.xlane.xlu0 %864
      %866 = vadd.xlane.f32.xlu0 %v808
      %v867 = vpop.xlane.xlu0 %866
      %868 = vadd.xlane.f32.xlu0 %v809
      %v869 = vpop.xlane.xlu0 %868
      %870 = vadd.xlane.f32.xlu0 %v810
      %v871 = vpop.xlane.xlu0 %870
      %872 = vadd.xlane.f32.xlu0 %v811
      %v873 = vpop.xlane.xlu0 %872
      %874 = vadd.xlane.f32.xlu0 %v812
      %v875 = vpop.xlane.xlu0 %874
      %876 = vadd.xlane.f32.xlu0 %v813
      %v877 = vpop.xlane.xlu0 %876
      %s878 = sld [smem:[#allocation2]]
      %v879 = vstv %s878
      %v880 = vadd.f32 %v815, %v879
      %v881 = vadd.f32 %v817, %v879
      %v882 = vadd.f32 %v819, %v879
      %v883 = vadd.f32 %v821, %v879
      %v884 = vadd.f32 %v823, %v879
      %v885 = vadd.f32 %v825, %v879
      %v886 = vadd.f32 %v827, %v879
      %v887 = vadd.f32 %v829, %v879
      %v888 = vadd.f32 %v831, %v879
      %v889 = vadd.f32 %v833, %v879
      %v890 = vadd.f32 %v835, %v879
      %v891 = vadd.f32 %v837, %v879
      %v892 = vadd.f32 %v839, %v879
      %v893 = vadd.f32 %v841, %v879
      %v894 = vadd.f32 %v843, %v879
      %v895 = vadd.f32 %v845, %v879
      %v896 = vadd.f32 %v847, %v879
      %v897 = vadd.f32 %v849, %v879
      %v898 = vadd.f32 %v851, %v879
      %v899 = vadd.f32 %v853, %v879
      %v900 = vadd.f32 %v855, %v879
      %v901 = vadd.f32 %v857, %v879
      %v902 = vadd.f32 %v859, %v879
      %v903 = vadd.f32 %v861, %v879
      %v904 = vadd.f32 %v863, %v879
      %v905 = vadd.f32 %v865, %v879
      %v906 = vadd.f32 %v867, %v879
      %v907 = vadd.f32 %v869, %v879
      %v908 = vadd.f32 %v871, %v879
      %v909 = vadd.f32 %v873, %v879
      %v910 = vadd.f32 %v875, %v879
      %v911 = vadd.f32 %v877, %v879
      %v944 = vlaneseq
      %v945 = vand.u32 %v944, 127
      %v946 = vlaneseq
      %v947 = vshrl.u32 %v946, 7
      %v948 = vsub.s32 %v945, %v947
      %v949 = vrot.slane %v880, %v948
      %v950 = vadd.s32 %v945, 4294967288
      %v951 = vlaneseq
      %v952 = vshrl.u32 %v951, 7
      %v953 = vsub.s32 %v950, %v952
      %v954 = vrot.slane %v881, %v953
      %vm955 = vcmask 130112
      %v956 = vsel %vm955, %v954, %v949
      %v957 = vlaneseq
      %v958 = vshrl.u32 %v957, 7
      %v959 = vsub.s32 %v945, %v958
      %v960 = vrot.slane %v882, %v959
      %v961 = vlaneseq
      %v962 = vshrl.u32 %v961, 7
      %v963 = vsub.s32 %v950, %v962
      %v964 = vrot.slane %v883, %v963
      %v965 = vsel %vm955, %v964, %v960
      %v966 = vlaneseq
      %v967 = vshrl.u32 %v966, 7
      %v968 = vsub.s32 %v945, %v967
      %v969 = vrot.slane %v884, %v968
      %v970 = vlaneseq
      %v971 = vshrl.u32 %v970, 7
      %v972 = vsub.s32 %v950, %v971
      %v973 = vrot.slane %v885, %v972
      %v974 = vsel %vm955, %v973, %v969
      %v975 = vlaneseq
      %v976 = vshrl.u32 %v975, 7
      %v977 = vsub.s32 %v945, %v976
      %v978 = vrot.slane %v886, %v977
      %v979 = vlaneseq
      %v980 = vshrl.u32 %v979, 7
      %v981 = vsub.s32 %v950, %v980
      %v982 = vrot.slane %v887, %v981
      %v983 = vsel %vm955, %v982, %v978
      %v984 = vlaneseq
      %v985 = vshrl.u32 %v984, 7
      %v986 = vsub.s32 %v945, %v985
      %v987 = vrot.slane %v888, %v986
      %v988 = vlaneseq
      %v989 = vshrl.u32 %v988, 7
      %v990 = vsub.s32 %v950, %v989
      %v991 = vrot.slane %v889, %v990
      %v992 = vsel %vm955, %v991, %v987
      %v993 = vlaneseq
      %v994 = vshrl.u32 %v993, 7
      %v995 = vsub.s32 %v945, %v994
      %v996 = vrot.slane %v890, %v995
      %v997 = vlaneseq
      %v998 = vshrl.u32 %v997, 7
      %v999 = vsub.s32 %v950, %v998
      %v1000 = vrot.slane %v891, %v999
      %v1001 = vsel %vm955, %v1000, %v996
      %v1002 = vlaneseq
      %v1003 = vshrl.u32 %v1002, 7
      %v1004 = vsub.s32 %v945, %v1003
      %v1005 = vrot.slane %v892, %v1004
      %v1006 = vlaneseq
      %v1007 = vshrl.u32 %v1006, 7
      %v1008 = vsub.s32 %v950, %v1007
      %v1009 = vrot.slane %v893, %v1008
      %v1010 = vsel %vm955, %v1009, %v1005
      %v1011 = vlaneseq
      %v1012 = vshrl.u32 %v1011, 7
      %v1013 = vsub.s32 %v945, %v1012
      %v1014 = vrot.slane %v894, %v1013
      %v1015 = vlaneseq
      %v1016 = vshrl.u32 %v1015, 7
      %v1017 = vsub.s32 %v950, %v1016
      %v1018 = vrot.slane %v895, %v1017
      %v1019 = vsel %vm955, %v1018, %v1014
      %v1020 = vlaneseq
      %v1021 = vshrl.u32 %v1020, 7
      %v1022 = vsub.s32 %v945, %v1021
      %v1023 = vrot.slane %v896, %v1022
      %v1024 = vlaneseq
      %v1025 = vshrl.u32 %v1024, 7
      %v1026 = vsub.s32 %v950, %v1025
      %v1027 = vrot.slane %v897, %v1026
      %v1028 = vsel %vm955, %v1027, %v1023
      %v1029 = vlaneseq
      %v1030 = vshrl.u32 %v1029, 7
      %v1031 = vsub.s32 %v945, %v1030
      %v1032 = vrot.slane %v898, %v1031
      %v1033 = vlaneseq
      %v1034 = vshrl.u32 %v1033, 7
      %v1035 = vsub.s32 %v950, %v1034
      %v1036 = vrot.slane %v899, %v1035
      %v1037 = vsel %vm955, %v1036, %v1032
      %v1038 = vlaneseq
      %v1039 = vshrl.u32 %v1038, 7
      %v1040 = vsub.s32 %v945, %v1039
      %v1041 = vrot.slane %v900, %v1040
      %v1042 = vlaneseq
      %v1043 = vshrl.u32 %v1042, 7
      %v1044 = vsub.s32 %v950, %v1043
      %v1045 = vrot.slane %v901, %v1044
      %v1046 = vsel %vm955, %v1045, %v1041
      %v1047 = vlaneseq
      %v1048 = vshrl.u32 %v1047, 7
      %v1049 = vsub.s32 %v945, %v1048
      %v1050 = vrot.slane %v902, %v1049
      %v1051 = vlaneseq
      %v1052 = vshrl.u32 %v1051, 7
      %v1053 = vsub.s32 %v950, %v1052
      %v1054 = vrot.slane %v903, %v1053
      %v1055 = vsel %vm955, %v1054, %v1050
      %v1056 = vlaneseq
      %v1057 = vshrl.u32 %v1056, 7
      %v1058 = vsub.s32 %v945, %v1057
      %v1059 = vrot.slane %v904, %v1058
      %v1060 = vlaneseq
      %v1061 = vshrl.u32 %v1060, 7
      %v1062 = vsub.s32 %v950, %v1061
      %v1063 = vrot.slane %v905, %v1062
      %v1064 = vsel %vm955, %v1063, %v1059
      %v1065 = vlaneseq
      %v1066 = vshrl.u32 %v1065, 7
      %v1067 = vsub.s32 %v945, %v1066
      %v1068 = vrot.slane %v906, %v1067
      %v1069 = vlaneseq
      %v1070 = vshrl.u32 %v1069, 7
      %v1071 = vsub.s32 %v950, %v1070
      %v1072 = vrot.slane %v907, %v1071
      %v1073 = vsel %vm955, %v1072, %v1068
      %v1074 = vlaneseq
      %v1075 = vshrl.u32 %v1074, 7
      %v1076 = vsub.s32 %v945, %v1075
      %v1077 = vrot.slane %v908, %v1076
      %v1078 = vlaneseq
      %v1079 = vshrl.u32 %v1078, 7
      %v1080 = vsub.s32 %v950, %v1079
      %v1081 = vrot.slane %v909, %v1080
      %v1082 = vsel %vm955, %v1081, %v1077
      %v1083 = vlaneseq
      %v1084 = vshrl.u32 %v1083, 7
      %v1085 = vsub.s32 %v945, %v1084
      %v1086 = vrot.slane %v910, %v1085
      %v1087 = vlaneseq
      %v1088 = vshrl.u32 %v1087, 7
      %v1089 = vsub.s32 %v950, %v1088
      %v1090 = vrot.slane %v911, %v1089
      %v1091 = vsel %vm955, %v1090, %v1086
      %vm1092 = vcmask 1041409
      %v1093 = vsel %vm1092, %v965, %v956
      %vm1094 = vcmask 1042434
      %v1095 = vsel %vm1094, %v974, %v1093
      %vm1096 = vcmask 1043459
      %v1097 = vsel %vm1096, %v983, %v1095
      %vm1098 = vcmask 1044484
      %v1099 = vsel %vm1098, %v992, %v1097
      %vm1100 = vcmask 1045509
      %v1101 = vsel %vm1100, %v1001, %v1099
      %vm1102 = vcmask 1046534
      %v1103 = vsel %vm1102, %v1010, %v1101
      %vm1104 = vcmask 1047559
      %v1105 = vsel %vm1104, %v1019, %v1103
      %v1106 = vsel %vm1092, %v1037, %v1028
      %v1107 = vsel %vm1094, %v1046, %v1106
      %v1108 = vsel %vm1096, %v1055, %v1107
      %v1109 = vsel %vm1098, %v1064, %v1108
      %v1110 = vsel %vm1100, %v1073, %v1109
      %v1111 = vsel %vm1102, %v1082, %v1110
      %v1112 = vsel %vm1104, %v1091, %v1111
      %vm1115 = vcmask 130048
      %v1116 = vsel %vm1115, %v1105, -inf
      %1117 = vmax.xlane.f32.xlu0 %v1116
      %v1118 = vpop.xlane.xlu0 %1117
      %v1119 = vsel %vm1115, %v1112, -inf
      %1120 = vmax.xlane.f32.xlu0 %v1119
      %v1121 = vpop.xlane.xlu0 %1120
      %v1124 = vlaneseq
      %v1125 = vshrl.u32 %v1124, 7
      %v1126 = vsub.s32 0, %v1125
      %v1127 = vrot.slane %v1118, %v1126
      %v1128 = vlaneseq
      %v1129 = vshrl.u32 %v1128, 7
      %v1130 = vsub.s32 1, %v1129
      %v1131 = vrot.slane %v1118, %v1130
      %v1132 = vlaneseq
      %v1133 = vshrl.u32 %v1132, 7
      %v1134 = vsub.s32 2, %v1133
      %v1135 = vrot.slane %v1118, %v1134
      %v1136 = vlaneseq
      %v1137 = vshrl.u32 %v1136, 7
      %v1138 = vsub.s32 3, %v1137
      %v1139 = vrot.slane %v1118, %v1138
      %v1140 = vlaneseq
      %v1141 = vshrl.u32 %v1140, 7
      %v1142 = vsub.s32 4, %v1141
      %v1143 = vrot.slane %v1118, %v1142
      %v1144 = vlaneseq
      %v1145 = vshrl.u32 %v1144, 7
      %v1146 = vsub.s32 5, %v1145
      %v1147 = vrot.slane %v1118, %v1146
      %v1148 = vlaneseq
      %v1149 = vshrl.u32 %v1148, 7
      %v1150 = vsub.s32 6, %v1149
      %v1151 = vrot.slane %v1118, %v1150
      %v1152 = vlaneseq
      %v1153 = vshrl.u32 %v1152, 7
      %v1154 = vsub.s32 7, %v1153
      %v1155 = vrot.slane %v1118, %v1154
      %v1156 = vlaneseq
      %v1157 = vshrl.u32 %v1156, 7
      %v1158 = vsub.s32 0, %v1157
      %v1159 = vrot.slane %v1121, %v1158
      %v1160 = vlaneseq
      %v1161 = vshrl.u32 %v1160, 7
      %v1162 = vsub.s32 1, %v1161
      %v1163 = vrot.slane %v1121, %v1162
      %v1164 = vlaneseq
      %v1165 = vshrl.u32 %v1164, 7
      %v1166 = vsub.s32 2, %v1165
      %v1167 = vrot.slane %v1121, %v1166
      %v1168 = vlaneseq
      %v1169 = vshrl.u32 %v1168, 7
      %v1170 = vsub.s32 3, %v1169
      %v1171 = vrot.slane %v1121, %v1170
      %v1172 = vlaneseq
      %v1173 = vshrl.u32 %v1172, 7
      %v1174 = vsub.s32 4, %v1173
      %v1175 = vrot.slane %v1121, %v1174
      %v1176 = vlaneseq
      %v1177 = vshrl.u32 %v1176, 7
      %v1178 = vsub.s32 5, %v1177
      %v1179 = vrot.slane %v1121, %v1178
      %v1180 = vlaneseq
      %v1181 = vshrl.u32 %v1180, 7
      %v1182 = vsub.s32 6, %v1181
      %v1183 = vrot.slane %v1121, %v1182
      %v1184 = vlaneseq
      %v1185 = vshrl.u32 %v1184, 7
      %v1186 = vsub.s32 7, %v1185
      %v1187 = vrot.slane %v1121, %v1186
      %v1204 = vsub.f32 %v880, %v1127
      %v1205 = vsub.f32 %v881, %v1127
      %v1206 = vsub.f32 %v882, %v1131
      %v1207 = vsub.f32 %v883, %v1131
      %v1208 = vsub.f32 %v884, %v1135
      %v1209 = vsub.f32 %v885, %v1135
      %v1210 = vsub.f32 %v886, %v1139
      %v1211 = vsub.f32 %v887, %v1139
      %v1212 = vsub.f32 %v888, %v1143
      %v1213 = vsub.f32 %v889, %v1143
      %v1214 = vsub.f32 %v890, %v1147
      %v1215 = vsub.f32 %v891, %v1147
      %v1216 = vsub.f32 %v892, %v1151
      %v1217 = vsub.f32 %v893, %v1151
      %v1218 = vsub.f32 %v894, %v1155
      %v1219 = vsub.f32 %v895, %v1155
      %v1220 = vsub.f32 %v896, %v1159
      %v1221 = vsub.f32 %v897, %v1159
      %v1222 = vsub.f32 %v898, %v1163
      %v1223 = vsub.f32 %v899, %v1163
      %v1224 = vsub.f32 %v900, %v1167
      %v1225 = vsub.f32 %v901, %v1167
      %v1226 = vsub.f32 %v902, %v1171
      %v1227 = vsub.f32 %v903, %v1171
      %v1228 = vsub.f32 %v904, %v1175
      %v1229 = vsub.f32 %v905, %v1175
      %v1230 = vsub.f32 %v906, %v1179
      %v1231 = vsub.f32 %v907, %v1179
      %v1232 = vsub.f32 %v908, %v1183
      %v1233 = vsub.f32 %v909, %v1183
      %v1234 = vsub.f32 %v910, %v1187
      %v1235 = vsub.f32 %v911, %v1187
      %v1236 = vmul.f32 %v1204, 1.442695
      %v1237 = vpow.pop %v1236
      %v1238 = vmul.f32 %v1205, 1.442695
      %v1239 = vpow.pop %v1238
      %v1240 = vmul.f32 %v1206, 1.442695
      %v1241 = vpow.pop %v1240
      %v1242 = vmul.f32 %v1207, 1.442695
      %v1243 = vpow.pop %v1242
      %v1244 = vmul.f32 %v1208, 1.442695
      %v1245 = vpow.pop %v1244
      %v1246 = vmul.f32 %v1209, 1.442695
      %v1247 = vpow.pop %v1246
      %v1248 = vmul.f32 %v1210, 1.442695
      %v1249 = vpow.pop %v1248
      %v1250 = vmul.f32 %v1211, 1.442695
      %v1251 = vpow.pop %v1250
      %v1252 = vmul.f32 %v1212, 1.442695
      %v1253 = vpow.pop %v1252
      %v1254 = vmul.f32 %v1213, 1.442695
      %v1255 = vpow.pop %v1254
      %v1256 = vmul.f32 %v1214, 1.442695
      %v1257 = vpow.pop %v1256
      %v1258 = vmul.f32 %v1215, 1.442695
      %v1259 = vpow.pop %v1258
      %v1260 = vmul.f32 %v1216, 1.442695
      %v1261 = vpow.pop %v1260
      %v1262 = vmul.f32 %v1217, 1.442695
      %v1263 = vpow.pop %v1262
      %v1264 = vmul.f32 %v1218, 1.442695
      %v1265 = vpow.pop %v1264
      %v1266 = vmul.f32 %v1219, 1.442695
      %v1267 = vpow.pop %v1266
      %v1268 = vmul.f32 %v1220, 1.442695
      %v1269 = vpow.pop %v1268
      %v1270 = vmul.f32 %v1221, 1.442695
      %v1271 = vpow.pop %v1270
      %v1272 = vmul.f32 %v1222, 1.442695
      %v1273 = vpow.pop %v1272
      %v1274 = vmul.f32 %v1223, 1.442695
      %v1275 = vpow.pop %v1274
      %v1276 = vmul.f32 %v1224, 1.442695
      %v1277 = vpow.pop %v1276
      %v1278 = vmul.f32 %v1225, 1.442695
      %v1279 = vpow.pop %v1278
      %v1280 = vmul.f32 %v1226, 1.442695
      %v1281 = vpow.pop %v1280
      %v1282 = vmul.f32 %v1227, 1.442695
      %v1283 = vpow.pop %v1282
      %v1284 = vmul.f32 %v1228, 1.442695
      %v1285 = vpow.pop %v1284
      %v1286 = vmul.f32 %v1229, 1.442695
      %v1287 = vpow.pop %v1286
      %v1288 = vmul.f32 %v1230, 1.442695
      %v1289 = vpow.pop %v1288
      %v1290 = vmul.f32 %v1231, 1.442695
      %v1291 = vpow.pop %v1290
      %v1292 = vmul.f32 %v1232, 1.442695
      %v1293 = vpow.pop %v1292
      %v1294 = vmul.f32 %v1233, 1.442695
      %v1295 = vpow.pop %v1294
      %v1296 = vmul.f32 %v1234, 1.442695
      %v1297 = vpow.pop %v1296
      %v1298 = vmul.f32 %v1235, 1.442695
      %v1299 = vpow.pop %v1298
      %1332 = vset.pattern.permute.xlu0 0
      %1333 = vperm.xlu0 %1332, %v1237
      %v1334 = vpop.permute.xlu0 %1333
      %1335 = vset.pattern.permute.xlu0 0
      %1336 = vperm.xlu0 %1335, %v1239
      %v1337 = vpop.permute.xlu0 %1336
      %1338 = vset.pattern.permute.xlu0 0
      %1339 = vperm.xlu0 %1338, %v1241
      %v1340 = vpop.permute.xlu0 %1339
      %1341 = vset.pattern.permute.xlu0 0
      %1342 = vperm.xlu0 %1341, %v1243
      %v1343 = vpop.permute.xlu0 %1342
      %1344 = vset.pattern.permute.xlu0 0
      %1345 = vperm.xlu0 %1344, %v1245
      %v1346 = vpop.permute.xlu0 %1345
      %1347 = vset.pattern.permute.xlu0 0
      %1348 = vperm.xlu0 %1347, %v1247
      %v1349 = vpop.permute.xlu0 %1348
      %1350 = vset.pattern.permute.xlu0 0
      %1351 = vperm.xlu0 %1350, %v1249
      %v1352 = vpop.permute.xlu0 %1351
      %1353 = vset.pattern.permute.xlu0 0
      %1354 = vperm.xlu0 %1353, %v1251
      %v1355 = vpop.permute.xlu0 %1354
      %1356 = vset.pattern.permute.xlu0 0
      %1357 = vperm.xlu0 %1356, %v1253
      %v1358 = vpop.permute.xlu0 %1357
      %1359 = vset.pattern.permute.xlu0 0
      %1360 = vperm.xlu0 %1359, %v1255
      %v1361 = vpop.permute.xlu0 %1360
      %1362 = vset.pattern.permute.xlu0 0
      %1363 = vperm.xlu0 %1362, %v1257
      %v1364 = vpop.permute.xlu0 %1363
      %1365 = vset.pattern.permute.xlu0 0
      %1366 = vperm.xlu0 %1365, %v1259
      %v1367 = vpop.permute.xlu0 %1366
      %1368 = vset.pattern.permute.xlu0 0
      %1369 = vperm.xlu0 %1368, %v1261
      %v1370 = vpop.permute.xlu0 %1369
      %1371 = vset.pattern.permute.xlu0 0
      %1372 = vperm.xlu0 %1371, %v1263
      %v1373 = vpop.permute.xlu0 %1372
      %1374 = vset.pattern.permute.xlu0 0
      %1375 = vperm.xlu0 %1374, %v1265
      %v1376 = vpop.permute.xlu0 %1375
      %1377 = vset.pattern.permute.xlu0 0
      %1378 = vperm.xlu0 %1377, %v1267
      %v1379 = vpop.permute.xlu0 %1378
      %1380 = vset.pattern.permute.xlu0 0
      %1381 = vperm.xlu0 %1380, %v1269
      %v1382 = vpop.permute.xlu0 %1381
      %1383 = vset.pattern.permute.xlu0 0
      %1384 = vperm.xlu0 %1383, %v1271
      %v1385 = vpop.permute.xlu0 %1384
      %1386 = vset.pattern.permute.xlu0 0
      %1387 = vperm.xlu0 %1386, %v1273
      %v1388 = vpop.permute.xlu0 %1387
      %1389 = vset.pattern.permute.xlu0 0
      %1390 = vperm.xlu0 %1389, %v1275
      %v1391 = vpop.permute.xlu0 %1390
      %1392 = vset.pattern.permute.xlu0 0
      %1393 = vperm.xlu0 %1392, %v1277
      %v1394 = vpop.permute.xlu0 %1393
      %1395 = vset.pattern.permute.xlu0 0
      %1396 = vperm.xlu0 %1395, %v1279
      %v1397 = vpop.permute.xlu0 %1396
      %1398 = vset.pattern.permute.xlu0 0
      %1399 = vperm.xlu0 %1398, %v1281
      %v1400 = vpop.permute.xlu0 %1399
      %1401 = vset.pattern.permute.xlu0 0
      %1402 = vperm.xlu0 %1401, %v1283
      %v1403 = vpop.permute.xlu0 %1402
      %1404 = vset.pattern.permute.xlu0 0
      %1405 = vperm.xlu0 %1404, %v1285
      %v1406 = vpop.permute.xlu0 %1405
      %1407 = vset.pattern.permute.xlu0 0
      %1408 = vperm.xlu0 %1407, %v1287
      %v1409 = vpop.permute.xlu0 %1408
      %1410 = vset.pattern.permute.xlu0 0
      %1411 = vperm.xlu0 %1410, %v1289
      %v1412 = vpop.permute.xlu0 %1411
      %1413 = vset.pattern.permute.xlu0 0
      %1414 = vperm.xlu0 %1413, %v1291
      %v1415 = vpop.permute.xlu0 %1414
      %1416 = vset.pattern.permute.xlu0 0
      %1417 = vperm.xlu0 %1416, %v1293
      %v1418 = vpop.permute.xlu0 %1417
      %1419 = vset.pattern.permute.xlu0 0
      %1420 = vperm.xlu0 %1419, %v1295
      %v1421 = vpop.permute.xlu0 %1420
      %1422 = vset.pattern.permute.xlu0 0
      %1423 = vperm.xlu0 %1422, %v1297
      %v1424 = vpop.permute.xlu0 %1423
      %1425 = vset.pattern.permute.xlu0 0
      %1426 = vperm.xlu0 %1425, %v1299
      %v1427 = vpop.permute.xlu0 %1426
      %v1428 = vlaneseq
      %v1429 = vshrl.u32 %v1428, 7
      %v1430 = vsub.s32 %v945, %v1429
      %v1431 = vrot.slane %v1334, %v1430
      %v1432 = vlaneseq
      %v1433 = vshrl.u32 %v1432, 7
      %v1434 = vsub.s32 %v950, %v1433
      %v1435 = vrot.slane %v1337, %v1434
      %v1436 = vsel %vm955, %v1435, %v1431
      %v1437 = vlaneseq
      %v1438 = vshrl.u32 %v1437, 7
      %v1439 = vsub.s32 %v945, %v1438
      %v1440 = vrot.slane %v1340, %v1439
      %v1441 = vlaneseq
      %v1442 = vshrl.u32 %v1441, 7
      %v1443 = vsub.s32 %v950, %v1442
      %v1444 = vrot.slane %v1343, %v1443
      %v1445 = vsel %vm955, %v1444, %v1440
      %v1446 = vlaneseq
      %v1447 = vshrl.u32 %v1446, 7
      %v1448 = vsub.s32 %v945, %v1447
      %v1449 = vrot.slane %v1346, %v1448
      %v1450 = vlaneseq
      %v1451 = vshrl.u32 %v1450, 7
      %v1452 = vsub.s32 %v950, %v1451
      %v1453 = vrot.slane %v1349, %v1452
      %v1454 = vsel %vm955, %v1453, %v1449
      %v1455 = vlaneseq
      %v1456 = vshrl.u32 %v1455, 7
      %v1457 = vsub.s32 %v945, %v1456
      %v1458 = vrot.slane %v1352, %v1457
      %v1459 = vlaneseq
      %v1460 = vshrl.u32 %v1459, 7
      %v1461 = vsub.s32 %v950, %v1460
      %v1462 = vrot.slane %v1355, %v1461
      %v1463 = vsel %vm955, %v1462, %v1458
      %v1464 = vlaneseq
      %v1465 = vshrl.u32 %v1464, 7
      %v1466 = vsub.s32 %v945, %v1465
      %v1467 = vrot.slane %v1358, %v1466
      %v1468 = vlaneseq
      %v1469 = vshrl.u32 %v1468, 7
      %v1470 = vsub.s32 %v950, %v1469
      %v1471 = vrot.slane %v1361, %v1470
      %v1472 = vsel %vm955, %v1471, %v1467
      %v1473 = vlaneseq
      %v1474 = vshrl.u32 %v1473, 7
      %v1475 = vsub.s32 %v945, %v1474
      %v1476 = vrot.slane %v1364, %v1475
      %v1477 = vlaneseq
      %v1478 = vshrl.u32 %v1477, 7
      %v1479 = vsub.s32 %v950, %v1478
      %v1480 = vrot.slane %v1367, %v1479
      %v1481 = vsel %vm955, %v1480, %v1476
      %v1482 = vlaneseq
      %v1483 = vshrl.u32 %v1482, 7
      %v1484 = vsub.s32 %v945, %v1483
      %v1485 = vrot.slane %v1370, %v1484
      %v1486 = vlaneseq
      %v1487 = vshrl.u32 %v1486, 7
      %v1488 = vsub.s32 %v950, %v1487
      %v1489 = vrot.slane %v1373, %v1488
      %v1490 = vsel %vm955, %v1489, %v1485
      %v1491 = vlaneseq
      %v1492 = vshrl.u32 %v1491, 7
      %v1493 = vsub.s32 %v945, %v1492
      %v1494 = vrot.slane %v1376, %v1493
      %v1495 = vlaneseq
      %v1496 = vshrl.u32 %v1495, 7
      %v1497 = vsub.s32 %v950, %v1496
      %v1498 = vrot.slane %v1379, %v1497
      %v1499 = vsel %vm955, %v1498, %v1494
      %v1500 = vlaneseq
      %v1501 = vshrl.u32 %v1500, 7
      %v1502 = vsub.s32 %v945, %v1501
      %v1503 = vrot.slane %v1382, %v1502
      %v1504 = vlaneseq
      %v1505 = vshrl.u32 %v1504, 7
      %v1506 = vsub.s32 %v950, %v1505
      %v1507 = vrot.slane %v1385, %v1506
      %v1508 = vsel %vm955, %v1507, %v1503
      %v1509 = vlaneseq
      %v1510 = vshrl.u32 %v1509, 7
      %v1511 = vsub.s32 %v945, %v1510
      %v1512 = vrot.slane %v1388, %v1511
      %v1513 = vlaneseq
      %v1514 = vshrl.u32 %v1513, 7
      %v1515 = vsub.s32 %v950, %v1514
      %v1516 = vrot.slane %v1391, %v1515
      %v1517 = vsel %vm955, %v1516, %v1512
      %v1518 = vlaneseq
      %v1519 = vshrl.u32 %v1518, 7
      %v1520 = vsub.s32 %v945, %v1519
      %v1521 = vrot.slane %v1394, %v1520
      %v1522 = vlaneseq
      %v1523 = vshrl.u32 %v1522, 7
      %v1524 = vsub.s32 %v950, %v1523
      %v1525 = vrot.slane %v1397, %v1524
      %v1526 = vsel %vm955, %v1525, %v1521
      %v1527 = vlaneseq
      %v1528 = vshrl.u32 %v1527, 7
      %v1529 = vsub.s32 %v945, %v1528
      %v1530 = vrot.slane %v1400, %v1529
      %v1531 = vlaneseq
      %v1532 = vshrl.u32 %v1531, 7
      %v1533 = vsub.s32 %v950, %v1532
      %v1534 = vrot.slane %v1403, %v1533
      %v1535 = vsel %vm955, %v1534, %v1530
      %v1536 = vlaneseq
      %v1537 = vshrl.u32 %v1536, 7
      %v1538 = vsub.s32 %v945, %v1537
      %v1539 = vrot.slane %v1406, %v1538
      %v1540 = vlaneseq
      %v1541 = vshrl.u32 %v1540, 7
      %v1542 = vsub.s32 %v950, %v1541
      %v1543 = vrot.slane %v1409, %v1542
      %v1544 = vsel %vm955, %v1543, %v1539
      %v1545 = vlaneseq
      %v1546 = vshrl.u32 %v1545, 7
      %v1547 = vsub.s32 %v945, %v1546
      %v1548 = vrot.slane %v1412, %v1547
      %v1549 = vlaneseq
      %v1550 = vshrl.u32 %v1549, 7
      %v1551 = vsub.s32 %v950, %v1550
      %v1552 = vrot.slane %v1415, %v1551
      %v1553 = vsel %vm955, %v1552, %v1548
      %v1554 = vlaneseq
      %v1555 = vshrl.u32 %v1554, 7
      %v1556 = vsub.s32 %v945, %v1555
      %v1557 = vrot.slane %v1418, %v1556
      %v1558 = vlaneseq
      %v1559 = vshrl.u32 %v1558, 7
      %v1560 = vsub.s32 %v950, %v1559
      %v1561 = vrot.slane %v1421, %v1560
      %v1562 = vsel %vm955, %v1561, %v1557
      %v1563 = vlaneseq
      %v1564 = vshrl.u32 %v1563, 7
      %v1565 = vsub.s32 %v945, %v1564
      %v1566 = vrot.slane %v1424, %v1565
      %v1567 = vlaneseq
      %v1568 = vshrl.u32 %v1567, 7
      %v1569 = vsub.s32 %v950, %v1568
      %v1570 = vrot.slane %v1427, %v1569
      %v1571 = vsel %vm955, %v1570, %v1566
      %v1572 = vsel %vm1092, %v1445, %v1436
      %v1573 = vsel %vm1094, %v1454, %v1572
      %v1574 = vsel %vm1096, %v1463, %v1573
      %v1575 = vsel %vm1098, %v1472, %v1574
      %v1576 = vsel %vm1100, %v1481, %v1575
      %v1577 = vsel %vm1102, %v1490, %v1576
      %v1578 = vsel %vm1104, %v1499, %v1577
      %v1579 = vsel %vm1092, %v1517, %v1508
      %v1580 = vsel %vm1094, %v1526, %v1579
      %v1581 = vsel %vm1096, %v1535, %v1580
      %v1582 = vsel %vm1098, %v1544, %v1581
      %v1583 = vsel %vm1100, %v1553, %v1582
      %v1584 = vsel %vm1102, %v1562, %v1583
      %v1585 = vsel %vm1104, %v1571, %v1584
      %v1588 = vsel %vm1115, %v1578, 0.0
      %1589 = vadd.xlane.f32.xlu0 %v1588
      %v1590 = vpop.xlane.xlu0 %1589
      %v1591 = vsel %vm1115, %v1585, 0.0
      %1592 = vadd.xlane.f32.xlu0 %v1591
      %v1593 = vpop.xlane.xlu0 %1592
      %v1596 = vlaneseq
      %v1597 = vshrl.u32 %v1596, 7
      %v1598 = vsub.s32 0, %v1597
      %v1599 = vrot.slane %v1590, %v1598
      %v1600 = vlaneseq
      %v1601 = vshrl.u32 %v1600, 7
      %v1602 = vsub.s32 1, %v1601
      %v1603 = vrot.slane %v1590, %v1602
      %v1604 = vlaneseq
      %v1605 = vshrl.u32 %v1604, 7
      %v1606 = vsub.s32 2, %v1605
      %v1607 = vrot.slane %v1590, %v1606
      %v1608 = vlaneseq
      %v1609 = vshrl.u32 %v1608, 7
      %v1610 = vsub.s32 3, %v1609
      %v1611 = vrot.slane %v1590, %v1610
      %v1612 = vlaneseq
      %v1613 = vshrl.u32 %v1612, 7
      %v1614 = vsub.s32 4, %v1613
      %v1615 = vrot.slane %v1590, %v1614
      %v1616 = vlaneseq
      %v1617 = vshrl.u32 %v1616, 7
      %v1618 = vsub.s32 5, %v1617
      %v1619 = vrot.slane %v1590, %v1618
      %v1620 = vlaneseq
      %v1621 = vshrl.u32 %v1620, 7
      %v1622 = vsub.s32 6, %v1621
      %v1623 = vrot.slane %v1590, %v1622
      %v1624 = vlaneseq
      %v1625 = vshrl.u32 %v1624, 7
      %v1626 = vsub.s32 7, %v1625
      %v1627 = vrot.slane %v1590, %v1626
      %v1628 = vlaneseq
      %v1629 = vshrl.u32 %v1628, 7
      %v1630 = vsub.s32 0, %v1629
      %v1631 = vrot.slane %v1593, %v1630
      %v1632 = vlaneseq
      %v1633 = vshrl.u32 %v1632, 7
      %v1634 = vsub.s32 1, %v1633
      %v1635 = vrot.slane %v1593, %v1634
      %v1636 = vlaneseq
      %v1637 = vshrl.u32 %v1636, 7
      %v1638 = vsub.s32 2, %v1637
      %v1639 = vrot.slane %v1593, %v1638
      %v1640 = vlaneseq
      %v1641 = vshrl.u32 %v1640, 7
      %v1642 = vsub.s32 3, %v1641
      %v1643 = vrot.slane %v1593, %v1642
      %v1644 = vlaneseq
      %v1645 = vshrl.u32 %v1644, 7
      %v1646 = vsub.s32 4, %v1645
      %v1647 = vrot.slane %v1593, %v1646
      %v1648 = vlaneseq
      %v1649 = vshrl.u32 %v1648, 7
      %v1650 = vsub.s32 5, %v1649
      %v1651 = vrot.slane %v1593, %v1650
      %v1652 = vlaneseq
      %v1653 = vshrl.u32 %v1652, 7
      %v1654 = vsub.s32 6, %v1653
      %v1655 = vrot.slane %v1593, %v1654
      %v1656 = vlaneseq
      %v1657 = vshrl.u32 %v1656, 7
      %v1658 = vsub.s32 7, %v1657
      %v1659 = vrot.slane %v1593, %v1658
      %v1676 = vrcp.pop %v1599
      %v1677 = vmul.f32 %v1237, %v1676
      %v1678 = vmul.f32 %v1239, %v1676
      %v1679 = vrcp.pop %v1603
      %v1680 = vmul.f32 %v1241, %v1679
      %v1681 = vmul.f32 %v1243, %v1679
      %v1682 = vrcp.pop %v1607
      %v1683 = vmul.f32 %v1245, %v1682
      %v1684 = vmul.f32 %v1247, %v1682
      %v1685 = vrcp.pop %v1611
      %v1686 = vmul.f32 %v1249, %v1685
      %v1687 = vmul.f32 %v1251, %v1685
      %v1688 = vrcp.pop %v1615
      %v1689 = vmul.f32 %v1253, %v1688
      %v1690 = vmul.f32 %v1255, %v1688
      %v1691 = vrcp.pop %v1619
      %v1692 = vmul.f32 %v1257, %v1691
      %v1693 = vmul.f32 %v1259, %v1691
      %v1694 = vrcp.pop %v1623
      %v1695 = vmul.f32 %v1261, %v1694
      %v1696 = vmul.f32 %v1263, %v1694
      %v1697 = vrcp.pop %v1627
      %v1698 = vmul.f32 %v1265, %v1697
      %v1699 = vmul.f32 %v1267, %v1697
      %v1700 = vrcp.pop %v1631
      %v1701 = vmul.f32 %v1269, %v1700
      %v1702 = vmul.f32 %v1271, %v1700
      %v1703 = vrcp.pop %v1635
      %v1704 = vmul.f32 %v1273, %v1703
      %v1705 = vmul.f32 %v1275, %v1703
      %v1706 = vrcp.pop %v1639
      %v1707 = vmul.f32 %v1277, %v1706
      %v1708 = vmul.f32 %v1279, %v1706
      %v1709 = vrcp.pop %v1643
      %v1710 = vmul.f32 %v1281, %v1709
      %v1711 = vmul.f32 %v1283, %v1709
      %v1712 = vrcp.pop %v1647
      %v1713 = vmul.f32 %v1285, %v1712
      %v1714 = vmul.f32 %v1287, %v1712
      %v1715 = vrcp.pop %v1651
      %v1716 = vmul.f32 %v1289, %v1715
      %v1717 = vmul.f32 %v1291, %v1715
      %v1718 = vrcp.pop %v1655
      %v1719 = vmul.f32 %v1293, %v1718
      %v1720 = vmul.f32 %v1295, %v1718
      %v1721 = vrcp.pop %v1659
      %v1722 = vmul.f32 %v1297, %v1721
      %v1723 = vmul.f32 %v1299, %v1721
      %1725 = vset.pattern.permute.xlu0 0
      %1726 = vperm.xlu0 %1725, %v1677
      %v1727 = vpop.permute.xlu0 %1726
      %1730 = vset.pattern.permute.xlu0 0
      %1731 = vperm.xlu0 %1730, %v1678
      %v1732 = vpop.permute.xlu0 %1731
      %1735 = vset.pattern.permute.xlu0 0
      %1736 = vperm.xlu0 %1735, %v1680
      %v1737 = vpop.permute.xlu0 %1736
      %1740 = vset.pattern.permute.xlu0 0
      %1741 = vperm.xlu0 %1740, %v1681
      %v1742 = vpop.permute.xlu0 %1741
      %1745 = vset.pattern.permute.xlu0 0
      %1746 = vperm.xlu0 %1745, %v1683
      %v1747 = vpop.permute.xlu0 %1746
      %1750 = vset.pattern.permute.xlu0 0
      %1751 = vperm.xlu0 %1750, %v1684
      %v1752 = vpop.permute.xlu0 %1751
      %1755 = vset.pattern.permute.xlu0 0
      %1756 = vperm.xlu0 %1755, %v1686
      %v1757 = vpop.permute.xlu0 %1756
      %1760 = vset.pattern.permute.xlu0 0
      %1761 = vperm.xlu0 %1760, %v1687
      %v1762 = vpop.permute.xlu0 %1761
      %1765 = vset.pattern.permute.xlu0 0
      %1766 = vperm.xlu0 %1765, %v1689
      %v1767 = vpop.permute.xlu0 %1766
      %1770 = vset.pattern.permute.xlu0 0
      %1771 = vperm.xlu0 %1770, %v1690
      %v1772 = vpop.permute.xlu0 %1771
      %1775 = vset.pattern.permute.xlu0 0
      %1776 = vperm.xlu0 %1775, %v1692
      %v1777 = vpop.permute.xlu0 %1776
      %1780 = vset.pattern.permute.xlu0 0
      %1781 = vperm.xlu0 %1780, %v1693
      %v1782 = vpop.permute.xlu0 %1781
      %1785 = vset.pattern.permute.xlu0 0
      %1786 = vperm.xlu0 %1785, %v1695
      %v1787 = vpop.permute.xlu0 %1786
      %1790 = vset.pattern.permute.xlu0 0
      %1791 = vperm.xlu0 %1790, %v1696
      %v1792 = vpop.permute.xlu0 %1791
      %1795 = vset.pattern.permute.xlu0 0
      %1796 = vperm.xlu0 %1795, %v1698
      %v1797 = vpop.permute.xlu0 %1796
      %1800 = vset.pattern.permute.xlu0 0
      %1801 = vperm.xlu0 %1800, %v1699
      %v1802 = vpop.permute.xlu0 %1801
      %1805 = vset.pattern.permute.xlu0 0
      %1806 = vperm.xlu0 %1805, %v1701
      %v1807 = vpop.permute.xlu0 %1806
      %1810 = vset.pattern.permute.xlu0 0
      %1811 = vperm.xlu0 %1810, %v1702
      %v1812 = vpop.permute.xlu0 %1811
      %1815 = vset.pattern.permute.xlu0 0
      %1816 = vperm.xlu0 %1815, %v1704
      %v1817 = vpop.permute.xlu0 %1816
      %1820 = vset.pattern.permute.xlu0 0
      %1821 = vperm.xlu0 %1820, %v1705
      %v1822 = vpop.permute.xlu0 %1821
      %1825 = vset.pattern.permute.xlu0 0
      %1826 = vperm.xlu0 %1825, %v1707
      %v1827 = vpop.permute.xlu0 %1826
      %1830 = vset.pattern.permute.xlu0 0
      %1831 = vperm.xlu0 %1830, %v1708
      %v1832 = vpop.permute.xlu0 %1831
      %1835 = vset.pattern.permute.xlu0 0
      %1836 = vperm.xlu0 %1835, %v1710
      %v1837 = vpop.permute.xlu0 %1836
      %1840 = vset.pattern.permute.xlu0 0
      %1841 = vperm.xlu0 %1840, %v1711
      %v1842 = vpop.permute.xlu0 %1841
      %1845 = vset.pattern.permute.xlu0 0
      %1846 = vperm.xlu0 %1845, %v1713
      %v1847 = vpop.permute.xlu0 %1846
      %1850 = vset.pattern.permute.xlu0 0
      %1851 = vperm.xlu0 %1850, %v1714
      %v1852 = vpop.permute.xlu0 %1851
      %1855 = vset.pattern.permute.xlu0 0
      %1856 = vperm.xlu0 %1855, %v1716
      %v1857 = vpop.permute.xlu0 %1856
      %1860 = vset.pattern.permute.xlu0 0
      %1861 = vperm.xlu0 %1860, %v1717
      %v1862 = vpop.permute.xlu0 %1861
      %1865 = vset.pattern.permute.xlu0 0
      %1866 = vperm.xlu0 %1865, %v1719
      %v1867 = vpop.permute.xlu0 %1866
      %1870 = vset.pattern.permute.xlu0 0
      %1871 = vperm.xlu0 %1870, %v1720
      %v1872 = vpop.permute.xlu0 %1871
      %1875 = vset.pattern.permute.xlu0 0
      %1876 = vperm.xlu0 %1875, %v1722
      %v1877 = vpop.permute.xlu0 %1876
      %1880 = vset.pattern.permute.xlu0 0
      %1881 = vperm.xlu0 %1880, %v1723
      %v1882 = vpop.permute.xlu0 %1881
      %v1884 = vmul.f32 %v115, %v1727
      %v1885 = vmul.f32 %v116, %v1732
      %v1886 = vmul.f32 %v117, %v1737
      %v1887 = vmul.f32 %v118, %v1742
      %v1888 = vmul.f32 %v119, %v1747
      %v1889 = vmul.f32 %v120, %v1752
      %v1890 = vmul.f32 %v121, %v1757
      %v1891 = vmul.f32 %v122, %v1762
      %v1892 = vmul.f32 %v123, %v1767
      %v1893 = vmul.f32 %v124, %v1772
      %v1894 = vmul.f32 %v125, %v1777
      %v1895 = vmul.f32 %v126, %v1782
      %v1896 = vmul.f32 %v127, %v1787
      %v1897 = vmul.f32 %v128, %v1792
      %v1898 = vmul.f32 %v129, %v1797
      %v1899 = vmul.f32 %v130, %v1802
      %v1900 = vmul.f32 %v131, %v1807
      %v1901 = vmul.f32 %v132, %v1812
      %v1902 = vmul.f32 %v133, %v1817
      %v1903 = vmul.f32 %v134, %v1822
      %v1904 = vmul.f32 %v135, %v1827
      %v1905 = vmul.f32 %v136, %v1832
      %v1906 = vmul.f32 %v137, %v1837
      %v1907 = vmul.f32 %v138, %v1842
      %v1908 = vmul.f32 %v139, %v1847
      %v1909 = vmul.f32 %v140, %v1852
      %v1910 = vmul.f32 %v141, %v1857
      %v1911 = vmul.f32 %v142, %v1862
      %v1912 = vmul.f32 %v143, %v1867
      %v1913 = vmul.f32 %v144, %v1872
      %v1914 = vmul.f32 %v145, %v1877
      %v1915 = vmul.f32 %v146, %v1882
      %v1916 = vadd.f32 %v1884, %v1885
      %v1917 = vrot.slane %v1916, 4
      %v1918 = vadd.f32 %v1916, %v1917
      %v1919 = vrot.slane %v1918, 2
      %v1920 = vadd.f32 %v1918, %v1919
      %v1921 = vrot.slane %v1920, 1
      %v1922 = vadd.f32 %v1920, %v1921
      %v1923 = vadd.f32 %v1886, %v1887
      %v1924 = vrot.slane %v1923, 4
      %v1925 = vadd.f32 %v1923, %v1924
      %v1926 = vrot.slane %v1925, 2
      %v1927 = vadd.f32 %v1925, %v1926
      %v1928 = vrot.slane %v1927, 1
      %v1929 = vadd.f32 %v1927, %v1928
      %v1930 = vadd.f32 %v1888, %v1889
      %v1931 = vrot.slane %v1930, 4
      %v1932 = vadd.f32 %v1930, %v1931
      %v1933 = vrot.slane %v1932, 2
      %v1934 = vadd.f32 %v1932, %v1933
      %v1935 = vrot.slane %v1934, 1
      %v1936 = vadd.f32 %v1934, %v1935
      %v1937 = vadd.f32 %v1890, %v1891
      %v1938 = vrot.slane %v1937, 4
      %v1939 = vadd.f32 %v1937, %v1938
      %v1940 = vrot.slane %v1939, 2
      %v1941 = vadd.f32 %v1939, %v1940
      %v1942 = vrot.slane %v1941, 1
      %v1943 = vadd.f32 %v1941, %v1942
      %v1944 = vadd.f32 %v1892, %v1893
      %v1945 = vrot.slane %v1944, 4
      %v1946 = vadd.f32 %v1944, %v1945
      %v1947 = vrot.slane %v1946, 2
      %v1948 = vadd.f32 %v1946, %v1947
      %v1949 = vrot.slane %v1948, 1
      %v1950 = vadd.f32 %v1948, %v1949
      %v1951 = vadd.f32 %v1894, %v1895
      %v1952 = vrot.slane %v1951, 4
      %v1953 = vadd.f32 %v1951, %v1952
      %v1954 = vrot.slane %v1953, 2
      %v1955 = vadd.f32 %v1953, %v1954
      %v1956 = vrot.slane %v1955, 1
      %v1957 = vadd.f32 %v1955, %v1956
      %v1958 = vadd.f32 %v1896, %v1897
      %v1959 = vrot.slane %v1958, 4
      %v1960 = vadd.f32 %v1958, %v1959
      %v1961 = vrot.slane %v1960, 2
      %v1962 = vadd.f32 %v1960, %v1961
      %v1963 = vrot.slane %v1962, 1
      %v1964 = vadd.f32 %v1962, %v1963
      %v1965 = vadd.f32 %v1898, %v1899
      %v1966 = vrot.slane %v1965, 4
      %v1967 = vadd.f32 %v1965, %v1966
      %v1968 = vrot.slane %v1967, 2
      %v1969 = vadd.f32 %v1967, %v1968
      %v1970 = vrot.slane %v1969, 1
      %v1971 = vadd.f32 %v1969, %v1970
      %v1972 = vadd.f32 %v1900, %v1901
      %v1973 = vrot.slane %v1972, 4
      %v1974 = vadd.f32 %v1972, %v1973
      %v1975 = vrot.slane %v1974, 2
      %v1976 = vadd.f32 %v1974, %v1975
      %v1977 = vrot.slane %v1976, 1
      %v1978 = vadd.f32 %v1976, %v1977
      %v1979 = vadd.f32 %v1902, %v1903
      %v1980 = vrot.slane %v1979, 4
      %v1981 = vadd.f32 %v1979, %v1980
      %v1982 = vrot.slane %v1981, 2
      %v1983 = vadd.f32 %v1981, %v1982
      %v1984 = vrot.slane %v1983, 1
      %v1985 = vadd.f32 %v1983, %v1984
      %v1986 = vadd.f32 %v1904, %v1905
      %v1987 = vrot.slane %v1986, 4
      %v1988 = vadd.f32 %v1986, %v1987
      %v1989 = vrot.slane %v1988, 2
      %v1990 = vadd.f32 %v1988, %v1989
      %v1991 = vrot.slane %v1990, 1
      %v1992 = vadd.f32 %v1990, %v1991
      %v1993 = vadd.f32 %v1906, %v1907
      %v1994 = vrot.slane %v1993, 4
      %v1995 = vadd.f32 %v1993, %v1994
      %v1996 = vrot.slane %v1995, 2
      %v1997 = vadd.f32 %v1995, %v1996
      %v1998 = vrot.slane %v1997, 1
      %v1999 = vadd.f32 %v1997, %v1998
      %v2000 = vadd.f32 %v1908, %v1909
      %v2001 = vrot.slane %v2000, 4
      %v2002 = vadd.f32 %v2000, %v2001
      %v2003 = vrot.slane %v2002, 2
      %v2004 = vadd.f32 %v2002, %v2003
      %v2005 = vrot.slane %v2004, 1
      %v2006 = vadd.f32 %v2004, %v2005
      %v2007 = vadd.f32 %v1910, %v1911
      %v2008 = vrot.slane %v2007, 4
      %v2009 = vadd.f32 %v2007, %v2008
      %v2010 = vrot.slane %v2009, 2
      %v2011 = vadd.f32 %v2009, %v2010
      %v2012 = vrot.slane %v2011, 1
      %v2013 = vadd.f32 %v2011, %v2012
      %v2014 = vadd.f32 %v1912, %v1913
      %v2015 = vrot.slane %v2014, 4
      %v2016 = vadd.f32 %v2014, %v2015
      %v2017 = vrot.slane %v2016, 2
      %v2018 = vadd.f32 %v2016, %v2017
      %v2019 = vrot.slane %v2018, 1
      %v2020 = vadd.f32 %v2018, %v2019
      %v2021 = vadd.f32 %v1914, %v1915
      %v2022 = vrot.slane %v2021, 4
      %v2023 = vadd.f32 %v2021, %v2022
      %v2024 = vrot.slane %v2023, 2
      %v2025 = vadd.f32 %v2023, %v2024
      %v2026 = vrot.slane %v2025, 1
      %v2027 = vadd.f32 %v2025, %v2026
      %v2044 = vsel %vm1092, %v1929, %v1922
      %v2045 = vsel %vm1094, %v1936, %v2044
      %v2046 = vsel %vm1096, %v1943, %v2045
      %v2047 = vsel %vm1098, %v1950, %v2046
      %v2048 = vsel %vm1100, %v1957, %v2047
      %v2049 = vsel %vm1102, %v1964, %v2048
      %v2050 = vsel %vm1104, %v1971, %v2049
      %v2051 = vsel %vm1092, %v1985, %v1978
      %v2052 = vsel %vm1094, %v1992, %v2051
      %v2053 = vsel %vm1096, %v1999, %v2052
      %v2054 = vsel %vm1098, %v2006, %v2053
      %v2055 = vsel %vm1100, %v2013, %v2054
      %v2056 = vsel %vm1102, %v2020, %v2055
      %v2057 = vsel %vm1104, %v2027, %v2056
      %v2060 = vld [vmem:[#allocation8] sm:$0xff]
      %v2061 = vld [vmem:[#allocation8 + $0x8] sm:$0xff]
      %v2062 = vld [vmem:[#allocation8 + $0x10] sm:$0xff]
      %v2063 = vld [vmem:[#allocation8 + $0x18] sm:$0xff]
      %v2064 = vld [vmem:[#allocation8 + $0x20] sm:$0xff]
      %v2065 = vld [vmem:[#allocation8 + $0x28] sm:$0xff]
      %v2066 = vld [vmem:[#allocation8 + $0x30] sm:$0xff]
      %v2067 = vld [vmem:[#allocation8 + $0x38] sm:$0xff]
      %v2068 = vld [vmem:[#allocation8 + $0x40] sm:$0xff]
      %v2069 = vld [vmem:[#allocation8 + $0x48] sm:$0xff]
      %v2070 = vld [vmem:[#allocation8 + $0x50] sm:$0xff]
      %v2071 = vld [vmem:[#allocation8 + $0x58] sm:$0xff]
      %v2072 = vld [vmem:[#allocation8 + $0x60] sm:$0xff]
      %v2073 = vld [vmem:[#allocation8 + $0x68] sm:$0xff]
      %v2074 = vld [vmem:[#allocation8 + $0x70] sm:$0xff]
      %v2075 = vld [vmem:[#allocation8 + $0x78] sm:$0xff]
      %v2076 = vld [vmem:[#allocation8 + $0x80] sm:$0xff]
      %v2077 = vld [vmem:[#allocation8 + $0x88] sm:$0xff]
      %v2078 = vld [vmem:[#allocation8 + $0x90] sm:$0xff]
      %v2079 = vld [vmem:[#allocation8 + $0x98] sm:$0xff]
      %v2080 = vld [vmem:[#allocation8 + $0xa0] sm:$0xff]
      %v2081 = vld [vmem:[#allocation8 + $0xa8] sm:$0xff]
      %v2082 = vld [vmem:[#allocation8 + $0xb0] sm:$0xff]
      %v2083 = vld [vmem:[#allocation8 + $0xb8] sm:$0xff]
      %v2084 = vld [vmem:[#allocation8 + $0xc0] sm:$0xff]
      %v2085 = vld [vmem:[#allocation8 + $0xc8] sm:$0xff]
      %v2086 = vld [vmem:[#allocation8 + $0xd0] sm:$0xff]
      %v2087 = vld [vmem:[#allocation8 + $0xd8] sm:$0xff]
      %v2088 = vld [vmem:[#allocation8 + $0xe0] sm:$0xff]
      %v2089 = vld [vmem:[#allocation8 + $0xe8] sm:$0xff]
      %v2090 = vld [vmem:[#allocation8 + $0xf0] sm:$0xff]
      %v2091 = vld [vmem:[#allocation8 + $0xf8] sm:$0xff]
      %v2092 = vld [vmem:[#allocation8 + $0x100] sm:$0xff]
      %v2093 = vld [vmem:[#allocation8 + $0x108] sm:$0xff]
      %v2094 = vld [vmem:[#allocation8 + $0x110] sm:$0xff]
      %v2095 = vld [vmem:[#allocation8 + $0x118] sm:$0xff]
      %v2096 = vld [vmem:[#allocation8 + $0x120] sm:$0xff]
      %v2097 = vld [vmem:[#allocation8 + $0x128] sm:$0xff]
      %v2098 = vld [vmem:[#allocation8 + $0x130] sm:$0xff]
      %v2099 = vld [vmem:[#allocation8 + $0x138] sm:$0xff]
      %v2100 = vld [vmem:[#allocation8 + $0x140] sm:$0xff]
      %v2101 = vld [vmem:[#allocation8 + $0x148] sm:$0xff]
      %v2102 = vld [vmem:[#allocation8 + $0x150] sm:$0xff]
      %v2103 = vld [vmem:[#allocation8 + $0x158] sm:$0xff]
      %v2104 = vld [vmem:[#allocation8 + $0x160] sm:$0xff]
      %v2105 = vld [vmem:[#allocation8 + $0x168] sm:$0xff]
      %v2106 = vld [vmem:[#allocation8 + $0x170] sm:$0xff]
      %v2107 = vld [vmem:[#allocation8 + $0x178] sm:$0xff]
      %v2108 = vld [vmem:[#allocation8 + $0x180] sm:$0xff]
      %v2109 = vld [vmem:[#allocation8 + $0x188] sm:$0xff]
      %v2110 = vld [vmem:[#allocation8 + $0x190] sm:$0xff]
      %v2111 = vld [vmem:[#allocation8 + $0x198] sm:$0xff]
      %v2112 = vld [vmem:[#allocation8 + $0x1a0] sm:$0xff]
      %v2113 = vld [vmem:[#allocation8 + $0x1a8] sm:$0xff]
      %v2114 = vld [vmem:[#allocation8 + $0x1b0] sm:$0xff]
      %v2115 = vld [vmem:[#allocation8 + $0x1b8] sm:$0xff]
      %v2116 = vld [vmem:[#allocation8 + $0x1c0] sm:$0xff]
      %v2117 = vld [vmem:[#allocation8 + $0x1c8] sm:$0xff]
      %v2118 = vld [vmem:[#allocation8 + $0x1d0] sm:$0xff]
      %v2119 = vld [vmem:[#allocation8 + $0x1d8] sm:$0xff]
      %v2120 = vld [vmem:[#allocation8 + $0x1e0] sm:$0xff]
      %v2121 = vld [vmem:[#allocation8 + $0x1e8] sm:$0xff]
      %v2122 = vld [vmem:[#allocation8 + $0x1f0] sm:$0xff]
      %v2123 = vld [vmem:[#allocation8 + $0x1f8] sm:$0xff]
      %v2124 = vld [vmem:[#allocation8 + $0x200] sm:$0xff]
      %v2125 = vld [vmem:[#allocation8 + $0x208] sm:$0xff]
      %v2126 = vld [vmem:[#allocation8 + $0x210] sm:$0xff]
      %v2127 = vld [vmem:[#allocation8 + $0x218] sm:$0xff]
      %v2128 = vld [vmem:[#allocation8 + $0x220] sm:$0xff]
      %v2129 = vld [vmem:[#allocation8 + $0x228] sm:$0xff]
      %v2130 = vld [vmem:[#allocation8 + $0x230] sm:$0xff]
      %v2131 = vld [vmem:[#allocation8 + $0x238] sm:$0xff]
      %v2132 = vld [vmem:[#allocation8 + $0x240] sm:$0xff]
      %v2133 = vld [vmem:[#allocation8 + $0x248] sm:$0xff]
      %v2134 = vld [vmem:[#allocation8 + $0x250] sm:$0xff]
      %v2135 = vld [vmem:[#allocation8 + $0x258] sm:$0xff]
      %v2136 = vld [vmem:[#allocation8 + $0x260] sm:$0xff]
      %v2137 = vld [vmem:[#allocation8 + $0x268] sm:$0xff]
      %v2138 = vld [vmem:[#allocation8 + $0x270] sm:$0xff]
      %v2139 = vld [vmem:[#allocation8 + $0x278] sm:$0xff]
      %v2140 = vld [vmem:[#allocation8 + $0x280] sm:$0xff]
      %v2141 = vld [vmem:[#allocation8 + $0x288] sm:$0xff]
      %v2142 = vld [vmem:[#allocation8 + $0x290] sm:$0xff]
      %v2143 = vld [vmem:[#allocation8 + $0x298] sm:$0xff]
      %v2144 = vld [vmem:[#allocation8 + $0x2a0] sm:$0xff]
      %v2145 = vld [vmem:[#allocation8 + $0x2a8] sm:$0xff]
      %v2146 = vld [vmem:[#allocation8 + $0x2b0] sm:$0xff]
      %v2147 = vld [vmem:[#allocation8 + $0x2b8] sm:$0xff]
      %v2148 = vld [vmem:[#allocation8 + $0x2c0] sm:$0xff]
      %v2149 = vld [vmem:[#allocation8 + $0x2c8] sm:$0xff]
      %v2150 = vld [vmem:[#allocation8 + $0x2d0] sm:$0xff]
      %v2151 = vld [vmem:[#allocation8 + $0x2d8] sm:$0xff]
      %v2152 = vld [vmem:[#allocation8 + $0x2e0] sm:$0xff]
      %v2153 = vld [vmem:[#allocation8 + $0x2e8] sm:$0xff]
      %v2154 = vld [vmem:[#allocation8 + $0x2f0] sm:$0xff]
      %v2155 = vld [vmem:[#allocation8 + $0x2f8] sm:$0xff]
      %v2156 = vld [vmem:[#allocation8 + $0x300] sm:$0xff]
      %v2157 = vld [vmem:[#allocation8 + $0x308] sm:$0xff]
      %v2158 = vld [vmem:[#allocation8 + $0x310] sm:$0xff]
      %v2159 = vld [vmem:[#allocation8 + $0x318] sm:$0xff]
      %v2160 = vld [vmem:[#allocation8 + $0x320] sm:$0xff]
      %v2161 = vld [vmem:[#allocation8 + $0x328] sm:$0xff]
      %v2162 = vld [vmem:[#allocation8 + $0x330] sm:$0xff]
      %v2163 = vld [vmem:[#allocation8 + $0x338] sm:$0xff]
      %v2164 = vld [vmem:[#allocation8 + $0x340] sm:$0xff]
      %v2165 = vld [vmem:[#allocation8 + $0x348] sm:$0xff]
      %v2166 = vld [vmem:[#allocation8 + $0x350] sm:$0xff]
      %v2167 = vld [vmem:[#allocation8 + $0x358] sm:$0xff]
      %v2168 = vld [vmem:[#allocation8 + $0x360] sm:$0xff]
      %v2169 = vld [vmem:[#allocation8 + $0x368] sm:$0xff]
      %v2170 = vld [vmem:[#allocation8 + $0x370] sm:$0xff]
      %v2171 = vld [vmem:[#allocation8 + $0x378] sm:$0xff]
      %v2172 = vld [vmem:[#allocation8 + $0x380] sm:$0xff]
      %v2173 = vld [vmem:[#allocation8 + $0x388] sm:$0xff]
      %v2174 = vld [vmem:[#allocation8 + $0x390] sm:$0xff]
      %v2175 = vld [vmem:[#allocation8 + $0x398] sm:$0xff]
      %v2176 = vld [vmem:[#allocation8 + $0x3a0] sm:$0xff]
      %v2177 = vld [vmem:[#allocation8 + $0x3a8] sm:$0xff]
      %v2178 = vld [vmem:[#allocation8 + $0x3b0] sm:$0xff]
      %v2179 = vld [vmem:[#allocation8 + $0x3b8] sm:$0xff]
      %v2180 = vld [vmem:[#allocation8 + $0x3c0] sm:$0xff]
      %v2181 = vld [vmem:[#allocation8 + $0x3c8] sm:$0xff]
      %v2182 = vld [vmem:[#allocation8 + $0x3d0] sm:$0xff]
      %v2183 = vld [vmem:[#allocation8 + $0x3d8] sm:$0xff]
      %v2184 = vld [vmem:[#allocation8 + $0x3e0] sm:$0xff]
      %v2185 = vld [vmem:[#allocation8 + $0x3e8] sm:$0xff]
      %v2186 = vld [vmem:[#allocation8 + $0x3f0] sm:$0xff]
      %v2187 = vld [vmem:[#allocation8 + $0x3f8] sm:$0xff]
      %v2188 = vld [vmem:[#allocation8 + $0x400] sm:$0xff]
      %v2189 = vld [vmem:[#allocation8 + $0x408] sm:$0xff]
      %v2190 = vld [vmem:[#allocation8 + $0x410] sm:$0xff]
      %v2191 = vld [vmem:[#allocation8 + $0x418] sm:$0xff]
      %v2192 = vld [vmem:[#allocation8 + $0x420] sm:$0xff]
      %v2193 = vld [vmem:[#allocation8 + $0x428] sm:$0xff]
      %v2194 = vld [vmem:[#allocation8 + $0x430] sm:$0xff]
      %v2195 = vld [vmem:[#allocation8 + $0x438] sm:$0xff]
      %v2196 = vld [vmem:[#allocation8 + $0x440] sm:$0xff]
      %v2197 = vld [vmem:[#allocation8 + $0x448] sm:$0xff]
      %v2198 = vld [vmem:[#allocation8 + $0x450] sm:$0xff]
      %v2199 = vld [vmem:[#allocation8 + $0x458] sm:$0xff]
      %v2200 = vld [vmem:[#allocation8 + $0x460] sm:$0xff]
      %v2201 = vld [vmem:[#allocation8 + $0x468] sm:$0xff]
      %v2202 = vld [vmem:[#allocation8 + $0x470] sm:$0xff]
      %v2203 = vld [vmem:[#allocation8 + $0x478] sm:$0xff]
      %v2204 = vld [vmem:[#allocation8 + $0x480] sm:$0xff]
      %v2205 = vld [vmem:[#allocation8 + $0x488] sm:$0xff]
      %v2206 = vld [vmem:[#allocation8 + $0x490] sm:$0xff]
      %v2207 = vld [vmem:[#allocation8 + $0x498] sm:$0xff]
      %v2208 = vld [vmem:[#allocation8 + $0x4a0] sm:$0xff]
      %v2209 = vld [vmem:[#allocation8 + $0x4a8] sm:$0xff]
      %v2210 = vld [vmem:[#allocation8 + $0x4b0] sm:$0xff]
      %v2211 = vld [vmem:[#allocation8 + $0x4b8] sm:$0xff]
      %v2212 = vld [vmem:[#allocation8 + $0x4c0] sm:$0xff]
      %v2213 = vld [vmem:[#allocation8 + $0x4c8] sm:$0xff]
      %v2214 = vld [vmem:[#allocation8 + $0x4d0] sm:$0xff]
      %v2215 = vld [vmem:[#allocation8 + $0x4d8] sm:$0xff]
      %v2216 = vld [vmem:[#allocation8 + $0x4e0] sm:$0xff]
      %v2217 = vld [vmem:[#allocation8 + $0x4e8] sm:$0xff]
      %v2218 = vld [vmem:[#allocation8 + $0x4f0] sm:$0xff]
      %v2219 = vld [vmem:[#allocation8 + $0x4f8] sm:$0xff]
      %v2220 = vld [vmem:[#allocation8 + $0x500] sm:$0xff]
      %v2221 = vld [vmem:[#allocation8 + $0x508] sm:$0xff]
      %v2222 = vld [vmem:[#allocation8 + $0x510] sm:$0xff]
      %v2223 = vld [vmem:[#allocation8 + $0x518] sm:$0xff]
      %v2224 = vld [vmem:[#allocation8 + $0x520] sm:$0xff]
      %v2225 = vld [vmem:[#allocation8 + $0x528] sm:$0xff]
      %v2226 = vld [vmem:[#allocation8 + $0x530] sm:$0xff]
      %v2227 = vld [vmem:[#allocation8 + $0x538] sm:$0xff]
      %v2228 = vld [vmem:[#allocation8 + $0x540] sm:$0xff]
      %v2229 = vld [vmem:[#allocation8 + $0x548] sm:$0xff]
      %v2230 = vld [vmem:[#allocation8 + $0x550] sm:$0xff]
      %v2231 = vld [vmem:[#allocation8 + $0x558] sm:$0xff]
      %v2232 = vld [vmem:[#allocation8 + $0x560] sm:$0xff]
      %v2233 = vld [vmem:[#allocation8 + $0x568] sm:$0xff]
      %v2234 = vld [vmem:[#allocation8 + $0x570] sm:$0xff]
      %v2235 = vld [vmem:[#allocation8 + $0x578] sm:$0xff]
      %v2236 = vld [vmem:[#allocation8 + $0x580] sm:$0xff]
      %v2237 = vld [vmem:[#allocation8 + $0x588] sm:$0xff]
      %v2238 = vld [vmem:[#allocation8 + $0x590] sm:$0xff]
      %v2239 = vld [vmem:[#allocation8 + $0x598] sm:$0xff]
      %v2240 = vld [vmem:[#allocation8 + $0x5a0] sm:$0xff]
      %v2241 = vld [vmem:[#allocation8 + $0x5a8] sm:$0xff]
      %v2242 = vld [vmem:[#allocation8 + $0x5b0] sm:$0xff]
      %v2243 = vld [vmem:[#allocation8 + $0x5b8] sm:$0xff]
      %v2244 = vld [vmem:[#allocation8 + $0x5c0] sm:$0xff]
      %v2245 = vld [vmem:[#allocation8 + $0x5c8] sm:$0xff]
      %v2246 = vld [vmem:[#allocation8 + $0x5d0] sm:$0xff]
      %v2247 = vld [vmem:[#allocation8 + $0x5d8] sm:$0xff]
      %v2248 = vld [vmem:[#allocation8 + $0x5e0] sm:$0xff]
      %v2249 = vld [vmem:[#allocation8 + $0x5e8] sm:$0xff]
      %v2250 = vld [vmem:[#allocation8 + $0x5f0] sm:$0xff]
      %v2251 = vld [vmem:[#allocation8 + $0x5f8] sm:$0xff]
      %v2252 = vld [vmem:[%s11] sm:$0xf]
      %v2254 = vlaneseq
      %v2255 = vshrl.u32 %v2254, 7
      %v2256 = vsub.s32 0, %v2255
      %v2257 = vrot.slane %v2252, %v2256
      %v2258 = vlaneseq
      %v2259 = vshrl.u32 %v2258, 7
      %v2260 = vsub.s32 1, %v2259
      %v2261 = vrot.slane %v2252, %v2260
      %v2262 = vlaneseq
      %v2263 = vshrl.u32 %v2262, 7
      %v2264 = vsub.s32 2, %v2263
      %v2265 = vrot.slane %v2252, %v2264
      %v2266 = vlaneseq
      %v2267 = vshrl.u32 %v2266, 7
      %v2268 = vsub.s32 3, %v2267
      %v2269 = vrot.slane %v2252, %v2268
      %2274 = vmatprep.subr.mxu0 %v2121
      %2275 = vmatpush1.msra.mxu0 %v2120
      %2276 = vmatprep.subr.mxu0 %v2117
      %2277 = vmatpush1.msra.mxu0 %v2116
      %2278 = vmatprep.subr.mxu0 %v2113
      %2279 = vmatpush1.msra.mxu0 %v2112
      %2280 = vmatprep.subr.mxu0 %v2109
      %2281 = vmatpush1.msra.mxu0 %v2108
      %2282 = vmatprep.subr.mxu0 %v2105
      %2283 = vmatpush1.msra.mxu0 %v2104
      %2284 = vmatprep.subr.mxu0 %v2101
      %2285 = vmatpush1.msra.mxu0 %v2100
      %2286 = vmatprep.subr.mxu0 %v2097
      %2287 = vmatpush1.msra.mxu0 %v2096
      %2288 = vmatprep.subr.mxu0 %v2093
      %2289 = vmatpush1.msra.mxu0 %v2092
      %2290 = vmatprep.subr.mxu0 %v2089
      %2291 = vmatpush1.msra.mxu0 %v2088
      %2292 = vmatprep.subr.mxu0 %v2085
      %2293 = vmatpush1.msra.mxu0 %v2084
      %2294 = vmatprep.subr.mxu0 %v2081
      %2295 = vmatpush1.msra.mxu0 %v2080
      %2296 = vmatprep.subr.mxu0 %v2077
      %2297 = vmatpush1.msra.mxu0 %v2076
      %2298 = vmatprep.subr.mxu0 %v2073
      %2299 = vmatpush1.msra.mxu0 %v2072
      %2300 = vmatprep.subr.mxu0 %v2069
      %2301 = vmatpush1.msra.mxu0 %v2068
      %2302 = vmatprep.subr.mxu0 %v2065
      %2303 = vmatpush1.msra.mxu0 %v2064
      %2304 = vmatprep.subr.mxu0 %v2061
      %2305 = vmatpush1.msra.mxu0 %v2060
      %2306 = vmatprep.subr.mxu0 %v2185
      %2307 = vmatpush2.msra.mxu0 %v2184
      %2308 = vmatprep.subr.mxu0 %v2181
      %2309 = vmatpush2.msra.mxu0 %v2180
      %2310 = vmatprep.subr.mxu0 %v2177
      %2311 = vmatpush2.msra.mxu0 %v2176
      %2312 = vmatprep.subr.mxu0 %v2173
      %2313 = vmatpush2.msra.mxu0 %v2172
      %2314 = vmatprep.subr.mxu0 %v2169
      %2315 = vmatpush2.msra.mxu0 %v2168
      %2316 = vmatprep.subr.mxu0 %v2165
      %2317 = vmatpush2.msra.mxu0 %v2164
      %2318 = vmatprep.subr.mxu0 %v2161
      %2319 = vmatpush2.msra.mxu0 %v2160
      %2320 = vmatprep.subr.mxu0 %v2157
      %2321 = vmatpush2.msra.mxu0 %v2156
      %2322 = vmatprep.subr.mxu0 %v2153
      %2323 = vmatpush2.msra.mxu0 %v2152
      %2324 = vmatprep.subr.mxu0 %v2149
      %2325 = vmatpush2.msra.mxu0 %v2148
      %2326 = vmatprep.subr.mxu0 %v2145
      %2327 = vmatpush2.msra.mxu0 %v2144
      %2328 = vmatprep.subr.mxu0 %v2141
      %2329 = vmatpush2.msra.mxu0 %v2140
      %2330 = vmatprep.subr.mxu0 %v2137
      %2331 = vmatpush2.msra.mxu0 %v2136
      %2332 = vmatprep.subr.mxu0 %v2133
      %2333 = vmatpush2.msra.mxu0 %v2132
      %2334 = vmatprep.subr.mxu0 %v2129
      %2335 = vmatpush2.msra.mxu0 %v2128
      %2336 = vmatprep.subr.mxu0 %v2125
      %2337 = vmatpush2.msra.mxu0 %v2124
      %2338 = vmatprep.mubr.f32.mxu0 %v151
      %2339 = vmatmul.mubr.f32.gmra.mxu0 %v2050
      %v2340 = vpop.f32.mrf.mxu0
      %v2341 = vadd.f32 %v2257, %v2340
      %v2342 = vpop.f32.mrf.mxu0
      %v2343 = vadd.f32 %v2261, %v2342
      %2344 = vmatprep.mubr.f32.mxu0 %v152
      %2345 = vmatmul.mubr.f32.gmra.mxu0 %v2057
      %v2346 = vpop.f32.mrf.mxu0
      %v2347 = vadd.f32 %v2257, %v2346
      %v2348 = vpop.f32.mrf.mxu0
      %v2349 = vadd.f32 %v2261, %v2348
      %2350 = vdwg.mxu0
      %2351 = vmatprep.subr.mxu0 %v2249
      %2352 = vmatpush1.msra.mxu0 %v2248
      %2353 = vmatprep.subr.mxu0 %v2245
      %2354 = vmatpush1.msra.mxu0 %v2244
      %2355 = vmatprep.subr.mxu0 %v2241
      %2356 = vmatpush1.msra.mxu0 %v2240
      %2357 = vmatprep.subr.mxu0 %v2237
      %2358 = vmatpush1.msra.mxu0 %v2236
      %2359 = vmatprep.subr.mxu0 %v2233
      %2360 = vmatpush1.msra.mxu0 %v2232
      %2361 = vmatprep.subr.mxu0 %v2229
      %2362 = vmatpush1.msra.mxu0 %v2228
      %2363 = vmatprep.subr.mxu0 %v2225
      %2364 = vmatpush1.msra.mxu0 %v2224
      %2365 = vmatprep.subr.mxu0 %v2221
      %2366 = vmatpush1.msra.mxu0 %v2220
      %2367 = vmatprep.subr.mxu0 %v2217
      %2368 = vmatpush1.msra.mxu0 %v2216
      %2369 = vmatprep.subr.mxu0 %v2213
      %2370 = vmatpush1.msra.mxu0 %v2212
      %2371 = vmatprep.subr.mxu0 %v2209
      %2372 = vmatpush1.msra.mxu0 %v2208
      %2373 = vmatprep.subr.mxu0 %v2205
      %2374 = vmatpush1.msra.mxu0 %v2204
      %2375 = vmatprep.subr.mxu0 %v2201
      %2376 = vmatpush1.msra.mxu0 %v2200
      %2377 = vmatprep.subr.mxu0 %v2197
      %2378 = vmatpush1.msra.mxu0 %v2196
      %2379 = vmatprep.subr.mxu0 %v2193
      %2380 = vmatpush1.msra.mxu0 %v2192
      %2381 = vmatprep.subr.mxu0 %v2189
      %2382 = vmatpush1.msra.mxu0 %v2188
      %2383 = vmatprep.subr.mxu0 0.0
      %2384 = vmatpush2.msra.mxu0 0.0
      %2385 = vmatprep.subr.mxu0 0.0
      %2386 = vmatpush2.msra.mxu0 0.0
      %2387 = vmatprep.subr.mxu0 0.0
      %2388 = vmatpush2.msra.mxu0 0.0
      %2389 = vmatprep.subr.mxu0 0.0
      %2390 = vmatpush2.msra.mxu0 0.0
      %2391 = vmatprep.subr.mxu0 0.0
      %2392 = vmatpush2.msra.mxu0 0.0
      %2393 = vmatprep.subr.mxu0 0.0
      %2394 = vmatpush2.msra.mxu0 0.0
      %2395 = vmatprep.subr.mxu0 0.0
      %2396 = vmatpush2.msra.mxu0 0.0
      %2397 = vmatprep.subr.mxu0 0.0
      %2398 = vmatpush2.msra.mxu0 0.0
      %2399 = vmatprep.subr.mxu0 0.0
      %2400 = vmatpush2.msra.mxu0 0.0
      %2401 = vmatprep.subr.mxu0 0.0
      %2402 = vmatpush2.msra.mxu0 0.0
      %2403 = vmatprep.subr.mxu0 0.0
      %2404 = vmatpush2.msra.mxu0 0.0
      %2405 = vmatprep.subr.mxu0 0.0
      %2406 = vmatpush2.msra.mxu0 0.0
      %2407 = vmatprep.subr.mxu0 0.0
      %2408 = vmatpush2.msra.mxu0 0.0
      %2409 = vmatprep.subr.mxu0 0.0
      %2410 = vmatpush2.msra.mxu0 0.0
      %2411 = vmatprep.subr.mxu0 0.0
      %2412 = vmatpush2.msra.mxu0 0.0
      %2413 = vmatprep.subr.mxu0 0.0
      %2414 = vmatpush2.msra.mxu0 0.0
      %2415 = vmatprep.mubr.f32.mxu0 0.0
      %2416 = vmatmul.mubr.f32.gmra.mxu0 %v147
      %v2417 = vpop.f32.mrf.mxu0
      %v2418 = vadd.f32 %v2341, %v2417
      %v2419 = vpop.f32.mrf.mxu0
      %v2420 = vadd.f32 %v2343, %v2419
      %2421 = vmatprep.mubr.f32.mxu0 0.0
      %2422 = vmatmul.mubr.f32.gmra.mxu0 %v148
      %v2423 = vpop.f32.mrf.mxu0
      %v2424 = vadd.f32 %v2347, %v2423
      %v2425 = vpop.f32.mrf.mxu0
      %v2426 = vadd.f32 %v2349, %v2425
      %2427 = vdwg.mxu0
      %2428 = vmatprep.subr.mxu0 %v2123
      %2429 = vmatpush1.msra.mxu0 %v2122
      %2430 = vmatprep.subr.mxu0 %v2119
      %2431 = vmatpush1.msra.mxu0 %v2118
      %2432 = vmatprep.subr.mxu0 %v2115
      %2433 = vmatpush1.msra.mxu0 %v2114
      %2434 = vmatprep.subr.mxu0 %v2111
      %2435 = vmatpush1.msra.mxu0 %v2110
      %2436 = vmatprep.subr.mxu0 %v2107
      %2437 = vmatpush1.msra.mxu0 %v2106
      %2438 = vmatprep.subr.mxu0 %v2103
      %2439 = vmatpush1.msra.mxu0 %v2102
      %2440 = vmatprep.subr.mxu0 %v2099
      %2441 = vmatpush1.msra.mxu0 %v2098
      %2442 = vmatprep.subr.mxu0 %v2095
      %2443 = vmatpush1.msra.mxu0 %v2094
      %2444 = vmatprep.subr.mxu0 %v2091
      %2445 = vmatpush1.msra.mxu0 %v2090
      %2446 = vmatprep.subr.mxu0 %v2087
      %2447 = vmatpush1.msra.mxu0 %v2086
      %2448 = vmatprep.subr.mxu0 %v2083
      %2449 = vmatpush1.msra.mxu0 %v2082
      %2450 = vmatprep.subr.mxu0 %v2079
      %2451 = vmatpush1.msra.mxu0 %v2078
      %2452 = vmatprep.subr.mxu0 %v2075
      %2453 = vmatpush1.msra.mxu0 %v2074
      %2454 = vmatprep.subr.mxu0 %v2071
      %2455 = vmatpush1.msra.mxu0 %v2070
      %2456 = vmatprep.subr.mxu0 %v2067
      %2457 = vmatpush1.msra.mxu0 %v2066
      %2458 = vmatprep.subr.mxu0 %v2063
      %2459 = vmatpush1.msra.mxu0 %v2062
      %2460 = vmatprep.subr.mxu0 %v2187
      %2461 = vmatpush2.msra.mxu0 %v2186
      %2462 = vmatprep.subr.mxu0 %v2183
      %2463 = vmatpush2.msra.mxu0 %v2182
      %2464 = vmatprep.subr.mxu0 %v2179
      %2465 = vmatpush2.msra.mxu0 %v2178
      %2466 = vmatprep.subr.mxu0 %v2175
      %2467 = vmatpush2.msra.mxu0 %v2174
      %2468 = vmatprep.subr.mxu0 %v2171
      %2469 = vmatpush2.msra.mxu0 %v2170
      %2470 = vmatprep.subr.mxu0 %v2167
      %2471 = vmatpush2.msra.mxu0 %v2166
      %2472 = vmatprep.subr.mxu0 %v2163
      %2473 = vmatpush2.msra.mxu0 %v2162
      %2474 = vmatprep.subr.mxu0 %v2159
      %2475 = vmatpush2.msra.mxu0 %v2158
      %2476 = vmatprep.subr.mxu0 %v2155
      %2477 = vmatpush2.msra.mxu0 %v2154
      %2478 = vmatprep.subr.mxu0 %v2151
      %2479 = vmatpush2.msra.mxu0 %v2150
      %2480 = vmatprep.subr.mxu0 %v2147
      %2481 = vmatpush2.msra.mxu0 %v2146
      %2482 = vmatprep.subr.mxu0 %v2143
      %2483 = vmatpush2.msra.mxu0 %v2142
      %2484 = vmatprep.subr.mxu0 %v2139
      %2485 = vmatpush2.msra.mxu0 %v2138
      %2486 = vmatprep.subr.mxu0 %v2135
      %2487 = vmatpush2.msra.mxu0 %v2134
      %2488 = vmatprep.subr.mxu0 %v2131
      %2489 = vmatpush2.msra.mxu0 %v2130
      %2490 = vmatprep.subr.mxu0 %v2127
      %2491 = vmatpush2.msra.mxu0 %v2126
      %2492 = vmatprep.mubr.f32.mxu0 %v151
      %2493 = vmatmul.mubr.f32.gmra.mxu0 %v2050
      %v2494 = vpop.f32.mrf.mxu0
      %v2495 = vadd.f32 %v2265, %v2494
      %v2496 = vpop.f32.mrf.mxu0
      %v2497 = vadd.f32 %v2269, %v2496
      %2498 = vmatprep.mubr.f32.mxu0 %v152
      %2499 = vmatmul.mubr.f32.gmra.mxu0 %v2057
      %v2500 = vpop.f32.mrf.mxu0
      %v2501 = vadd.f32 %v2265, %v2500
      %v2502 = vpop.f32.mrf.mxu0
      %v2503 = vadd.f32 %v2269, %v2502
      %2504 = vdwg.mxu0
      %2505 = vmatprep.subr.mxu0 %v2251
      %2506 = vmatpush1.msra.mxu0 %v2250
      %2507 = vmatprep.subr.mxu0 %v2247
      %2508 = vmatpush1.msra.mxu0 %v2246
      %2509 = vmatprep.subr.mxu0 %v2243
      %2510 = vmatpush1.msra.mxu0 %v2242
      %2511 = vmatprep.subr.mxu0 %v2239
      %2512 = vmatpush1.msra.mxu0 %v2238
      %2513 = vmatprep.subr.mxu0 %v2235
      %2514 = vmatpush1.msra.mxu0 %v2234
      %2515 = vmatprep.subr.mxu0 %v2231
      %2516 = vmatpush1.msra.mxu0 %v2230
      %2517 = vmatprep.subr.mxu0 %v2227
      %2518 = vmatpush1.msra.mxu0 %v2226
      %2519 = vmatprep.subr.mxu0 %v2223
      %2520 = vmatpush1.msra.mxu0 %v2222
      %2521 = vmatprep.subr.mxu0 %v2219
      %2522 = vmatpush1.msra.mxu0 %v2218
      %2523 = vmatprep.subr.mxu0 %v2215
      %2524 = vmatpush1.msra.mxu0 %v2214
      %2525 = vmatprep.subr.mxu0 %v2211
      %2526 = vmatpush1.msra.mxu0 %v2210
      %2527 = vmatprep.subr.mxu0 %v2207
      %2528 = vmatpush1.msra.mxu0 %v2206
      %2529 = vmatprep.subr.mxu0 %v2203
      %2530 = vmatpush1.msra.mxu0 %v2202
      %2531 = vmatprep.subr.mxu0 %v2199
      %2532 = vmatpush1.msra.mxu0 %v2198
      %2533 = vmatprep.subr.mxu0 %v2195
      %2534 = vmatpush1.msra.mxu0 %v2194
      %2535 = vmatprep.subr.mxu0 %v2191
      %2536 = vmatpush1.msra.mxu0 %v2190
      %2537 = vmatprep.subr.mxu0 0.0
      %2538 = vmatpush2.msra.mxu0 0.0
      %2539 = vmatprep.subr.mxu0 0.0
      %2540 = vmatpush2.msra.mxu0 0.0
      %2541 = vmatprep.subr.mxu0 0.0
      %2542 = vmatpush2.msra.mxu0 0.0
      %2543 = vmatprep.subr.mxu0 0.0
      %2544 = vmatpush2.msra.mxu0 0.0
      %2545 = vmatprep.subr.mxu0 0.0
      %2546 = vmatpush2.msra.mxu0 0.0
      %2547 = vmatprep.subr.mxu0 0.0
      %2548 = vmatpush2.msra.mxu0 0.0
      %2549 = vmatprep.subr.mxu0 0.0
      %2550 = vmatpush2.msra.mxu0 0.0
      %2551 = vmatprep.subr.mxu0 0.0
      %2552 = vmatpush2.msra.mxu0 0.0
      %2553 = vmatprep.subr.mxu0 0.0
      %2554 = vmatpush2.msra.mxu0 0.0
      %2555 = vmatprep.subr.mxu0 0.0
      %2556 = vmatpush2.msra.mxu0 0.0
      %2557 = vmatprep.subr.mxu0 0.0
      %2558 = vmatpush2.msra.mxu0 0.0
      %2559 = vmatprep.subr.mxu0 0.0
      %2560 = vmatpush2.msra.mxu0 0.0
      %2561 = vmatprep.subr.mxu0 0.0
      %2562 = vmatpush2.msra.mxu0 0.0
      %2563 = vmatprep.subr.mxu0 0.0
      %2564 = vmatpush2.msra.mxu0 0.0
      %2565 = vmatprep.subr.mxu0 0.0
      %2566 = vmatpush2.msra.mxu0 0.0
      %2567 = vmatprep.subr.mxu0 0.0
      %2568 = vmatpush2.msra.mxu0 0.0
      %2569 = vmatprep.mubr.f32.mxu0 0.0
      %2570 = vmatmul.mubr.f32.gmra.mxu0 %v147
      %v2571 = vpop.f32.mrf.mxu0
      %v2572 = vadd.f32 %v2495, %v2571
      %v2573 = vpop.f32.mrf.mxu0
      %v2574 = vadd.f32 %v2497, %v2573
      %2575 = vmatprep.mubr.f32.mxu0 0.0
      %2576 = vmatmul.mubr.f32.gmra.mxu0 %v148
      %v2577 = vpop.f32.mrf.mxu0
      %v2578 = vadd.f32 %v2501, %v2577
      %v2579 = vpop.f32.mrf.mxu0
      %v2580 = vadd.f32 %v2503, %v2579
      %2581 = vdwg.mxu0
      %v2582 = vxor.u32 %v2418, 2147483648
      %v2583 = vxor.u32 %v2424, 2147483648
      %v2584 = vmul.f32 %v2582, 1.442695
      %v2585 = vpow.pop %v2584
      %v2586 = vmul.f32 %v2583, 1.442695
      %v2587 = vpow.pop %v2586
      %v2588 = vadd.f32 %v2585, 1.0
      %v2589 = vadd.f32 %v2587, 1.0
      %v2590 = vrcp.pop %v2588
      %v2591 = vmul.f32 1.0, %v2590
      %v2592 = vrcp.pop %v2589
      %v2593 = vmul.f32 1.0, %v2592
      %v2594 = vxor.u32 %v2420, 2147483648
      %v2595 = vxor.u32 %v2426, 2147483648
      %v2596 = vmul.f32 %v2594, 1.442695
      %v2597 = vpow.pop %v2596
      %v2598 = vmul.f32 %v2595, 1.442695
      %v2599 = vpow.pop %v2598
      %v2600 = vadd.f32 %v2597, 1.0
      %v2601 = vadd.f32 %v2599, 1.0
      %v2602 = vrcp.pop %v2600
      %v2603 = vmul.f32 1.0, %v2602
      %v2604 = vrcp.pop %v2601
      %v2605 = vmul.f32 1.0, %v2604
      %v2606 = vtanh.pop %v2572
      %v2607 = vtanh.pop %v2578
      %v2608 = vxor.u32 %v2574, 2147483648
      %v2609 = vxor.u32 %v2580, 2147483648
      %v2610 = vmul.f32 %v2608, 1.442695
      %v2611 = vpow.pop %v2610
      %v2612 = vmul.f32 %v2609, 1.442695
      %v2613 = vpow.pop %v2612
      %v2614 = vadd.f32 %v2611, 1.0
      %v2615 = vadd.f32 %v2613, 1.0
      %v2616 = vrcp.pop %v2614
      %v2617 = vmul.f32 1.0, %v2616
      %v2618 = vrcp.pop %v2615
      %v2619 = vmul.f32 1.0, %v2618
      %v2620 = vmul.f32 %v2603, %v149
      %v2621 = vmul.f32 %v2605, %v150
      %v2622 = vmul.f32 %v2591, %v2606
      %v2623 = vmul.f32 %v2593, %v2607
      %v2624 = vadd.f32 %v2620, %v2622
      %v2625 = vadd.f32 %v2621, %v2623
      %v2626 = vtanh.pop %v2624
      %v2627 = vtanh.pop %v2625
      %v2628 = vmul.f32 %v2617, %v2626
      %v2629 = vmul.f32 %v2619, %v2627
      %2630 = vst [vmem:[#allocation11] sm:$0xff] %v2628
      %2631 = vst [vmem:[#allocation11 + $0x8] sm:$0xff] %v2629
      %2632 = vst [vmem:[#allocation12] sm:$0xff] %v2624
      %2633 = vst [vmem:[#allocation12 + $0x8] sm:$0xff] %v2625
      %v2634 = vlaneseq
      %v2635 = vshrl.u32 %v2634, 7
      %v2636 = vsub.s32 %v945, %v2635
      %v2637 = vrot.slane %v1727, %v2636
      %v2638 = vlaneseq
      %v2639 = vshrl.u32 %v2638, 7
      %v2640 = vsub.s32 %v950, %v2639
      %v2641 = vrot.slane %v1732, %v2640
      %v2642 = vsel %vm955, %v2641, %v2637
      %v2643 = vlaneseq
      %v2644 = vshrl.u32 %v2643, 7
      %v2645 = vsub.s32 %v945, %v2644
      %v2646 = vrot.slane %v1737, %v2645
      %v2647 = vlaneseq
      %v2648 = vshrl.u32 %v2647, 7
      %v2649 = vsub.s32 %v950, %v2648
      %v2650 = vrot.slane %v1742, %v2649
      %v2651 = vsel %vm955, %v2650, %v2646
      %v2652 = vlaneseq
      %v2653 = vshrl.u32 %v2652, 7
      %v2654 = vsub.s32 %v945, %v2653
      %v2655 = vrot.slane %v1747, %v2654
      %v2656 = vlaneseq
      %v2657 = vshrl.u32 %v2656, 7
      %v2658 = vsub.s32 %v950, %v2657
      %v2659 = vrot.slane %v1752, %v2658
      %v2660 = vsel %vm955, %v2659, %v2655
      %v2661 = vlaneseq
      %v2662 = vshrl.u32 %v2661, 7
      %v2663 = vsub.s32 %v945, %v2662
      %v2664 = vrot.slane %v1757, %v2663
      %v2665 = vlaneseq
      %v2666 = vshrl.u32 %v2665, 7
      %v2667 = vsub.s32 %v950, %v2666
      %v2668 = vrot.slane %v1762, %v2667
      %v2669 = vsel %vm955, %v2668, %v2664
      %v2670 = vlaneseq
      %v2671 = vshrl.u32 %v2670, 7
      %v2672 = vsub.s32 %v945, %v2671
      %v2673 = vrot.slane %v1767, %v2672
      %v2674 = vlaneseq
      %v2675 = vshrl.u32 %v2674, 7
      %v2676 = vsub.s32 %v950, %v2675
      %v2677 = vrot.slane %v1772, %v2676
      %v2678 = vsel %vm955, %v2677, %v2673
      %v2679 = vlaneseq
      %v2680 = vshrl.u32 %v2679, 7
      %v2681 = vsub.s32 %v945, %v2680
      %v2682 = vrot.slane %v1777, %v2681
      %v2683 = vlaneseq
      %v2684 = vshrl.u32 %v2683, 7
      %v2685 = vsub.s32 %v950, %v2684
      %v2686 = vrot.slane %v1782, %v2685
      %v2687 = vsel %vm955, %v2686, %v2682
      %v2688 = vlaneseq
      %v2689 = vshrl.u32 %v2688, 7
      %v2690 = vsub.s32 %v945, %v2689
      %v2691 = vrot.slane %v1787, %v2690
      %v2692 = vlaneseq
      %v2693 = vshrl.u32 %v2692, 7
      %v2694 = vsub.s32 %v950, %v2693
      %v2695 = vrot.slane %v1792, %v2694
      %v2696 = vsel %vm955, %v2695, %v2691
      %v2697 = vlaneseq
      %v2698 = vshrl.u32 %v2697, 7
      %v2699 = vsub.s32 %v945, %v2698
      %v2700 = vrot.slane %v1797, %v2699
      %v2701 = vlaneseq
      %v2702 = vshrl.u32 %v2701, 7
      %v2703 = vsub.s32 %v950, %v2702
      %v2704 = vrot.slane %v1802, %v2703
      %v2705 = vsel %vm955, %v2704, %v2700
      %v2706 = vlaneseq
      %v2707 = vshrl.u32 %v2706, 7
      %v2708 = vsub.s32 %v945, %v2707
      %v2709 = vrot.slane %v1807, %v2708
      %v2710 = vlaneseq
      %v2711 = vshrl.u32 %v2710, 7
      %v2712 = vsub.s32 %v950, %v2711
      %v2713 = vrot.slane %v1812, %v2712
      %v2714 = vsel %vm955, %v2713, %v2709
      %v2715 = vlaneseq
      %v2716 = vshrl.u32 %v2715, 7
      %v2717 = vsub.s32 %v945, %v2716
      %v2718 = vrot.slane %v1817, %v2717
      %v2719 = vlaneseq
      %v2720 = vshrl.u32 %v2719, 7
      %v2721 = vsub.s32 %v950, %v2720
      %v2722 = vrot.slane %v1822, %v2721
      %v2723 = vsel %vm955, %v2722, %v2718
      %v2724 = vlaneseq
      %v2725 = vshrl.u32 %v2724, 7
      %v2726 = vsub.s32 %v945, %v2725
      %v2727 = vrot.slane %v1827, %v2726
      %v2728 = vlaneseq
      %v2729 = vshrl.u32 %v2728, 7
      %v2730 = vsub.s32 %v950, %v2729
      %v2731 = vrot.slane %v1832, %v2730
      %v2732 = vsel %vm955, %v2731, %v2727
      %v2733 = vlaneseq
      %v2734 = vshrl.u32 %v2733, 7
      %v2735 = vsub.s32 %v945, %v2734
      %v2736 = vrot.slane %v1837, %v2735
      %v2737 = vlaneseq
      %v2738 = vshrl.u32 %v2737, 7
      %v2739 = vsub.s32 %v950, %v2738
      %v2740 = vrot.slane %v1842, %v2739
      %v2741 = vsel %vm955, %v2740, %v2736
      %v2742 = vlaneseq
      %v2743 = vshrl.u32 %v2742, 7
      %v2744 = vsub.s32 %v945, %v2743
      %v2745 = vrot.slane %v1847, %v2744
      %v2746 = vlaneseq
      %v2747 = vshrl.u32 %v2746, 7
      %v2748 = vsub.s32 %v950, %v2747
      %v2749 = vrot.slane %v1852, %v2748
      %v2750 = vsel %vm955, %v2749, %v2745
      %v2751 = vlaneseq
      %v2752 = vshrl.u32 %v2751, 7
      %v2753 = vsub.s32 %v945, %v2752
      %v2754 = vrot.slane %v1857, %v2753
      %v2755 = vlaneseq
      %v2756 = vshrl.u32 %v2755, 7
      %v2757 = vsub.s32 %v950, %v2756
      %v2758 = vrot.slane %v1862, %v2757
      %v2759 = vsel %vm955, %v2758, %v2754
      %v2760 = vlaneseq
      %v2761 = vshrl.u32 %v2760, 7
      %v2762 = vsub.s32 %v945, %v2761
      %v2763 = vrot.slane %v1867, %v2762
      %v2764 = vlaneseq
      %v2765 = vshrl.u32 %v2764, 7
      %v2766 = vsub.s32 %v950, %v2765
      %v2767 = vrot.slane %v1872, %v2766
      %v2768 = vsel %vm955, %v2767, %v2763
      %v2769 = vlaneseq
      %v2770 = vshrl.u32 %v2769, 7
      %v2771 = vsub.s32 %v945, %v2770
      %v2772 = vrot.slane %v1877, %v2771
      %v2773 = vlaneseq
      %v2774 = vshrl.u32 %v2773, 7
      %v2775 = vsub.s32 %v950, %v2774
      %v2776 = vrot.slane %v1882, %v2775
      %v2777 = vsel %vm955, %v2776, %v2772
      %v2778 = vsel %vm1092, %v2651, %v2642
      %v2779 = vsel %vm1094, %v2660, %v2778
      %v2780 = vsel %vm1096, %v2669, %v2779
      %v2781 = vsel %vm1098, %v2678, %v2780
      %v2782 = vsel %vm1100, %v2687, %v2781
      %v2783 = vsel %vm1102, %v2696, %v2782
      %v2784 = vsel %vm1104, %v2705, %v2783
      %v2785 = vsel %vm1092, %v2723, %v2714
      %v2786 = vsel %vm1094, %v2732, %v2785
      %v2787 = vsel %vm1096, %v2741, %v2786
      %v2788 = vsel %vm1098, %v2750, %v2787
      %v2789 = vsel %vm1100, %v2759, %v2788
      %v2790 = vsel %vm1102, %v2768, %v2789
      %v2791 = vsel %vm1104, %v2777, %v2790
      %2794 = vst.msk [vmem:[#allocation15] sm:$0xff] %vm1115, %v2784
      %2795 = vst.msk [vmem:[#allocation15 + $0x8] sm:$0xff] %vm1115, %v2791
    $region77: #{image_captioning_decoder.1} parent=1 // pred_fallthru
      _
    %v2796 = vld [vmem:[#allocation11] sm:$0xff]
    %v2797 = vld [vmem:[#allocation11 + $0x8] sm:$0xff]
    %v2798 = vpack.c.bf16 %v2797, %v2796
    %v2799 = vld [vmem:[#allocation9] sm:$0xff]
    %v2800 = vld [vmem:[#allocation9 + $0x8] sm:$0xff]
    %v2801 = vld [vmem:[#allocation9 + $0x10] sm:$0xff]
    %v2802 = vld [vmem:[#allocation9 + $0x18] sm:$0xff]
    %v2803 = vld [vmem:[#allocation9 + $0x20] sm:$0xff]
    %v2804 = vld [vmem:[#allocation9 + $0x28] sm:$0xff]
    %v2805 = vld [vmem:[#allocation9 + $0x30] sm:$0xff]
    %v2806 = vld [vmem:[#allocation9 + $0x38] sm:$0xff]
    %v2807 = vld [vmem:[#allocation9 + $0x40] sm:$0xff]
    %v2808 = vld [vmem:[#allocation9 + $0x48] sm:$0xff]
    %v2809 = vld [vmem:[#allocation9 + $0x50] sm:$0xff]
    %v2810 = vld [vmem:[#allocation9 + $0x58] sm:$0xff]
    %v2811 = vld [vmem:[#allocation9 + $0x60] sm:$0xff]
    %v2812 = vld [vmem:[#allocation9 + $0x68] sm:$0xff]
    %v2813 = vld [vmem:[#allocation9 + $0x70] sm:$0xff]
    %v2814 = vld [vmem:[#allocation9 + $0x78] sm:$0xff]
    %v2815 = vld [vmem:[#allocation9 + $0x80] sm:$0xff]
    %v2816 = vld [vmem:[#allocation9 + $0x88] sm:$0xff]
    %v2817 = vld [vmem:[#allocation9 + $0x90] sm:$0xff]
    %v2818 = vld [vmem:[#allocation9 + $0x98] sm:$0xff]
    %v2819 = vld [vmem:[#allocation9 + $0xa0] sm:$0xff]
    %v2820 = vld [vmem:[#allocation9 + $0xa8] sm:$0xff]
    %v2821 = vld [vmem:[#allocation9 + $0xb0] sm:$0xff]
    %v2822 = vld [vmem:[#allocation9 + $0xb8] sm:$0xff]
    %v2823 = vld [vmem:[#allocation9 + $0xc0] sm:$0xff]
    %v2824 = vld [vmem:[#allocation9 + $0xc8] sm:$0xff]
    %v2825 = vld [vmem:[#allocation9 + $0xd0] sm:$0xff]
    %v2826 = vld [vmem:[#allocation9 + $0xd8] sm:$0xff]
    %v2827 = vld [vmem:[#allocation9 + $0xe0] sm:$0xff]
    %v2828 = vld [vmem:[#allocation9 + $0xe8] sm:$0xff]
    %v2829 = vld [vmem:[#allocation9 + $0xf0] sm:$0xff]
    %v2830 = vld [vmem:[#allocation9 + $0xf8] sm:$0xff]
    %v2831 = vld [vmem:[%s13] sm:$0xf]
    %v2833 = vlaneseq
    %v2834 = vshrl.u32 %v2833, 7
    %v2835 = vsub.s32 0, %v2834
    %v2836 = vrot.slane %v2831, %v2835
    %v2837 = vlaneseq
    %v2838 = vshrl.u32 %v2837, 7
    %v2839 = vsub.s32 1, %v2838
    %v2840 = vrot.slane %v2831, %v2839
    %v2841 = vlaneseq
    %v2842 = vshrl.u32 %v2841, 7
    %v2843 = vsub.s32 2, %v2842
    %v2844 = vrot.slane %v2831, %v2843
    %v2845 = vlaneseq
    %v2846 = vshrl.u32 %v2845, 7
    %v2847 = vsub.s32 3, %v2846
    %v2848 = vrot.slane %v2831, %v2847
    %v2885 = vunpack.c.l.b16 %v2799
    %v2886 = vunpack.c.h.b16 %v2799
    %v2887 = vunpack.c.l.b16 %v2800
    %v2888 = vunpack.c.h.b16 %v2800
    %v2889 = vunpack.c.l.b16 %v2801
    %v2890 = vunpack.c.h.b16 %v2801
    %v2891 = vunpack.c.l.b16 %v2802
    %v2892 = vunpack.c.h.b16 %v2802
    %v2893 = vunpack.c.l.b16 %v2803
    %v2894 = vunpack.c.h.b16 %v2803
    %v2895 = vunpack.c.l.b16 %v2804
    %v2896 = vunpack.c.h.b16 %v2804
    %v2897 = vunpack.c.l.b16 %v2805
    %v2898 = vunpack.c.h.b16 %v2805
    %v2899 = vunpack.c.l.b16 %v2806
    %v2900 = vunpack.c.h.b16 %v2806
    %v2901 = vunpack.c.l.b16 %v2807
    %v2902 = vunpack.c.h.b16 %v2807
    %v2903 = vunpack.c.l.b16 %v2808
    %v2904 = vunpack.c.h.b16 %v2808
    %v2905 = vunpack.c.l.b16 %v2809
    %v2906 = vunpack.c.h.b16 %v2809
    %v2907 = vunpack.c.l.b16 %v2810
    %v2908 = vunpack.c.h.b16 %v2810
    %v2909 = vunpack.c.l.b16 %v2811
    %v2910 = vunpack.c.h.b16 %v2811
    %v2911 = vunpack.c.l.b16 %v2812
    %v2912 = vunpack.c.h.b16 %v2812
    %v2913 = vunpack.c.l.b16 %v2813
    %v2914 = vunpack.c.h.b16 %v2813
    %v2915 = vunpack.c.l.b16 %v2814
    %v2916 = vunpack.c.h.b16 %v2814
    %v2917 = vunpack.c.l.b16 %v2815
    %v2918 = vunpack.c.h.b16 %v2815
    %v2919 = vunpack.c.l.b16 %v2816
    %v2920 = vunpack.c.h.b16 %v2816
    %v2921 = vunpack.c.l.b16 %v2817
    %v2922 = vunpack.c.h.b16 %v2817
    %v2923 = vunpack.c.l.b16 %v2818
    %v2924 = vunpack.c.h.b16 %v2818
    %v2925 = vunpack.c.l.b16 %v2819
    %v2926 = vunpack.c.h.b16 %v2819
    %v2927 = vunpack.c.l.b16 %v2820
    %v2928 = vunpack.c.h.b16 %v2820
    %v2929 = vunpack.c.l.b16 %v2821
    %v2930 = vunpack.c.h.b16 %v2821
    %v2931 = vunpack.c.l.b16 %v2822
    %v2932 = vunpack.c.h.b16 %v2822
    %v2933 = vunpack.c.l.b16 %v2823
    %v2934 = vunpack.c.h.b16 %v2823
    %v2935 = vunpack.c.l.b16 %v2824
    %v2936 = vunpack.c.h.b16 %v2824
    %v2937 = vunpack.c.l.b16 %v2825
    %v2938 = vunpack.c.h.b16 %v2825
    %v2939 = vunpack.c.l.b16 %v2826
    %v2940 = vunpack.c.h.b16 %v2826
    %v2941 = vunpack.c.l.b16 %v2827
    %v2942 = vunpack.c.h.b16 %v2827
    %v2943 = vunpack.c.l.b16 %v2828
    %v2944 = vunpack.c.h.b16 %v2828
    %v2945 = vunpack.c.l.b16 %v2829
    %v2946 = vunpack.c.h.b16 %v2829
    %v2947 = vunpack.c.l.b16 %v2830
    %v2948 = vunpack.c.h.b16 %v2830
    %v2949 = vpack.c.b16 %v2889, %v2885
    %v2950 = vpack.c.b16 %v2890, %v2886
    %v2951 = vpack.c.b16 %v2891, %v2887
    %v2952 = vpack.c.b16 %v2892, %v2888
    %v2953 = vpack.c.b16 %v2897, %v2893
    %v2954 = vpack.c.b16 %v2898, %v2894
    %v2955 = vpack.c.b16 %v2899, %v2895
    %v2956 = vpack.c.b16 %v2900, %v2896
    %v2957 = vpack.c.b16 %v2905, %v2901
    %v2958 = vpack.c.b16 %v2906, %v2902
    %v2959 = vpack.c.b16 %v2907, %v2903
    %v2960 = vpack.c.b16 %v2908, %v2904
    %v2961 = vpack.c.b16 %v2913, %v2909
    %v2962 = vpack.c.b16 %v2914, %v2910
    %v2963 = vpack.c.b16 %v2915, %v2911
    %v2964 = vpack.c.b16 %v2916, %v2912
    %v2965 = vpack.c.b16 %v2921, %v2917
    %v2966 = vpack.c.b16 %v2922, %v2918
    %v2967 = vpack.c.b16 %v2923, %v2919
    %v2968 = vpack.c.b16 %v2924, %v2920
    %v2969 = vpack.c.b16 %v2929, %v2925
    %v2970 = vpack.c.b16 %v2930, %v2926
    %v2971 = vpack.c.b16 %v2931, %v2927
    %v2972 = vpack.c.b16 %v2932, %v2928
    %v2973 = vpack.c.b16 %v2937, %v2933
    %v2974 = vpack.c.b16 %v2938, %v2934
    %v2975 = vpack.c.b16 %v2939, %v2935
    %v2976 = vpack.c.b16 %v2940, %v2936
    %v2977 = vpack.c.b16 %v2945, %v2941
    %v2978 = vpack.c.b16 %v2946, %v2942
    %v2979 = vpack.c.b16 %v2947, %v2943
    %v2980 = vpack.c.b16 %v2948, %v2944
    %3013 = vmatprep.subr.bf16.mxu0 %v2978
    %3014 = vmatpush1.bf16.msra.mxu0 %v2977
    %3015 = vmatprep.subr.bf16.mxu0 %v2974
    %3016 = vmatpush1.bf16.msra.mxu0 %v2973
    %3017 = vmatprep.subr.bf16.mxu0 %v2970
    %3018 = vmatpush1.bf16.msra.mxu0 %v2969
    %3019 = vmatprep.subr.bf16.mxu0 %v2966
    %3020 = vmatpush1.bf16.msra.mxu0 %v2965
    %3021 = vmatprep.subr.bf16.mxu0 %v2962
    %3022 = vmatpush1.bf16.msra.mxu0 %v2961
    %3023 = vmatprep.subr.bf16.mxu0 %v2958
    %3024 = vmatpush1.bf16.msra.mxu0 %v2957
    %3025 = vmatprep.subr.bf16.mxu0 %v2954
    %3026 = vmatpush1.bf16.msra.mxu0 %v2953
    %3027 = vmatprep.subr.bf16.mxu0 %v2950
    %3028 = vmatpush1.bf16.msra.mxu0 %v2949
    %3029 = vmatprep.subr.bf16.mxu0 0
    %3030 = vmatpush2.bf16.msra.mxu0 0
    %3031 = vmatprep.subr.bf16.mxu0 0
    %3032 = vmatpush2.bf16.msra.mxu0 0
    %3033 = vmatprep.subr.bf16.mxu0 0
    %3034 = vmatpush2.bf16.msra.mxu0 0
    %3035 = vmatprep.subr.bf16.mxu0 0
    %3036 = vmatpush2.bf16.msra.mxu0 0
    %3037 = vmatprep.subr.bf16.mxu0 0
    %3038 = vmatpush2.bf16.msra.mxu0 0
    %3039 = vmatprep.subr.bf16.mxu0 0
    %3040 = vmatpush2.bf16.msra.mxu0 0
    %3041 = vmatprep.subr.bf16.mxu0 0
    %3042 = vmatpush2.bf16.msra.mxu0 0
    %3043 = vmatprep.subr.bf16.mxu0 0
    %3044 = vmatpush2.bf16.msra.mxu0 0
    %3045 = vmatprep.mubr.bf16.mxu0 0
    %3046 = vmatmul.mubr.bf16.gmra.mxu0 %v2798
    %v3047 = vpop.f32.mrf.mxu0
    %v3048 = vadd.f32 %v2836, %v3047
    %v3049 = vpop.f32.mrf.mxu0
    %v3050 = vadd.f32 %v2840, %v3049
    %v3051 = vpop.f32.mrf.mxu0
    %v3052 = vadd.f32 %v2836, %v3051
    %v3053 = vpop.f32.mrf.mxu0
    %v3054 = vadd.f32 %v2840, %v3053
    %3055 = vdwg.mxu0
    %3056 = vmatprep.subr.bf16.mxu0 %v2980
    %3057 = vmatpush1.bf16.msra.mxu0 %v2979
    %3058 = vmatprep.subr.bf16.mxu0 %v2976
    %3059 = vmatpush1.bf16.msra.mxu0 %v2975
    %3060 = vmatprep.subr.bf16.mxu0 %v2972
    %3061 = vmatpush1.bf16.msra.mxu0 %v2971
    %3062 = vmatprep.subr.bf16.mxu0 %v2968
    %3063 = vmatpush1.bf16.msra.mxu0 %v2967
    %3064 = vmatprep.subr.bf16.mxu0 %v2964
    %3065 = vmatpush1.bf16.msra.mxu0 %v2963
    %3066 = vmatprep.subr.bf16.mxu0 %v2960
    %3067 = vmatpush1.bf16.msra.mxu0 %v2959
    %3068 = vmatprep.subr.bf16.mxu0 %v2956
    %3069 = vmatpush1.bf16.msra.mxu0 %v2955
    %3070 = vmatprep.subr.bf16.mxu0 %v2952
    %3071 = vmatpush1.bf16.msra.mxu0 %v2951
    %3072 = vmatprep.subr.bf16.mxu0 0
    %3073 = vmatpush2.bf16.msra.mxu0 0
    %3074 = vmatprep.subr.bf16.mxu0 0
    %3075 = vmatpush2.bf16.msra.mxu0 0
    %3076 = vmatprep.subr.bf16.mxu0 0
    %3077 = vmatpush2.bf16.msra.mxu0 0
    %3078 = vmatprep.subr.bf16.mxu0 0
    %3079 = vmatpush2.bf16.msra.mxu0 0
    %3080 = vmatprep.subr.bf16.mxu0 0
    %3081 = vmatpush2.bf16.msra.mxu0 0
    %3082 = vmatprep.subr.bf16.mxu0 0
    %3083 = vmatpush2.bf16.msra.mxu0 0
    %3084 = vmatprep.subr.bf16.mxu0 0
    %3085 = vmatpush2.bf16.msra.mxu0 0
    %3086 = vmatprep.subr.bf16.mxu0 0
    %3087 = vmatpush2.bf16.msra.mxu0 0
    %3088 = vmatprep.mubr.bf16.mxu0 0
    %3089 = vmatmul.mubr.bf16.gmra.mxu0 %v2798
    %v3090 = vpop.f32.mrf.mxu0
    %v3091 = vadd.f32 %v2844, %v3090
    %v3092 = vpop.f32.mrf.mxu0
    %v3093 = vadd.f32 %v2848, %v3092
    %v3094 = vpop.f32.mrf.mxu0
    %v3095 = vadd.f32 %v2844, %v3094
    %v3096 = vpop.f32.mrf.mxu0
    %v3097 = vadd.f32 %v2848, %v3096
    %3098 = vdwg.mxu0
    %3099 = vst [vmem:[#allocation14] sm:$0xff] %v3048
    %3100 = vst [vmem:[#allocation14 + $0x8] sm:$0xff] %v3050
    %3101 = vst [vmem:[#allocation14 + $0x10] sm:$0xff] %v3091
    %3102 = vst [vmem:[#allocation14 + $0x18] sm:$0xff] %v3093
    %3103 = vst [vmem:[#allocation14 + $0x20] sm:$0xff] %v3052
    %3104 = vst [vmem:[#allocation14 + $0x28] sm:$0xff] %v3054
    %3105 = vst [vmem:[#allocation14 + $0x30] sm:$0xff] %v3095
    %3106 = vst [vmem:[#allocation14 + $0x38] sm:$0xff] %v3097
    // Predicated region
    $region78: #{image_captioning_decoder.1} parent=1 // pred_check
      _
    $region79: #{image_captioning_decoder.1} parent=1 // pred_check_branch
      %3108 = sbr.rel (0) target = $region81
    $region80: #{image_captioning_decoder.1} parent=1 // pred_region
      %s3110 = ssub.s32 256, 256
      %3111 = vsyncadd [#allocation5], %s3110
      %s3112 = sshll.u32 [#allocation11], 4
      %s3113 = int_to_ptr.vmem [resolvable:$true] %s3112
      %3118 = dma.vmem_to_hbm [thread:$0]  %s3113, 256, %s14, [#allocation5], 128, 128, 8
    $region81: #{image_captioning_decoder.1} parent=1 // pred_fallthru
      _
    // Predicated region
    $region82: #{image_captioning_decoder.1} parent=1 // pred_check
      _
    $region83: #{image_captioning_decoder.1} parent=1 // pred_check_branch
      %3120 = sbr.rel (0) target = $region85
    $region84: #{image_captioning_decoder.1} parent=1 // pred_region
      %s3122 = ssub.s32 256, 256
      %3123 = vsyncadd [#allocation13], %s3122
      %s3124 = sshll.u32 [#allocation12], 4
      %s3125 = int_to_ptr.vmem [resolvable:$true] %s3124
      %3130 = dma.vmem_to_hbm [thread:$0]  %s3125, 256, %s15, [#allocation13], 128, 128, 8
    $region85: #{image_captioning_decoder.1} parent=1 // pred_fallthru
      _
    // Predicated region
    $region86: #{image_captioning_decoder.1} parent=1 // pred_check
      _
    $region87: #{image_captioning_decoder.1} parent=1 // pred_check_branch
      %3132 = sbr.rel (0) target = $region89
    $region88: #{image_captioning_decoder.1} parent=1 // pred_region
      %s3134 = ssub.s32 1024, 1024
      %3135 = vsyncadd [#allocation13], %s3134
      %s3136 = sshll.u32 [#allocation14], 4
      %s3137 = int_to_ptr.vmem [resolvable:$true] %s3136
      %3142 = dma.vmem_to_hbm [thread:$0]  %s3137, 1024, %s16, [#allocation13], 512, 512, 32
    $region89: #{image_captioning_decoder.1} parent=1 // pred_fallthru
      _
    // Predicated region
    $region90: #{image_captioning_decoder.1} parent=1 // pred_check
      _
    $region91: #{image_captioning_decoder.1} parent=1 // pred_check_branch
      %3144 = sbr.rel (0) target = $region93
    $region92: #{image_captioning_decoder.1} parent=1 // pred_region
      %s3146 = ssub.s32 256, 256
      %3147 = vsyncadd [#allocation16], %s3146
      %s3148 = sshll.u32 [#allocation15], 4
      %s3149 = int_to_ptr.vmem [resolvable:$true] %s3148
      %3154 = dma.vmem_to_hbm [thread:$0]  %s3149, 256, %s17, [#allocation16], 128, 128, 8
    $region93: #{image_captioning_decoder.1} parent=1 // pred_fallthru
      _
    // Predicated region
    $region94: #{image_captioning_decoder.1} parent=1 // pred_check
      _
    $region95: #{image_captioning_decoder.1} parent=1 // pred_check_branch
      %3156 = sbr.rel (0) target = $region97
    $region96: #{image_captioning_decoder.1} parent=1 // pred_region
      %3157 = dma.done [#allocation5], 256
    $region97: #{image_captioning_decoder.1} parent=1 // pred_fallthru
      _
    // Predicated region
    $region98: #{image_captioning_decoder.1} parent=1 // pred_check
      _
    $region99: #{image_captioning_decoder.1} parent=1 // pred_check_branch
      %3159 = sbr.rel (0) target = $region101
    $region100: #{image_captioning_decoder.1} parent=1 // pred_region
      %3160 = dma.done [#allocation13], 256
    $region101: #{image_captioning_decoder.1} parent=1 // pred_fallthru
      _
    // Predicated region
    $region102: #{image_captioning_decoder.1} parent=1 // pred_check
      _
    $region103: #{image_captioning_decoder.1} parent=1 // pred_check_branch
      %3162 = sbr.rel (0) target = $region105
    $region104: #{image_captioning_decoder.1} parent=1 // pred_region
      %3163 = dma.done [#allocation13], 1024
    $region105: #{image_captioning_decoder.1} parent=1 // pred_fallthru
      _
    // Predicated region
    $region106: #{image_captioning_decoder.1} parent=1 // pred_check
      _
    $region107: #{image_captioning_decoder.1} parent=1 // pred_check_branch
      %3165 = sbr.rel (0) target = $region109
    $region108: #{image_captioning_decoder.1} parent=1 // pred_region
      %3166 = dma.done [#allocation16], 256
    $region109: #{image_captioning_decoder.1} parent=1 // pred_fallthru
      _
    %3167 = vsyncpa [#allocation4], 1
    %3168 = vsyncpa [#allocation7], 1
    %3169 = vsyncpa [#allocation10], 1
    %3170 = vsyncpa [#allocation5], 1
    %3171 = vsyncpa [#allocation13], 1
    %3172 = vsyncpa [#allocation16], 1

</llo_original>
